<compile_context>
chip_gen: v7x
topology: tpu7x:2x2x1
jax: 0.10.0
libtpu: 0.0.40
codegen_flags: <defaults>
</compile_context>

<pallas_src>
import numpy as np
import jax
import jax.numpy as jnp
from jax.experimental import pallas as pl
from jax.experimental.pallas import tpu as pltpu

LANE = 128  # lane width used to pad outputs and pack the weight / bias slabs


def gru_decoder_kernel(e_all_ref, h0_ref, w_all_ref, b_all_ref,
                       dout_ref, h_out_ref, attn_ref,
                       hs_ref):
    B, S, D = e_all_ref.shape
    T = attn_ref.shape[1]
    lane = attn_ref.shape[2]
    dt = e_all_ref.dtype

    # ---- operands kept live across the whole decode loop ----
    e_all = e_all_ref[...]                       # (B, S, D)
    w_rec = w_all_ref[:D, :]                     # (D, 4D+LANE): [Whh | Wa | W_comp | pad]
    b_rec = b_all_ref[0:1, :]                    # (1, 4D+LANE): [bhh | ba | b_comp | 0  ]
    va = b_all_ref[2:3, :D]                      # (1, D)

    # Ua(keys) is step-independent -> computed once (ua / bua not kept live afterwards).
    ua = w_all_ref[D:, 3 * D:4 * D]              # (D, D)
    bua = b_all_ref[1:2, 3 * D:4 * D]            # (1, D)
    ua_keys = (e_all.reshape(B * S, D) @ ua + bua).reshape(B, S, D)

    h = h0_ref[...]                              # (B, D)
    lane_pad = jnp.zeros((B, lane - S), dt) if S < lane else None

    # Static unroll: T is small here.  For much larger T, switch to lax.fori_loop carrying h
    # (with the t == 0 step peeled) and pack the attention rows before storing.
    for t in range(T):
        # ---- fused recurrent projection: one (B, D) @ (D, 4D+LANE) MXU push ----
        # hz columns: [gh_r|gh_z|gh_n (0:3D) | wa_q (3D:4D) | composed d_prev gx (4D:7D)]
        hz = h @ w_rec + b_rec                                       # (B, 4D+LANE)

        # ---- NN_Attention: softmax(Va . tanh(Wa q + Ua k)) ----
        # Va applied as a VPU multiply + lane reduce; its bias bva is a uniform additive
        # constant and cancels in the softmax, so it is dropped.
        wa_q = hz[:, 3 * D:4 * D]                                    # (B, D)
        tanh_sum = jnp.tanh(wa_q[:, None, :] + ua_keys)              # (B, S, D)
        scores = jnp.sum(tanh_sum * va, axis=-1)                     # (B, S)
        m = jnp.max(scores, axis=-1, keepdims=True)
        e = jnp.exp(scores - m)
        weights = e / jnp.sum(e, axis=-1, keepdims=True)             # exact softmax
        context = jnp.sum(weights[:, :, None] * e_all, axis=1)       # (B, D)

        # ---- torch nn.GRU cell (gate order r, z, n); concat-free input projection ----
        # wih_ctx / bih are deliberately re-read from VMEM each step (vld has slack) rather
        # than being pinned in vregs across the unrolled loop.
        wih_ctx = w_all_ref[D:, :3 * D]                              # (D, 3D)
        bih = b_all_ref[1:2, :3 * D]                                 # (1, 3D)
        gx = context @ wih_ctx + bih                                 # (B, 3D)
        if t > 0:
            # d_prev @ Wih_d == h @ W_comp + b_comp == hz[:, 4D:7D]  (d_prev is the output
            # projection of this very same h).  At t == 0, d_prev == 0 -> term skipped.
            gx = gx + hz[:, 4 * D:7 * D]

        rz = jax.nn.sigmoid(gx[:, :2 * D] + hz[:, :2 * D])           # single 2D-wide EUP push
        r, z = rz[:, :D], rz[:, D:2 * D]
        n = jnp.tanh(gx[:, 2 * D:] + r * hz[:, 2 * D:3 * D])
        h = (1.0 - z) * n + z * h                                    # (B, D)

        hs_ref[:, t, :] = h                                          # stash for deferred out-proj
        w_pad = (jnp.concatenate([weights, lane_pad], axis=-1)
                 if S < lane else weights)                           # (B, LANE)
        attn_ref[:, t, :] = w_pad                                    # lane-dense, off critical path

    # ---- deferred output projection: ONE (B*T, D) @ (D, LANE) matmul + one slab store ----
    wout = w_all_ref[D:, 4 * D:]                                     # (D, LANE), cols >= nout are 0
    bout = b_all_ref[1:2, 4 * D:]                                    # (1, LANE)
    hs = hs_ref[...].reshape(B * T, D)
    dout_ref[...] = hs @ wout + bout                                 # (B*T, LANE)
    h_out_ref[...] = h


def prepare_gru_params(params):
    """One-time host-side weight re-layout: pack all weights into one (2D, 4D+LANE) slab and
    all biases (+ Va) into one (3, 4D+LANE) slab, composing the d_prev feedback into the fused
    recurrent weight.  Call once at parameter-load time, not per decode call."""
    D = params["ua"].shape[0]
    nout = params["wout"].shape[1]
    n_d = params["wih"].shape[0] - D
    dt = params["ua"].dtype
    P = 4 * D + LANE
    assert n_d == nout                       # decoder output feeds back as next step's input
    assert 3 * D <= LANE and nout <= LANE    # packing layout assumptions

    wih_ctx = params["wih"][:D]                       # (D, 3D)
    wih_d = params["wih"][D:]                         # (nout, 3D)
    w_comp = params["wout"] @ wih_d                   # (D, 3D):  (h @ wout) @ wih_d == h @ w_comp
    b_comp = params["bout"] @ wih_d                   # (1, 3D)
    wout_pad = jnp.zeros((D, LANE), dt).at[:, :nout].set(params["wout"])
    bout_pad = jnp.zeros((1, LANE), dt).at[:, :nout].set(params["bout"])

    # recurrent slab row block: columns [Whh (0:3D) | Wa (3D:4D) | W_comp (4D:7D) | 0]
    w_rec = jnp.zeros((D, P), dt)
    w_rec = w_rec.at[:, :3 * D].set(params["whh"])
    w_rec = w_rec.at[:, 3 * D:4 * D].set(params["wa"])
    w_rec = w_rec.at[:, 4 * D:7 * D].set(w_comp)
    b_rec = jnp.zeros((1, P), dt)
    b_rec = b_rec.at[:, :3 * D].set(params["bhh"])
    b_rec = b_rec.at[:, 3 * D:4 * D].set(params["ba"])
    b_rec = b_rec.at[:, 4 * D:7 * D].set(b_comp)

    # input-side slab row block: columns [Wih_ctx (0:3D) | Ua (3D:4D) | Wout_pad (4D:4D+LANE)]
    w_in = jnp.concatenate([wih_ctx, params["ua"], wout_pad], axis=1)            # (D, P)
    b_in = jnp.concatenate([params["bih"], params["bua"], bout_pad], axis=1)     # (1, P)
    va_row = jnp.zeros((1, P), dt).at[:, :D].set(params["va"].reshape(1, D))
    # bva is dropped on purpose: a uniform additive constant cancels in the softmax.

    w_all = jnp.concatenate([w_rec, w_in], axis=0)            # (2D, P)
    b_all = jnp.concatenate([b_rec, b_in, va_row], axis=0)    # (3, P)
    return {"w_all": w_all, "b_all": b_all, "dim": D, "nout": nout}


def gru_decode(e_all, e_last, prep, longest_coor):
    B, S, D = e_all.shape
    T = longest_coor
    dt = e_all.dtype
    nout = prep["nout"]
    assert D == prep["dim"] and S <= LANE

    h0 = e_last[0]                                            # (B, D)
    vmem = pl.BlockSpec(memory_space=pltpu.MemorySpace.VMEM)
    dout_flat, h_out, attn_pad = pl.pallas_call(
        gru_decoder_kernel,
        out_shape=(
            jax.ShapeDtypeStruct((B * T, LANE), dt),   # output projections, lane-padded
            jax.ShapeDtypeStruct((B, D), dt),          # final hidden state
            jax.ShapeDtypeStruct((B, T, LANE), dt),    # attention weights, lane-padded
        ),
        in_specs=[vmem] * 4,
        out_specs=(vmem, vmem, vmem),
        scratch_shapes=[pltpu.VMEM((B, T, D), dt)],    # per-step hidden states
    )(e_all, h0, prep["w_all"], prep["b_all"])

    d_outputs = dout_flat.reshape(B, T, LANE)[:, :, :nout]    # (B, T, 3)
    cross_attn = attn_pad[:, :, :S]                           # (B, T, S)
    d_hidden = h_out[None]                                    # (1, B, D) torch GRU hidden layout
    return d_outputs, d_hidden, cross_attn


def reference(e_all, e_last, params, longest_coor):
    """Pure-JAX reference matching the torch forward pass (includes bva, exact softmax)."""
    B, S, D = e_all.shape
    p = params
    h = e_last[0]
    d_input = jnp.zeros((B, 3), dtype=e_all.dtype)
    ua_keys = e_all @ p["ua"] + p["bua"]
    outs, attns = [], []
    for _ in range(longest_coor):
        wa_q = h @ p["wa"] + p["ba"]
        scores = jnp.tanh(wa_q[:, None, :] + ua_keys) @ p["va"][:, 0] + p["bva"][0, 0]
        weights = jax.nn.softmax(scores, axis=-1)
        context = jnp.einsum("bs,bsd->bd", weights, e_all)
        x = jnp.concatenate([context, d_input], axis=1)
        gx = x @ p["wih"] + p["bih"]
        gh = h @ p["whh"] + p["bhh"]
        r = jax.nn.sigmoid(gx[:, :D] + gh[:, :D])
        z = jax.nn.sigmoid(gx[:, D:2 * D] + gh[:, D:2 * D])
        n = jnp.tanh(gx[:, 2 * D:] + r * gh[:, 2 * D:])
        h = (1.0 - z) * n + z * h
        out = h @ p["wout"] + p["bout"]
        outs.append(out)
        attns.append(weights)
        d_input = out
    return jnp.stack(outs, 1), h[None], jnp.stack(attns, 1)


def init_params(key, dim_model, output_size=3):
    D = dim_model
    ks = jax.random.split(key, 15)
    u = lambda k, shape, scale: jax.random.uniform(k, shape, jnp.float32, -scale, scale)
    s_lin = 1.0 / np.sqrt(D)
    s_gru = 1.0 / np.sqrt(D)
    return {
        # NN_Attention
        "wa": u(ks[0], (D, D), s_lin), "ba": u(ks[1], (1, D), s_lin),
        "ua": u(ks[2], (D, D), s_lin), "bua": u(ks[3], (1, D), s_lin),
        "va": u(ks[4], (D, 1), s_lin), "bva": u(ks[5], (1, 1), s_lin),
        # nn.GRU(3 + D, D): weights stored transposed (in_features, 3D), rows [context | d_input]
        "wih": u(ks[6], (D + 3, 3 * D), s_gru), "bih": u(ks[7], (1, 3 * D), s_gru),
        "whh": u(ks[8], (D, 3 * D), s_gru), "bhh": u(ks[9], (1, 3 * D), s_gru),
        # out Linear(D, 3)
        "wout": u(ks[10], (D, output_size), s_lin), "bout": u(ks[11], (1, output_size), s_lin),
    }


if __name__ == "__main__":
    B, S, D, T = 2, 8, 32, 6   # batch, encoder length, dim_model, longest_coor

    key = jax.random.PRNGKey(0)
    k_p, k_e, k_h = jax.random.split(key, 3)
    params = init_params(k_p, D)
    e_all = jax.random.normal(k_e, (B, S, D), dtype=jnp.float32)
    e_last = jax.random.normal(k_h, (1, B, D), dtype=jnp.float32)

    prep = prepare_gru_params(params)   # one-time weight re-layout / composition
    d_outputs, d_hidden, cross_attn = gru_decode(e_all, e_last, prep, T)
    jax.block_until_ready((d_outputs, d_hidden, cross_attn))

    ref_out, ref_h, ref_attn = reference(e_all, e_last, params, T)
    assert d_outputs.shape == (B, T, 3)
    assert d_hidden.shape == (1, B, D)
    assert cross_attn.shape == (B, T, S)
    # Tolerance 1e-3: the composed feedback weight (wout @ wih_d) reassociates the d_prev
    # matmul, and the tiny rounding differences propagate through T recurrent steps.
    tol = dict(atol=1e-3, rtol=1e-3)
    assert np.allclose(np.asarray(d_outputs), np.asarray(ref_out), **tol)
    assert np.allclose(np.asarray(d_hidden), np.asarray(ref_h), **tol)
    assert np.allclose(np.asarray(cross_attn), np.asarray(ref_attn), **tol)

    print("KERNEL_OK")
</pallas_src>

<mosaic_0001>
module attributes {stable_mosaic.version = 11 : i64} {
  func.func @gru_decoder_kernel(%arg0: memref<2x8x32xf32, #tpu.memory_space<vmem>>, %arg1: memref<2x32xf32, #tpu.memory_space<vmem>>, %arg2: memref<64x256xf32, #tpu.memory_space<vmem>>, %arg3: memref<3x256xf32, #tpu.memory_space<vmem>>, %arg4: memref<12x128xf32, #tpu.memory_space<vmem>>, %arg5: memref<2x32xf32, #tpu.memory_space<vmem>>, %arg6: memref<2x6x128xf32, #tpu.memory_space<vmem>>, %arg7: memref<2x6x32xf32, #tpu.memory_space<vmem>>) attributes {dimension_semantics = [], scalar_prefetch = 0 : i64, scratch_operands = 1 : i64, tpu.core_type = #tpu.core_type<tc>} {
    %c0 = arith.constant 0 : index
    %c0_0 = arith.constant 0 : index
    %c0_1 = arith.constant 0 : index
    %0 = vector.load %arg0[%c0, %c0_0, %c0_1] : memref<2x8x32xf32, #tpu.memory_space<vmem>>, vector<2x8x32xf32>
    %c0_2 = arith.constant 0 : index
    %c0_3 = arith.constant 0 : index
    %1 = vector.load %arg2[%c0_2, %c0_3] : memref<64x256xf32, #tpu.memory_space<vmem>>, vector<32x256xf32>
    %c0_4 = arith.constant 0 : index
    %c0_5 = arith.constant 0 : index
    %2 = vector.load %arg3[%c0_4, %c0_5] : memref<3x256xf32, #tpu.memory_space<vmem>>, vector<1x256xf32>
    %c2 = arith.constant 2 : index
    %c0_6 = arith.constant 0 : index
    %3 = vector.load %arg3[%c2, %c0_6] : memref<3x256xf32, #tpu.memory_space<vmem>>, vector<1x32xf32>
    %c32 = arith.constant 32 : index
    %c96 = arith.constant 96 : index
    %4 = vector.load %arg2[%c32, %c96] : memref<64x256xf32, #tpu.memory_space<vmem>>, vector<32x32xf32>
    %c1 = arith.constant 1 : index
    %c96_7 = arith.constant 96 : index
    %5 = vector.load %arg3[%c1, %c96_7] : memref<3x256xf32, #tpu.memory_space<vmem>>, vector<1x32xf32>
    %6 = vector.shape_cast %0 : vector<2x8x32xf32> to vector<16x32xf32>
    %cst = arith.constant dense<0.000000e+00> : vector<16x32xf32>
    %7 = tpu.matmul %6, %4, %cst {dimension_numbers = #tpu.dot_dimension_numbers<[1], [0], [0], [1], [0, 0, 1, 1], [], []>} : vector<16x32xf32>, vector<32x32xf32>, vector<16x32xf32> -> vector<16x32xf32>
    %8 = vector.broadcast %5 : vector<1x32xf32> to vector<16x32xf32>
    %9 = arith.addf %7, %8 : vector<16x32xf32>
    %10 = vector.shape_cast %9 : vector<16x32xf32> to vector<2x8x32xf32>
    %c0_8 = arith.constant 0 : index
    %c0_9 = arith.constant 0 : index
    %11 = vector.load %arg1[%c0_8, %c0_9] : memref<2x32xf32, #tpu.memory_space<vmem>>, vector<2x32xf32>
    %cst_10 = arith.constant 0.000000e+00 : f32
    %12 = vector.broadcast %cst_10 : f32 to vector<2x120xf32>
    %cst_11 = arith.constant dense<0.000000e+00> : vector<2x256xf32>
    %13 = tpu.matmul %11, %1, %cst_11 {dimension_numbers = #tpu.dot_dimension_numbers<[1], [0], [0], [1], [0, 0, 1, 1], [], []>} : vector<2x32xf32>, vector<32x256xf32>, vector<2x256xf32> -> vector<2x256xf32>
    %14 = vector.broadcast %2 : vector<1x256xf32> to vector<2x256xf32>
    %15 = arith.addf %13, %14 : vector<2x256xf32>
    %16 = vector.extract_strided_slice %15 {offsets = [0, 96], sizes = [2, 32], strides = [1, 1]} : vector<2x256xf32> to vector<2x32xf32>
    %17 = vector.shape_cast %16 : vector<2x32xf32> to vector<2x1x32xf32>
    %18 = vector.broadcast %17 : vector<2x1x32xf32> to vector<2x8x32xf32>
    %19 = arith.addf %18, %10 : vector<2x8x32xf32>
    %20 = math.tanh %19 : vector<2x8x32xf32>
    %21 = vector.shape_cast %3 : vector<1x32xf32> to vector<1x1x32xf32>
    %22 = vector.broadcast %21 : vector<1x1x32xf32> to vector<2x8x32xf32>
    %23 = arith.mulf %20, %22 : vector<2x8x32xf32>
    %cst_12 = arith.constant dense<0.000000e+00> : vector<2x8xf32>
    %24 = vector.multi_reduction <add>, %23, %cst_12 [2] : vector<2x8x32xf32> to vector<2x8xf32>
    %cst_13 = arith.constant dense<0xFF800000> : vector<2xf32>
    %25 = vector.multi_reduction <maximumf>, %24, %cst_13 [1] : vector<2x8xf32> to vector<2xf32>
    %26 = vector.shape_cast %25 : vector<2xf32> to vector<2x1xf32>
    %27 = vector.broadcast %26 : vector<2x1xf32> to vector<2x8xf32>
    %28 = arith.subf %24, %27 : vector<2x8xf32>
    %29 = math.exp %28 : vector<2x8xf32>
    %cst_14 = arith.constant dense<0.000000e+00> : vector<2xf32>
    %30 = vector.multi_reduction <add>, %29, %cst_14 [1] : vector<2x8xf32> to vector<2xf32>
    %31 = vector.shape_cast %30 : vector<2xf32> to vector<2x1xf32>
    %32 = vector.broadcast %31 : vector<2x1xf32> to vector<2x8xf32>
    %33 = arith.divf %29, %32 : vector<2x8xf32>
    %34 = vector.shape_cast %33 : vector<2x8xf32> to vector<2x8x1xf32>
    %35 = vector.broadcast %34 : vector<2x8x1xf32> to vector<2x8x32xf32>
    %36 = arith.mulf %35, %0 : vector<2x8x32xf32>
    %cst_15 = arith.constant dense<0.000000e+00> : vector<2x32xf32>
    %37 = vector.multi_reduction <add>, %36, %cst_15 [1] : vector<2x8x32xf32> to vector<2x32xf32>
    %c32_16 = arith.constant 32 : index
    %c0_17 = arith.constant 0 : index
    %38 = vector.load %arg2[%c32_16, %c0_17] : memref<64x256xf32, #tpu.memory_space<vmem>>, vector<32x96xf32>
    %c1_18 = arith.constant 1 : index
    %c0_19 = arith.constant 0 : index
    %39 = vector.load %arg3[%c1_18, %c0_19] : memref<3x256xf32, #tpu.memory_space<vmem>>, vector<1x96xf32>
    %cst_20 = arith.constant dense<0.000000e+00> : vector<2x96xf32>
    %40 = tpu.matmul %37, %38, %cst_20 {dimension_numbers = #tpu.dot_dimension_numbers<[1], [0], [0], [1], [0, 0, 1, 1], [], []>} : vector<2x32xf32>, vector<32x96xf32>, vector<2x96xf32> -> vector<2x96xf32>
    %41 = vector.broadcast %39 : vector<1x96xf32> to vector<2x96xf32>
    %42 = arith.addf %40, %41 : vector<2x96xf32>
    %43 = vector.extract_strided_slice %42 {offsets = [0, 0], sizes = [2, 64], strides = [1, 1]} : vector<2x96xf32> to vector<2x64xf32>
    %44 = vector.extract_strided_slice %15 {offsets = [0, 0], sizes = [2, 64], strides = [1, 1]} : vector<2x256xf32> to vector<2x64xf32>
    %45 = arith.addf %43, %44 : vector<2x64xf32>
    %46 = arith.negf %45 : vector<2x64xf32>
    %47 = math.exp %46 : vector<2x64xf32>
    %cst_21 = arith.constant 1.000000e+00 : f32
    %48 = vector.broadcast %cst_21 : f32 to vector<2x64xf32>
    %49 = arith.addf %48, %47 : vector<2x64xf32>
    %50 = arith.divf %48, %49 : vector<2x64xf32>
    %51 = vector.extract_strided_slice %50 {offsets = [0, 0], sizes = [2, 32], strides = [1, 1]} : vector<2x64xf32> to vector<2x32xf32>
    %52 = vector.extract_strided_slice %50 {offsets = [0, 32], sizes = [2, 32], strides = [1, 1]} : vector<2x64xf32> to vector<2x32xf32>
    %53 = vector.extract_strided_slice %42 {offsets = [0, 64], sizes = [2, 32], strides = [1, 1]} : vector<2x96xf32> to vector<2x32xf32>
    %54 = vector.extract_strided_slice %15 {offsets = [0, 64], sizes = [2, 32], strides = [1, 1]} : vector<2x256xf32> to vector<2x32xf32>
    %55 = arith.mulf %51, %54 : vector<2x32xf32>
    %56 = arith.addf %53, %55 : vector<2x32xf32>
    %57 = math.tanh %56 : vector<2x32xf32>
    %cst_22 = arith.constant 1.000000e+00 : f32
    %58 = vector.broadcast %cst_22 : f32 to vector<2x32xf32>
    %59 = arith.subf %58, %52 : vector<2x32xf32>
    %60 = arith.mulf %59, %57 : vector<2x32xf32>
    %61 = arith.mulf %52, %11 : vector<2x32xf32>
    %62 = arith.addf %60, %61 : vector<2x32xf32>
    %c0_23 = arith.constant 0 : index
    %c0_24 = arith.constant 0 : index
    %c0_25 = arith.constant 0 : index
    %63 = vector.load %arg7[%c0_23, %c0_24, %c0_25] : memref<2x6x32xf32, #tpu.memory_space<vmem>>, vector<2x1x32xf32>
    %64 = vector.shape_cast %63 : vector<2x1x32xf32> to vector<2x32xf32>
    %65 = vector.shape_cast %62 : vector<2x32xf32> to vector<2x1x32xf32>
    tpu.vector_store %arg7[%c0_23, %c0_24, %c0_25], %65 {strides = array<i32>} : memref<2x6x32xf32, #tpu.memory_space<vmem>>, vector<2x1x32xf32>,
    %66 = tpu.concatenate %33, %12 in 1 : vector<2x8xf32>, vector<2x120xf32> -> vector<2x128xf32>
    %c0_26 = arith.constant 0 : index
    %c0_27 = arith.constant 0 : index
    %c0_28 = arith.constant 0 : index
    %67 = vector.load %arg6[%c0_26, %c0_27, %c0_28] : memref<2x6x128xf32, #tpu.memory_space<vmem>>, vector<2x1x128xf32>
    %68 = vector.shape_cast %67 : vector<2x1x128xf32> to vector<2x128xf32>
    %69 = vector.shape_cast %66 : vector<2x128xf32> to vector<2x1x128xf32>
    tpu.vector_store %arg6[%c0_26, %c0_27, %c0_28], %69 {strides = array<i32>} : memref<2x6x128xf32, #tpu.memory_space<vmem>>, vector<2x1x128xf32>,
    %cst_29 = arith.constant dense<0.000000e+00> : vector<2x256xf32>
    %70 = tpu.matmul %62, %1, %cst_29 {dimension_numbers = #tpu.dot_dimension_numbers<[1], [0], [0], [1], [0, 0, 1, 1], [], []>} : vector<2x32xf32>, vector<32x256xf32>, vector<2x256xf32> -> vector<2x256xf32>
    %71 = vector.broadcast %2 : vector<1x256xf32> to vector<2x256xf32>
    %72 = arith.addf %70, %71 : vector<2x256xf32>
    %73 = vector.extract_strided_slice %72 {offsets = [0, 96], sizes = [2, 32], strides = [1, 1]} : vector<2x256xf32> to vector<2x32xf32>
    %74 = vector.shape_cast %73 : vector<2x32xf32> to vector<2x1x32xf32>
    %75 = vector.broadcast %74 : vector<2x1x32xf32> to vector<2x8x32xf32>
    %76 = arith.addf %75, %10 : vector<2x8x32xf32>
    %77 = math.tanh %76 : vector<2x8x32xf32>
    %78 = vector.shape_cast %3 : vector<1x32xf32> to vector<1x1x32xf32>
    %79 = vector.broadcast %78 : vector<1x1x32xf32> to vector<2x8x32xf32>
    %80 = arith.mulf %77, %79 : vector<2x8x32xf32>
    %cst_30 = arith.constant dense<0.000000e+00> : vector<2x8xf32>
    %81 = vector.multi_reduction <add>, %80, %cst_30 [2] : vector<2x8x32xf32> to vector<2x8xf32>
    %cst_31 = arith.constant dense<0xFF800000> : vector<2xf32>
    %82 = vector.multi_reduction <maximumf>, %81, %cst_31 [1] : vector<2x8xf32> to vector<2xf32>
    %83 = vector.shape_cast %82 : vector<2xf32> to vector<2x1xf32>
    %84 = vector.broadcast %83 : vector<2x1xf32> to vector<2x8xf32>
    %85 = arith.subf %81, %84 : vector<2x8xf32>
    %86 = math.exp %85 : vector<2x8xf32>
    %cst_32 = arith.constant dense<0.000000e+00> : vector<2xf32>
    %87 = vector.multi_reduction <add>, %86, %cst_32 [1] : vector<2x8xf32> to vector<2xf32>
    %88 = vector.shape_cast %87 : vector<2xf32> to vector<2x1xf32>
    %89 = vector.broadcast %88 : vector<2x1xf32> to vector<2x8xf32>
    %90 = arith.divf %86, %89 : vector<2x8xf32>
    %91 = vector.shape_cast %90 : vector<2x8xf32> to vector<2x8x1xf32>
    %92 = vector.broadcast %91 : vector<2x8x1xf32> to vector<2x8x32xf32>
    %93 = arith.mulf %92, %0 : vector<2x8x32xf32>
    %cst_33 = arith.constant dense<0.000000e+00> : vector<2x32xf32>
    %94 = vector.multi_reduction <add>, %93, %cst_33 [1] : vector<2x8x32xf32> to vector<2x32xf32>
    %c32_34 = arith.constant 32 : index
    %c0_35 = arith.constant 0 : index
    %95 = vector.load %arg2[%c32_34, %c0_35] : memref<64x256xf32, #tpu.memory_space<vmem>>, vector<32x96xf32>
    %c1_36 = arith.constant 1 : index
    %c0_37 = arith.constant 0 : index
    %96 = vector.load %arg3[%c1_36, %c0_37] : memref<3x256xf32, #tpu.memory_space<vmem>>, vector<1x96xf32>
    %cst_38 = arith.constant dense<0.000000e+00> : vector<2x96xf32>
    %97 = tpu.matmul %94, %95, %cst_38 {dimension_numbers = #tpu.dot_dimension_numbers<[1], [0], [0], [1], [0, 0, 1, 1], [], []>} : vector<2x32xf32>, vector<32x96xf32>, vector<2x96xf32> -> vector<2x96xf32>
    %98 = vector.broadcast %96 : vector<1x96xf32> to vector<2x96xf32>
    %99 = arith.addf %97, %98 : vector<2x96xf32>
    %100 = vector.extract_strided_slice %72 {offsets = [0, 128], sizes = [2, 96], strides = [1, 1]} : vector<2x256xf32> to vector<2x96xf32>
    %101 = arith.addf %99, %100 : vector<2x96xf32>
    %102 = vector.extract_strided_slice %101 {offsets = [0, 0], sizes = [2, 64], strides = [1, 1]} : vector<2x96xf32> to vector<2x64xf32>
    %103 = vector.extract_strided_slice %72 {offsets = [0, 0], sizes = [2, 64], strides = [1, 1]} : vector<2x256xf32> to vector<2x64xf32>
    %104 = arith.addf %102, %103 : vector<2x64xf32>
    %105 = arith.negf %104 : vector<2x64xf32>
    %106 = math.exp %105 : vector<2x64xf32>
    %cst_39 = arith.constant 1.000000e+00 : f32
    %107 = vector.broadcast %cst_39 : f32 to vector<2x64xf32>
    %108 = arith.addf %107, %106 : vector<2x64xf32>
    %109 = arith.divf %107, %108 : vector<2x64xf32>
    %110 = vector.extract_strided_slice %109 {offsets = [0, 0], sizes = [2, 32], strides = [1, 1]} : vector<2x64xf32> to vector<2x32xf32>
    %111 = vector.extract_strided_slice %109 {offsets = [0, 32], sizes = [2, 32], strides = [1, 1]} : vector<2x64xf32> to vector<2x32xf32>
    %112 = vector.extract_strided_slice %101 {offsets = [0, 64], sizes = [2, 32], strides = [1, 1]} : vector<2x96xf32> to vector<2x32xf32>
    %113 = vector.extract_strided_slice %72 {offsets = [0, 64], sizes = [2, 32], strides = [1, 1]} : vector<2x256xf32> to vector<2x32xf32>
    %114 = arith.mulf %110, %113 : vector<2x32xf32>
    %115 = arith.addf %112, %114 : vector<2x32xf32>
    %116 = math.tanh %115 : vector<2x32xf32>
    %cst_40 = arith.constant 1.000000e+00 : f32
    %117 = vector.broadcast %cst_40 : f32 to vector<2x32xf32>
    %118 = arith.subf %117, %111 : vector<2x32xf32>
    %119 = arith.mulf %118, %116 : vector<2x32xf32>
    %120 = arith.mulf %111, %62 : vector<2x32xf32>
    %121 = arith.addf %119, %120 : vector<2x32xf32>
    %c0_41 = arith.constant 0 : index
    %c1_42 = arith.constant 1 : index
    %c0_43 = arith.constant 0 : index
    %122 = vector.load %arg7[%c0_41, %c1_42, %c0_43] : memref<2x6x32xf32, #tpu.memory_space<vmem>>, vector<2x1x32xf32>
    %123 = vector.shape_cast %122 : vector<2x1x32xf32> to vector<2x32xf32>
    %124 = vector.shape_cast %121 : vector<2x32xf32> to vector<2x1x32xf32>
    tpu.vector_store %arg7[%c0_41, %c1_42, %c0_43], %124 {strides = array<i32>} : memref<2x6x32xf32, #tpu.memory_space<vmem>>, vector<2x1x32xf32>,
    %125 = tpu.concatenate %90, %12 in 1 : vector<2x8xf32>, vector<2x120xf32> -> vector<2x128xf32>
    %c0_44 = arith.constant 0 : index
    %c1_45 = arith.constant 1 : index
    %c0_46 = arith.constant 0 : index
    %126 = vector.load %arg6[%c0_44, %c1_45, %c0_46] : memref<2x6x128xf32, #tpu.memory_space<vmem>>, vector<2x1x128xf32>
    %127 = vector.shape_cast %126 : vector<2x1x128xf32> to vector<2x128xf32>
    %128 = vector.shape_cast %125 : vector<2x128xf32> to vector<2x1x128xf32>
    tpu.vector_store %arg6[%c0_44, %c1_45, %c0_46], %128 {strides = array<i32>} : memref<2x6x128xf32, #tpu.memory_space<vmem>>, vector<2x1x128xf32>,
    %cst_47 = arith.constant dense<0.000000e+00> : vector<2x256xf32>
    %129 = tpu.matmul %121, %1, %cst_47 {dimension_numbers = #tpu.dot_dimension_numbers<[1], [0], [0], [1], [0, 0, 1, 1], [], []>} : vector<2x32xf32>, vector<32x256xf32>, vector<2x256xf32> -> vector<2x256xf32>
    %130 = vector.broadcast %2 : vector<1x256xf32> to vector<2x256xf32>
    %131 = arith.addf %129, %130 : vector<2x256xf32>
    %132 = vector.extract_strided_slice %131 {offsets = [0, 96], sizes = [2, 32], strides = [1, 1]} : vector<2x256xf32> to vector<2x32xf32>
    %133 = vector.shape_cast %132 : vector<2x32xf32> to vector<2x1x32xf32>
    %134 = vector.broadcast %133 : vector<2x1x32xf32> to vector<2x8x32xf32>
    %135 = arith.addf %134, %10 : vector<2x8x32xf32>
    %136 = math.tanh %135 : vector<2x8x32xf32>
    %137 = vector.shape_cast %3 : vector<1x32xf32> to vector<1x1x32xf32>
    %138 = vector.broadcast %137 : vector<1x1x32xf32> to vector<2x8x32xf32>
    %139 = arith.mulf %136, %138 : vector<2x8x32xf32>
    %cst_48 = arith.constant dense<0.000000e+00> : vector<2x8xf32>
    %140 = vector.multi_reduction <add>, %139, %cst_48 [2] : vector<2x8x32xf32> to vector<2x8xf32>
    %cst_49 = arith.constant dense<0xFF800000> : vector<2xf32>
    %141 = vector.multi_reduction <maximumf>, %140, %cst_49 [1] : vector<2x8xf32> to vector<2xf32>
    %142 = vector.shape_cast %141 : vector<2xf32> to vector<2x1xf32>
    %143 = vector.broadcast %142 : vector<2x1xf32> to vector<2x8xf32>
    %144 = arith.subf %140, %143 : vector<2x8xf32>
    %145 = math.exp %144 : vector<2x8xf32>
    %cst_50 = arith.constant dense<0.000000e+00> : vector<2xf32>
    %146 = vector.multi_reduction <add>, %145, %cst_50 [1] : vector<2x8xf32> to vector<2xf32>
    %147 = vector.shape_cast %146 : vector<2xf32> to vector<2x1xf32>
    %148 = vector.broadcast %147 : vector<2x1xf32> to vector<2x8xf32>
    %149 = arith.divf %145, %148 : vector<2x8xf32>
    %150 = vector.shape_cast %149 : vector<2x8xf32> to vector<2x8x1xf32>
    %151 = vector.broadcast %150 : vector<2x8x1xf32> to vector<2x8x32xf32>
    %152 = arith.mulf %151, %0 : vector<2x8x32xf32>
    %cst_51 = arith.constant dense<0.000000e+00> : vector<2x32xf32>
    %153 = vector.multi_reduction <add>, %152, %cst_51 [1] : vector<2x8x32xf32> to vector<2x32xf32>
    %c32_52 = arith.constant 32 : index
    %c0_53 = arith.constant 0 : index
    %154 = vector.load %arg2[%c32_52, %c0_53] : memref<64x256xf32, #tpu.memory_space<vmem>>, vector<32x96xf32>
    %c1_54 = arith.constant 1 : index
    %c0_55 = arith.constant 0 : index
    %155 = vector.load %arg3[%c1_54, %c0_55] : memref<3x256xf32, #tpu.memory_space<vmem>>, vector<1x96xf32>
    %cst_56 = arith.constant dense<0.000000e+00> : vector<2x96xf32>
    %156 = tpu.matmul %153, %154, %cst_56 {dimension_numbers = #tpu.dot_dimension_numbers<[1], [0], [0], [1], [0, 0, 1, 1], [], []>} : vector<2x32xf32>, vector<32x96xf32>, vector<2x96xf32> -> vector<2x96xf32>
    %157 = vector.broadcast %155 : vector<1x96xf32> to vector<2x96xf32>
    %158 = arith.addf %156, %157 : vector<2x96xf32>
    %159 = vector.extract_strided_slice %131 {offsets = [0, 128], sizes = [2, 96], strides = [1, 1]} : vector<2x256xf32> to vector<2x96xf32>
    %160 = arith.addf %158, %159 : vector<2x96xf32>
    %161 = vector.extract_strided_slice %160 {offsets = [0, 0], sizes = [2, 64], strides = [1, 1]} : vector<2x96xf32> to vector<2x64xf32>
    %162 = vector.extract_strided_slice %131 {offsets = [0, 0], sizes = [2, 64], strides = [1, 1]} : vector<2x256xf32> to vector<2x64xf32>
    %163 = arith.addf %161, %162 : vector<2x64xf32>
    %164 = arith.negf %163 : vector<2x64xf32>
    %165 = math.exp %164 : vector<2x64xf32>
    %cst_57 = arith.constant 1.000000e+00 : f32
    %166 = vector.broadcast %cst_57 : f32 to vector<2x64xf32>
    %167 = arith.addf %166, %165 : vector<2x64xf32>
    %168 = arith.divf %166, %167 : vector<2x64xf32>
    %169 = vector.extract_strided_slice %168 {offsets = [0, 0], sizes = [2, 32], strides = [1, 1]} : vector<2x64xf32> to vector<2x32xf32>
    %170 = vector.extract_strided_slice %168 {offsets = [0, 32], sizes = [2, 32], strides = [1, 1]} : vector<2x64xf32> to vector<2x32xf32>
    %171 = vector.extract_strided_slice %160 {offsets = [0, 64], sizes = [2, 32], strides = [1, 1]} : vector<2x96xf32> to vector<2x32xf32>
    %172 = vector.extract_strided_slice %131 {offsets = [0, 64], sizes = [2, 32], strides = [1, 1]} : vector<2x256xf32> to vector<2x32xf32>
    %173 = arith.mulf %169, %172 : vector<2x32xf32>
    %174 = arith.addf %171, %173 : vector<2x32xf32>
    %175 = math.tanh %174 : vector<2x32xf32>
    %cst_58 = arith.constant 1.000000e+00 : f32
    %176 = vector.broadcast %cst_58 : f32 to vector<2x32xf32>
    %177 = arith.subf %176, %170 : vector<2x32xf32>
    %178 = arith.mulf %177, %175 : vector<2x32xf32>
    %179 = arith.mulf %170, %121 : vector<2x32xf32>
    %180 = arith.addf %178, %179 : vector<2x32xf32>
    %c0_59 = arith.constant 0 : index
    %c2_60 = arith.constant 2 : index
    %c0_61 = arith.constant 0 : index
    %181 = vector.load %arg7[%c0_59, %c2_60, %c0_61] : memref<2x6x32xf32, #tpu.memory_space<vmem>>, vector<2x1x32xf32>
    %182 = vector.shape_cast %181 : vector<2x1x32xf32> to vector<2x32xf32>
    %183 = vector.shape_cast %180 : vector<2x32xf32> to vector<2x1x32xf32>
    tpu.vector_store %arg7[%c0_59, %c2_60, %c0_61], %183 {strides = array<i32>} : memref<2x6x32xf32, #tpu.memory_space<vmem>>, vector<2x1x32xf32>,
    %184 = tpu.concatenate %149, %12 in 1 : vector<2x8xf32>, vector<2x120xf32> -> vector<2x128xf32>
    %c0_62 = arith.constant 0 : index
    %c2_63 = arith.constant 2 : index
    %c0_64 = arith.constant 0 : index
    %185 = vector.load %arg6[%c0_62, %c2_63, %c0_64] : memref<2x6x128xf32, #tpu.memory_space<vmem>>, vector<2x1x128xf32>
    %186 = vector.shape_cast %185 : vector<2x1x128xf32> to vector<2x128xf32>
    %187 = vector.shape_cast %184 : vector<2x128xf32> to vector<2x1x128xf32>
    tpu.vector_store %arg6[%c0_62, %c2_63, %c0_64], %187 {strides = array<i32>} : memref<2x6x128xf32, #tpu.memory_space<vmem>>, vector<2x1x128xf32>,
    %cst_65 = arith.constant dense<0.000000e+00> : vector<2x256xf32>
    %188 = tpu.matmul %180, %1, %cst_65 {dimension_numbers = #tpu.dot_dimension_numbers<[1], [0], [0], [1], [0, 0, 1, 1], [], []>} : vector<2x32xf32>, vector<32x256xf32>, vector<2x256xf32> -> vector<2x256xf32>
    %189 = vector.broadcast %2 : vector<1x256xf32> to vector<2x256xf32>
    %190 = arith.addf %188, %189 : vector<2x256xf32>
    %191 = vector.extract_strided_slice %190 {offsets = [0, 96], sizes = [2, 32], strides = [1, 1]} : vector<2x256xf32> to vector<2x32xf32>
    %192 = vector.shape_cast %191 : vector<2x32xf32> to vector<2x1x32xf32>
    %193 = vector.broadcast %192 : vector<2x1x32xf32> to vector<2x8x32xf32>
    %194 = arith.addf %193, %10 : vector<2x8x32xf32>
    %195 = math.tanh %194 : vector<2x8x32xf32>
    %196 = vector.shape_cast %3 : vector<1x32xf32> to vector<1x1x32xf32>
    %197 = vector.broadcast %196 : vector<1x1x32xf32> to vector<2x8x32xf32>
    %198 = arith.mulf %195, %197 : vector<2x8x32xf32>
    %cst_66 = arith.constant dense<0.000000e+00> : vector<2x8xf32>
    %199 = vector.multi_reduction <add>, %198, %cst_66 [2] : vector<2x8x32xf32> to vector<2x8xf32>
    %cst_67 = arith.constant dense<0xFF800000> : vector<2xf32>
    %200 = vector.multi_reduction <maximumf>, %199, %cst_67 [1] : vector<2x8xf32> to vector<2xf32>
    %201 = vector.shape_cast %200 : vector<2xf32> to vector<2x1xf32>
    %202 = vector.broadcast %201 : vector<2x1xf32> to vector<2x8xf32>
    %203 = arith.subf %199, %202 : vector<2x8xf32>
    %204 = math.exp %203 : vector<2x8xf32>
    %cst_68 = arith.constant dense<0.000000e+00> : vector<2xf32>
    %205 = vector.multi_reduction <add>, %204, %cst_68 [1] : vector<2x8xf32> to vector<2xf32>
    %206 = vector.shape_cast %205 : vector<2xf32> to vector<2x1xf32>
    %207 = vector.broadcast %206 : vector<2x1xf32> to vector<2x8xf32>
    %208 = arith.divf %204, %207 : vector<2x8xf32>
    %209 = vector.shape_cast %208 : vector<2x8xf32> to vector<2x8x1xf32>
    %210 = vector.broadcast %209 : vector<2x8x1xf32> to vector<2x8x32xf32>
    %211 = arith.mulf %210, %0 : vector<2x8x32xf32>
    %cst_69 = arith.constant dense<0.000000e+00> : vector<2x32xf32>
    %212 = vector.multi_reduction <add>, %211, %cst_69 [1] : vector<2x8x32xf32> to vector<2x32xf32>
    %c32_70 = arith.constant 32 : index
    %c0_71 = arith.constant 0 : index
    %213 = vector.load %arg2[%c32_70, %c0_71] : memref<64x256xf32, #tpu.memory_space<vmem>>, vector<32x96xf32>
    %c1_72 = arith.constant 1 : index
    %c0_73 = arith.constant 0 : index
    %214 = vector.load %arg3[%c1_72, %c0_73] : memref<3x256xf32, #tpu.memory_space<vmem>>, vector<1x96xf32>
    %cst_74 = arith.constant dense<0.000000e+00> : vector<2x96xf32>
    %215 = tpu.matmul %212, %213, %cst_74 {dimension_numbers = #tpu.dot_dimension_numbers<[1], [0], [0], [1], [0, 0, 1, 1], [], []>} : vector<2x32xf32>, vector<32x96xf32>, vector<2x96xf32> -> vector<2x96xf32>
    %216 = vector.broadcast %214 : vector<1x96xf32> to vector<2x96xf32>
    %217 = arith.addf %215, %216 : vector<2x96xf32>
    %218 = vector.extract_strided_slice %190 {offsets = [0, 128], sizes = [2, 96], strides = [1, 1]} : vector<2x256xf32> to vector<2x96xf32>
    %219 = arith.addf %217, %218 : vector<2x96xf32>
    %220 = vector.extract_strided_slice %219 {offsets = [0, 0], sizes = [2, 64], strides = [1, 1]} : vector<2x96xf32> to vector<2x64xf32>
    %221 = vector.extract_strided_slice %190 {offsets = [0, 0], sizes = [2, 64], strides = [1, 1]} : vector<2x256xf32> to vector<2x64xf32>
    %222 = arith.addf %220, %221 : vector<2x64xf32>
    %223 = arith.negf %222 : vector<2x64xf32>
    %224 = math.exp %223 : vector<2x64xf32>
    %cst_75 = arith.constant 1.000000e+00 : f32
    %225 = vector.broadcast %cst_75 : f32 to vector<2x64xf32>
    %226 = arith.addf %225, %224 : vector<2x64xf32>
    %227 = arith.divf %225, %226 : vector<2x64xf32>
    %228 = vector.extract_strided_slice %227 {offsets = [0, 0], sizes = [2, 32], strides = [1, 1]} : vector<2x64xf32> to vector<2x32xf32>
    %229 = vector.extract_strided_slice %227 {offsets = [0, 32], sizes = [2, 32], strides = [1, 1]} : vector<2x64xf32> to vector<2x32xf32>
    %230 = vector.extract_strided_slice %219 {offsets = [0, 64], sizes = [2, 32], strides = [1, 1]} : vector<2x96xf32> to vector<2x32xf32>
    %231 = vector.extract_strided_slice %190 {offsets = [0, 64], sizes = [2, 32], strides = [1, 1]} : vector<2x256xf32> to vector<2x32xf32>
    %232 = arith.mulf %228, %231 : vector<2x32xf32>
    %233 = arith.addf %230, %232 : vector<2x32xf32>
    %234 = math.tanh %233 : vector<2x32xf32>
    %cst_76 = arith.constant 1.000000e+00 : f32
    %235 = vector.broadcast %cst_76 : f32 to vector<2x32xf32>
    %236 = arith.subf %235, %229 : vector<2x32xf32>
    %237 = arith.mulf %236, %234 : vector<2x32xf32>
    %238 = arith.mulf %229, %180 : vector<2x32xf32>
    %239 = arith.addf %237, %238 : vector<2x32xf32>
    %c0_77 = arith.constant 0 : index
    %c3 = arith.constant 3 : index
    %c0_78 = arith.constant 0 : index
    %240 = vector.load %arg7[%c0_77, %c3, %c0_78] : memref<2x6x32xf32, #tpu.memory_space<vmem>>, vector<2x1x32xf32>
    %241 = vector.shape_cast %240 : vector<2x1x32xf32> to vector<2x32xf32>
    %242 = vector.shape_cast %239 : vector<2x32xf32> to vector<2x1x32xf32>
    tpu.vector_store %arg7[%c0_77, %c3, %c0_78], %242 {strides = array<i32>} : memref<2x6x32xf32, #tpu.memory_space<vmem>>, vector<2x1x32xf32>,
    %243 = tpu.concatenate %208, %12 in 1 : vector<2x8xf32>, vector<2x120xf32> -> vector<2x128xf32>
    %c0_79 = arith.constant 0 : index
    %c3_80 = arith.constant 3 : index
    %c0_81 = arith.constant 0 : index
    %244 = vector.load %arg6[%c0_79, %c3_80, %c0_81] : memref<2x6x128xf32, #tpu.memory_space<vmem>>, vector<2x1x128xf32>
    %245 = vector.shape_cast %244 : vector<2x1x128xf32> to vector<2x128xf32>
    %246 = vector.shape_cast %243 : vector<2x128xf32> to vector<2x1x128xf32>
    tpu.vector_store %arg6[%c0_79, %c3_80, %c0_81], %246 {strides = array<i32>} : memref<2x6x128xf32, #tpu.memory_space<vmem>>, vector<2x1x128xf32>,
    %cst_82 = arith.constant dense<0.000000e+00> : vector<2x256xf32>
    %247 = tpu.matmul %239, %1, %cst_82 {dimension_numbers = #tpu.dot_dimension_numbers<[1], [0], [0], [1], [0, 0, 1, 1], [], []>} : vector<2x32xf32>, vector<32x256xf32>, vector<2x256xf32> -> vector<2x256xf32>
    %248 = vector.broadcast %2 : vector<1x256xf32> to vector<2x256xf32>
    %249 = arith.addf %247, %248 : vector<2x256xf32>
    %250 = vector.extract_strided_slice %249 {offsets = [0, 96], sizes = [2, 32], strides = [1, 1]} : vector<2x256xf32> to vector<2x32xf32>
    %251 = vector.shape_cast %250 : vector<2x32xf32> to vector<2x1x32xf32>
    %252 = vector.broadcast %251 : vector<2x1x32xf32> to vector<2x8x32xf32>
    %253 = arith.addf %252, %10 : vector<2x8x32xf32>
    %254 = math.tanh %253 : vector<2x8x32xf32>
    %255 = vector.shape_cast %3 : vector<1x32xf32> to vector<1x1x32xf32>
    %256 = vector.broadcast %255 : vector<1x1x32xf32> to vector<2x8x32xf32>
    %257 = arith.mulf %254, %256 : vector<2x8x32xf32>
    %cst_83 = arith.constant dense<0.000000e+00> : vector<2x8xf32>
    %258 = vector.multi_reduction <add>, %257, %cst_83 [2] : vector<2x8x32xf32> to vector<2x8xf32>
    %cst_84 = arith.constant dense<0xFF800000> : vector<2xf32>
    %259 = vector.multi_reduction <maximumf>, %258, %cst_84 [1] : vector<2x8xf32> to vector<2xf32>
    %260 = vector.shape_cast %259 : vector<2xf32> to vector<2x1xf32>
    %261 = vector.broadcast %260 : vector<2x1xf32> to vector<2x8xf32>
    %262 = arith.subf %258, %261 : vector<2x8xf32>
    %263 = math.exp %262 : vector<2x8xf32>
    %cst_85 = arith.constant dense<0.000000e+00> : vector<2xf32>
    %264 = vector.multi_reduction <add>, %263, %cst_85 [1] : vector<2x8xf32> to vector<2xf32>
    %265 = vector.shape_cast %264 : vector<2xf32> to vector<2x1xf32>
    %266 = vector.broadcast %265 : vector<2x1xf32> to vector<2x8xf32>
    %267 = arith.divf %263, %266 : vector<2x8xf32>
    %268 = vector.shape_cast %267 : vector<2x8xf32> to vector<2x8x1xf32>
    %269 = vector.broadcast %268 : vector<2x8x1xf32> to vector<2x8x32xf32>
    %270 = arith.mulf %269, %0 : vector<2x8x32xf32>
    %cst_86 = arith.constant dense<0.000000e+00> : vector<2x32xf32>
    %271 = vector.multi_reduction <add>, %270, %cst_86 [1] : vector<2x8x32xf32> to vector<2x32xf32>
    %c32_87 = arith.constant 32 : index
    %c0_88 = arith.constant 0 : index
    %272 = vector.load %arg2[%c32_87, %c0_88] : memref<64x256xf32, #tpu.memory_space<vmem>>, vector<32x96xf32>
    %c1_89 = arith.constant 1 : index
    %c0_90 = arith.constant 0 : index
    %273 = vector.load %arg3[%c1_89, %c0_90] : memref<3x256xf32, #tpu.memory_space<vmem>>, vector<1x96xf32>
    %cst_91 = arith.constant dense<0.000000e+00> : vector<2x96xf32>
    %274 = tpu.matmul %271, %272, %cst_91 {dimension_numbers = #tpu.dot_dimension_numbers<[1], [0], [0], [1], [0, 0, 1, 1], [], []>} : vector<2x32xf32>, vector<32x96xf32>, vector<2x96xf32> -> vector<2x96xf32>
    %275 = vector.broadcast %273 : vector<1x96xf32> to vector<2x96xf32>
    %276 = arith.addf %274, %275 : vector<2x96xf32>
    %277 = vector.extract_strided_slice %249 {offsets = [0, 128], sizes = [2, 96], strides = [1, 1]} : vector<2x256xf32> to vector<2x96xf32>
    %278 = arith.addf %276, %277 : vector<2x96xf32>
    %279 = vector.extract_strided_slice %278 {offsets = [0, 0], sizes = [2, 64], strides = [1, 1]} : vector<2x96xf32> to vector<2x64xf32>
    %280 = vector.extract_strided_slice %249 {offsets = [0, 0], sizes = [2, 64], strides = [1, 1]} : vector<2x256xf32> to vector<2x64xf32>
    %281 = arith.addf %279, %280 : vector<2x64xf32>
    %282 = arith.negf %281 : vector<2x64xf32>
    %283 = math.exp %282 : vector<2x64xf32>
    %cst_92 = arith.constant 1.000000e+00 : f32
    %284 = vector.broadcast %cst_92 : f32 to vector<2x64xf32>
    %285 = arith.addf %284, %283 : vector<2x64xf32>
    %286 = arith.divf %284, %285 : vector<2x64xf32>
    %287 = vector.extract_strided_slice %286 {offsets = [0, 0], sizes = [2, 32], strides = [1, 1]} : vector<2x64xf32> to vector<2x32xf32>
    %288 = vector.extract_strided_slice %286 {offsets = [0, 32], sizes = [2, 32], strides = [1, 1]} : vector<2x64xf32> to vector<2x32xf32>
    %289 = vector.extract_strided_slice %278 {offsets = [0, 64], sizes = [2, 32], strides = [1, 1]} : vector<2x96xf32> to vector<2x32xf32>
    %290 = vector.extract_strided_slice %249 {offsets = [0, 64], sizes = [2, 32], strides = [1, 1]} : vector<2x256xf32> to vector<2x32xf32>
    %291 = arith.mulf %287, %290 : vector<2x32xf32>
    %292 = arith.addf %289, %291 : vector<2x32xf32>
    %293 = math.tanh %292 : vector<2x32xf32>
    %cst_93 = arith.constant 1.000000e+00 : f32
    %294 = vector.broadcast %cst_93 : f32 to vector<2x32xf32>
    %295 = arith.subf %294, %288 : vector<2x32xf32>
    %296 = arith.mulf %295, %293 : vector<2x32xf32>
    %297 = arith.mulf %288, %239 : vector<2x32xf32>
    %298 = arith.addf %296, %297 : vector<2x32xf32>
    %c0_94 = arith.constant 0 : index
    %c4 = arith.constant 4 : index
    %c0_95 = arith.constant 0 : index
    %299 = vector.load %arg7[%c0_94, %c4, %c0_95] : memref<2x6x32xf32, #tpu.memory_space<vmem>>, vector<2x1x32xf32>
    %300 = vector.shape_cast %299 : vector<2x1x32xf32> to vector<2x32xf32>
    %301 = vector.shape_cast %298 : vector<2x32xf32> to vector<2x1x32xf32>
    tpu.vector_store %arg7[%c0_94, %c4, %c0_95], %301 {strides = array<i32>} : memref<2x6x32xf32, #tpu.memory_space<vmem>>, vector<2x1x32xf32>,
    %302 = tpu.concatenate %267, %12 in 1 : vector<2x8xf32>, vector<2x120xf32> -> vector<2x128xf32>
    %c0_96 = arith.constant 0 : index
    %c4_97 = arith.constant 4 : index
    %c0_98 = arith.constant 0 : index
    %303 = vector.load %arg6[%c0_96, %c4_97, %c0_98] : memref<2x6x128xf32, #tpu.memory_space<vmem>>, vector<2x1x128xf32>
    %304 = vector.shape_cast %303 : vector<2x1x128xf32> to vector<2x128xf32>
    %305 = vector.shape_cast %302 : vector<2x128xf32> to vector<2x1x128xf32>
    tpu.vector_store %arg6[%c0_96, %c4_97, %c0_98], %305 {strides = array<i32>} : memref<2x6x128xf32, #tpu.memory_space<vmem>>, vector<2x1x128xf32>,
    %cst_99 = arith.constant dense<0.000000e+00> : vector<2x256xf32>
    %306 = tpu.matmul %298, %1, %cst_99 {dimension_numbers = #tpu.dot_dimension_numbers<[1], [0], [0], [1], [0, 0, 1, 1], [], []>} : vector<2x32xf32>, vector<32x256xf32>, vector<2x256xf32> -> vector<2x256xf32>
    %307 = vector.broadcast %2 : vector<1x256xf32> to vector<2x256xf32>
    %308 = arith.addf %306, %307 : vector<2x256xf32>
    %309 = vector.extract_strided_slice %308 {offsets = [0, 96], sizes = [2, 32], strides = [1, 1]} : vector<2x256xf32> to vector<2x32xf32>
    %310 = vector.shape_cast %309 : vector<2x32xf32> to vector<2x1x32xf32>
    %311 = vector.broadcast %310 : vector<2x1x32xf32> to vector<2x8x32xf32>
    %312 = arith.addf %311, %10 : vector<2x8x32xf32>
    %313 = math.tanh %312 : vector<2x8x32xf32>
    %314 = vector.shape_cast %3 : vector<1x32xf32> to vector<1x1x32xf32>
    %315 = vector.broadcast %314 : vector<1x1x32xf32> to vector<2x8x32xf32>
    %316 = arith.mulf %313, %315 : vector<2x8x32xf32>
    %cst_100 = arith.constant dense<0.000000e+00> : vector<2x8xf32>
    %317 = vector.multi_reduction <add>, %316, %cst_100 [2] : vector<2x8x32xf32> to vector<2x8xf32>
    %cst_101 = arith.constant dense<0xFF800000> : vector<2xf32>
    %318 = vector.multi_reduction <maximumf>, %317, %cst_101 [1] : vector<2x8xf32> to vector<2xf32>
    %319 = vector.shape_cast %318 : vector<2xf32> to vector<2x1xf32>
    %320 = vector.broadcast %319 : vector<2x1xf32> to vector<2x8xf32>
    %321 = arith.subf %317, %320 : vector<2x8xf32>
    %322 = math.exp %321 : vector<2x8xf32>
    %cst_102 = arith.constant dense<0.000000e+00> : vector<2xf32>
    %323 = vector.multi_reduction <add>, %322, %cst_102 [1] : vector<2x8xf32> to vector<2xf32>
    %324 = vector.shape_cast %323 : vector<2xf32> to vector<2x1xf32>
    %325 = vector.broadcast %324 : vector<2x1xf32> to vector<2x8xf32>
    %326 = arith.divf %322, %325 : vector<2x8xf32>
    %327 = vector.shape_cast %326 : vector<2x8xf32> to vector<2x8x1xf32>
    %328 = vector.broadcast %327 : vector<2x8x1xf32> to vector<2x8x32xf32>
    %329 = arith.mulf %328, %0 : vector<2x8x32xf32>
    %cst_103 = arith.constant dense<0.000000e+00> : vector<2x32xf32>
    %330 = vector.multi_reduction <add>, %329, %cst_103 [1] : vector<2x8x32xf32> to vector<2x32xf32>
    %c32_104 = arith.constant 32 : index
    %c0_105 = arith.constant 0 : index
    %331 = vector.load %arg2[%c32_104, %c0_105] : memref<64x256xf32, #tpu.memory_space<vmem>>, vector<32x96xf32>
    %c1_106 = arith.constant 1 : index
    %c0_107 = arith.constant 0 : index
    %332 = vector.load %arg3[%c1_106, %c0_107] : memref<3x256xf32, #tpu.memory_space<vmem>>, vector<1x96xf32>
    %cst_108 = arith.constant dense<0.000000e+00> : vector<2x96xf32>
    %333 = tpu.matmul %330, %331, %cst_108 {dimension_numbers = #tpu.dot_dimension_numbers<[1], [0], [0], [1], [0, 0, 1, 1], [], []>} : vector<2x32xf32>, vector<32x96xf32>, vector<2x96xf32> -> vector<2x96xf32>
    %334 = vector.broadcast %332 : vector<1x96xf32> to vector<2x96xf32>
    %335 = arith.addf %333, %334 : vector<2x96xf32>
    %336 = vector.extract_strided_slice %308 {offsets = [0, 128], sizes = [2, 96], strides = [1, 1]} : vector<2x256xf32> to vector<2x96xf32>
    %337 = arith.addf %335, %336 : vector<2x96xf32>
    %338 = vector.extract_strided_slice %337 {offsets = [0, 0], sizes = [2, 64], strides = [1, 1]} : vector<2x96xf32> to vector<2x64xf32>
    %339 = vector.extract_strided_slice %308 {offsets = [0, 0], sizes = [2, 64], strides = [1, 1]} : vector<2x256xf32> to vector<2x64xf32>
    %340 = arith.addf %338, %339 : vector<2x64xf32>
    %341 = arith.negf %340 : vector<2x64xf32>
    %342 = math.exp %341 : vector<2x64xf32>
    %cst_109 = arith.constant 1.000000e+00 : f32
    %343 = vector.broadcast %cst_109 : f32 to vector<2x64xf32>
    %344 = arith.addf %343, %342 : vector<2x64xf32>
    %345 = arith.divf %343, %344 : vector<2x64xf32>
    %346 = vector.extract_strided_slice %345 {offsets = [0, 0], sizes = [2, 32], strides = [1, 1]} : vector<2x64xf32> to vector<2x32xf32>
    %347 = vector.extract_strided_slice %345 {offsets = [0, 32], sizes = [2, 32], strides = [1, 1]} : vector<2x64xf32> to vector<2x32xf32>
    %348 = vector.extract_strided_slice %337 {offsets = [0, 64], sizes = [2, 32], strides = [1, 1]} : vector<2x96xf32> to vector<2x32xf32>
    %349 = vector.extract_strided_slice %308 {offsets = [0, 64], sizes = [2, 32], strides = [1, 1]} : vector<2x256xf32> to vector<2x32xf32>
    %350 = arith.mulf %346, %349 : vector<2x32xf32>
    %351 = arith.addf %348, %350 : vector<2x32xf32>
    %352 = math.tanh %351 : vector<2x32xf32>
    %cst_110 = arith.constant 1.000000e+00 : f32
    %353 = vector.broadcast %cst_110 : f32 to vector<2x32xf32>
    %354 = arith.subf %353, %347 : vector<2x32xf32>
    %355 = arith.mulf %354, %352 : vector<2x32xf32>
    %356 = arith.mulf %347, %298 : vector<2x32xf32>
    %357 = arith.addf %355, %356 : vector<2x32xf32>
    %c0_111 = arith.constant 0 : index
    %c5 = arith.constant 5 : index
    %c0_112 = arith.constant 0 : index
    %358 = vector.load %arg7[%c0_111, %c5, %c0_112] : memref<2x6x32xf32, #tpu.memory_space<vmem>>, vector<2x1x32xf32>
    %359 = vector.shape_cast %358 : vector<2x1x32xf32> to vector<2x32xf32>
    %360 = vector.shape_cast %357 : vector<2x32xf32> to vector<2x1x32xf32>
    tpu.vector_store %arg7[%c0_111, %c5, %c0_112], %360 {strides = array<i32>} : memref<2x6x32xf32, #tpu.memory_space<vmem>>, vector<2x1x32xf32>,
    %361 = tpu.concatenate %326, %12 in 1 : vector<2x8xf32>, vector<2x120xf32> -> vector<2x128xf32>
    %c0_113 = arith.constant 0 : index
    %c5_114 = arith.constant 5 : index
    %c0_115 = arith.constant 0 : index
    %362 = vector.load %arg6[%c0_113, %c5_114, %c0_115] : memref<2x6x128xf32, #tpu.memory_space<vmem>>, vector<2x1x128xf32>
    %363 = vector.shape_cast %362 : vector<2x1x128xf32> to vector<2x128xf32>
    %364 = vector.shape_cast %361 : vector<2x128xf32> to vector<2x1x128xf32>
    tpu.vector_store %arg6[%c0_113, %c5_114, %c0_115], %364 {strides = array<i32>} : memref<2x6x128xf32, #tpu.memory_space<vmem>>, vector<2x1x128xf32>,
    %c32_116 = arith.constant 32 : index
    %c128 = arith.constant 128 : index
    %365 = vector.load %arg2[%c32_116, %c128] : memref<64x256xf32, #tpu.memory_space<vmem>>, vector<32x128xf32>
    %c1_117 = arith.constant 1 : index
    %c128_118 = arith.constant 128 : index
    %366 = vector.load %arg3[%c1_117, %c128_118] : memref<3x256xf32, #tpu.memory_space<vmem>>, vector<1x128xf32>
    %c0_119 = arith.constant 0 : index
    %c0_120 = arith.constant 0 : index
    %c0_121 = arith.constant 0 : index
    %367 = vector.load %arg7[%c0_119, %c0_120, %c0_121] : memref<2x6x32xf32, #tpu.memory_space<vmem>>, vector<2x6x32xf32>
    %368 = vector.shape_cast %367 : vector<2x6x32xf32> to vector<12x32xf32>
    %cst_122 = arith.constant dense<0.000000e+00> : vector<12x128xf32>
    %369 = tpu.matmul %368, %365, %cst_122 {dimension_numbers = #tpu.dot_dimension_numbers<[1], [0], [0], [1], [0, 0, 1, 1], [], []>} : vector<12x32xf32>, vector<32x128xf32>, vector<12x128xf32> -> vector<12x128xf32>
    %370 = vector.broadcast %366 : vector<1x128xf32> to vector<12x128xf32>
    %371 = arith.addf %369, %370 : vector<12x128xf32>
    %c0_123 = arith.constant 0 : index
    %c0_124 = arith.constant 0 : index
    %372 = vector.load %arg4[%c0_123, %c0_124] : memref<12x128xf32, #tpu.memory_space<vmem>>, vector<12x128xf32>
    tpu.vector_store %arg4[%c0_123, %c0_124], %371 {strides = array<i32>} : memref<12x128xf32, #tpu.memory_space<vmem>>, vector<12x128xf32>,
    %c0_125 = arith.constant 0 : index
    %c0_126 = arith.constant 0 : index
    %373 = vector.load %arg5[%c0_125, %c0_126] : memref<2x32xf32, #tpu.memory_space<vmem>>, vector<2x32xf32>
    tpu.vector_store %arg5[%c0_125, %c0_126], %357 {strides = array<i32>} : memref<2x32xf32, #tpu.memory_space<vmem>>, vector<2x32xf32>,
    return
  }
}

</mosaic_0001>

<llo_original>
// kernel: tpu_custom_call.1
$region0: #{tpu_custom_call.1}
  #allocation0 [shape = 'u32[]', space=smem, size = 0x4, offset = 0x4, fixed_abs, tag = 'smem constant byte address 0x4 - core index']
  #allocation1 [shape = 'u32[144,128]{1,0:T(1,128)}', space=vmem, size = 0x12000, scoped, tag = 'internal scratch']
  #allocation2 [shape = 'f32[2,6,32]{2,1,0:T(8,128)}', space=vmem, size = 0x2000, scoped, tag = 'scratch operand']
  %s0 = inlined_call_operand.hbm [shape: f32[2,8,32], index: 0, kind: input, shape index: {}]
  %s1 = inlined_call_operand.vmem [shape: f32[2,32], index: 1, kind: input, shape index: {}]
  %s2 = inlined_call_operand.hbm [shape: f32[64,256], index: 2, kind: input, shape index: {}]
  %s3 = inlined_call_operand.vmem [shape: f32[3,256], index: 3, kind: input, shape index: {}]
  %s4 = inlined_call_operand.hbm [shape: f32[12,128], index: 4, kind: output, shape index: {0}]
  %s5 = inlined_call_operand.hbm [shape: f32[2,32], index: 5, kind: output, shape index: {1}]
  %s6 = inlined_call_operand.vmem [shape: f32[2,6,128], index: 6, kind: output, shape index: {2}]
  %7 = xla_tuple %s4, %s5, %s6
  %s8 = sld [smem:[#allocation0]]
  $region50: #{tpu_custom_call.1} parent=0
    _
  %s10 = ssub.s32 1, %s8
  %s11 = scalar_select 0, %s10, %s8
  $region1: #{tpu_custom_call.1} parent=0
    #allocation3 [shape = 'u8[8192]{0}', space=vmem, size = 0x2000, scoped, tag = 'input window, operand 0, single buffered']
    #allocation4 [shape = 's32[1]{0}', space=sflag, size = 0x4, scoped, tag = 'scoped memory for tpu_custom_call.1']
    #allocation5 [shape = 's32[1]{0}', space=sflag, size = 0x4, scoped, tag = 'scoped memory for tpu_custom_call.1']
    #allocation6 [shape = 'u8[65536]{0}', space=vmem, size = 0x10000, scoped, tag = 'input window, operand 2, single buffered']
    #allocation7 [shape = 's32[1]{0}', space=sflag, size = 0x4, scoped, tag = 'scoped memory for tpu_custom_call.1']
    #allocation8 [shape = 'u8[8192]{0}', space=vmem, size = 0x2000, scoped, tag = 'output window, operand 0, single buffered']
    #allocation9 [shape = 'u8[1024]{0}', space=vmem, size = 0x400, scoped, tag = 'output window, operand 1, single buffered']
    #allocation10 [shape = 's32[1]{0}', space=sflag, size = 0x4, scoped, tag = 'scoped memory for tpu_custom_call.1']
    %12 = vsyncpa [#allocation4], 0
    %13 = vsyncpa [#allocation7], 0
    %14 = vsyncpa [#allocation5], 0
    %15 = vsyncpa [#allocation10], 0
    // Predicated region
    $region2: #{tpu_custom_call.1} parent=1 // pred_check
      _
    $region3: #{tpu_custom_call.1} parent=1 // pred_check_branch
      %17 = sbr.rel (0) target = $region5
    $region4: #{tpu_custom_call.1} parent=1 // pred_region
      %s19 = ssub.s32 256, 256
      %20 = vsyncadd [#allocation4], %s19
      %s21 = sshll.u32 [#allocation3], 4
      %s22 = int_to_ptr.vmem [resolvable:$true] %s21
      %27 = dma.hbm_to_vmem [thread:$0]  %s0, 256, %s22, [#allocation4], 128, 128, 8
    $region5: #{tpu_custom_call.1} parent=1 // pred_fallthru
      _
    // Predicated region
    $region6: #{tpu_custom_call.1} parent=1 // pred_check
      _
    $region7: #{tpu_custom_call.1} parent=1 // pred_check_branch
      %29 = sbr.rel (0) target = $region9
    $region8: #{tpu_custom_call.1} parent=1 // pred_region
      _
    $region9: #{tpu_custom_call.1} parent=1 // pred_fallthru
      _
    // Predicated region
    $region10: #{tpu_custom_call.1} parent=1 // pred_check
      _
    $region11: #{tpu_custom_call.1} parent=1 // pred_check_branch
      %31 = sbr.rel (0) target = $region13
    $region12: #{tpu_custom_call.1} parent=1 // pred_region
      %s33 = ssub.s32 2048, 2048
      %34 = vsyncadd [#allocation7], %s33
      %s35 = sshll.u32 [#allocation6], 4
      %s36 = int_to_ptr.vmem [resolvable:$true] %s35
      %41 = dma.hbm_to_vmem [thread:$0]  %s2, 2048, %s36, [#allocation7], 256, 256, 16
    $region13: #{tpu_custom_call.1} parent=1 // pred_fallthru
      _
    // Predicated region
    $region14: #{tpu_custom_call.1} parent=1 // pred_check
      _
    $region15: #{tpu_custom_call.1} parent=1 // pred_check_branch
      %43 = sbr.rel (0) target = $region17
    $region16: #{tpu_custom_call.1} parent=1 // pred_region
      _
    $region17: #{tpu_custom_call.1} parent=1 // pred_fallthru
      _
    // Predicated region
    $region18: #{tpu_custom_call.1} parent=1 // pred_check
      _
    $region19: #{tpu_custom_call.1} parent=1 // pred_check_branch
      %45 = sbr.rel (0) target = $region21
    $region20: #{tpu_custom_call.1} parent=1 // pred_region
      %46 = dma.done [#allocation4], 256
    $region21: #{tpu_custom_call.1} parent=1 // pred_fallthru
      _
    // Predicated region
    $region22: #{tpu_custom_call.1} parent=1 // pred_check
      _
    $region23: #{tpu_custom_call.1} parent=1 // pred_check_branch
      %48 = sbr.rel (0) target = $region25
    $region24: #{tpu_custom_call.1} parent=1 // pred_region
      %49 = dma.done [#allocation7], 2048
    $region25: #{tpu_custom_call.1} parent=1 // pred_fallthru
      _
    %v50 = vld [vmem:[#allocation3] sm:$0xff]
    %v51 = vld [vmem:[#allocation3 + $0x8] sm:$0xff]
    %v52 = vld [vmem:[#allocation6] sm:$0xff]
    %v53 = vld [vmem:[#allocation6 + $0x8] sm:$0xff]
    %v54 = vld [vmem:[#allocation6 + $0x10] sm:$0xff]
    %v55 = vld [vmem:[#allocation6 + $0x18] sm:$0xff]
    %v56 = vld [vmem:[#allocation6 + $0x20] sm:$0xff]
    %v57 = vld [vmem:[#allocation6 + $0x28] sm:$0xff]
    %v58 = vld [vmem:[#allocation6 + $0x30] sm:$0xff]
    %v59 = vld [vmem:[#allocation6 + $0x38] sm:$0xff]
    %v60 = vld [vmem:[%s3] ss:$4 sm:$0x3]
    %v61 = vld [vmem:[%s3 + $0x2] sm:$0x1]
    %v62 = vld [vmem:[#allocation6 + $0x40] sm:$0xff]
    %v63 = vld [vmem:[#allocation6 + $0x50] sm:$0xff]
    %v64 = vld [vmem:[#allocation6 + $0x60] sm:$0xff]
    %v65 = vld [vmem:[#allocation6 + $0x70] sm:$0xff]
    %v66 = vld [vmem:[%s3 + $0x1] sm:$0x1]
    %v67 = vlaneseq
    %v68 = vshrl.u32 %v67, 7
    %v69 = vsub.s32 0, %v68
    %v70 = vrot.slane %v66, %v69
    %75 = vrot.lane.b32.xlu0 %v62, 32
    %v76 = vpop.permute.xlu0 %75
    %77 = vrot.lane.b32.xlu0 %v63, 32
    %v78 = vpop.permute.xlu0 %77
    %79 = vrot.lane.b32.xlu0 %v64, 32
    %v80 = vpop.permute.xlu0 %79
    %81 = vrot.lane.b32.xlu0 %v65, 32
    %v82 = vpop.permute.xlu0 %81
    %88 = vrot.lane.b32.xlu0 %v70, 32
    %v89 = vpop.permute.xlu0 %88
    %vm91 = vcmask 261120
    %v93 = vsel %vm91, %v50, 0
    %v96 = vsel %vm91, %v51, 0
    %98 = vmatprep.subr.mxu0 0.0
    %99 = vmatpush1.msra.mxu0 %v76
    %100 = vmatprep.subr.mxu0 0.0
    %101 = vmatpush1.msra.mxu0 %v78
    %102 = vmatprep.subr.mxu0 0.0
    %103 = vmatpush1.msra.mxu0 %v80
    %104 = vmatprep.subr.mxu0 0.0
    %105 = vmatpush1.msra.mxu0 %v82
    %106 = vmatprep.subr.mxu0 0.0
    %107 = vmatpush1.msra.mxu0 0.0
    %108 = vmatprep.subr.mxu0 0.0
    %109 = vmatpush1.msra.mxu0 0.0
    %110 = vmatprep.subr.mxu0 0.0
    %111 = vmatpush1.msra.mxu0 0.0
    %112 = vmatprep.subr.mxu0 0.0
    %113 = vmatpush1.msra.mxu0 0.0
    %114 = vmatprep.subr.mxu0 0.0
    %115 = vmatpush1.msra.mxu0 0.0
    %116 = vmatprep.subr.mxu0 0.0
    %117 = vmatpush1.msra.mxu0 0.0
    %118 = vmatprep.subr.mxu0 0.0
    %119 = vmatpush1.msra.mxu0 0.0
    %120 = vmatprep.subr.mxu0 0.0
    %121 = vmatpush1.msra.mxu0 0.0
    %122 = vmatprep.subr.mxu0 0.0
    %123 = vmatpush1.msra.mxu0 0.0
    %124 = vmatprep.subr.mxu0 0.0
    %125 = vmatpush1.msra.mxu0 0.0
    %126 = vmatprep.subr.mxu0 0.0
    %127 = vmatpush1.msra.mxu0 0.0
    %128 = vmatprep.subr.mxu0 0.0
    %129 = vmatpush1.msra.mxu0 0.0
    %130 = vmatprep.subr.mxu0 0.0
    %131 = vmatpush1.msra.mxu0 0.0
    %132 = vmatprep.subr.mxu0 0.0
    %133 = vmatpush1.msra.mxu0 0.0
    %134 = vmatprep.subr.mxu0 0.0
    %135 = vmatpush1.msra.mxu0 0.0
    %136 = vmatprep.subr.mxu0 0.0
    %137 = vmatpush1.msra.mxu0 0.0
    %138 = vmatprep.subr.mxu0 0.0
    %139 = vmatpush1.msra.mxu0 0.0
    %140 = vmatprep.subr.mxu0 0.0
    %141 = vmatpush1.msra.mxu0 0.0
    %142 = vmatprep.subr.mxu0 0.0
    %143 = vmatpush1.msra.mxu0 0.0
    %144 = vmatprep.subr.mxu0 0.0
    %145 = vmatpush1.msra.mxu0 0.0
    %146 = vmatprep.subr.mxu0 0.0
    %147 = vmatpush1.msra.mxu0 0.0
    %148 = vmatprep.subr.mxu0 0.0
    %149 = vmatpush1.msra.mxu0 0.0
    %150 = vmatprep.subr.mxu0 0.0
    %151 = vmatpush1.msra.mxu0 0.0
    %152 = vmatprep.subr.mxu0 0.0
    %153 = vmatpush1.msra.mxu0 0.0
    %154 = vmatprep.subr.mxu0 0.0
    %155 = vmatpush1.msra.mxu0 0.0
    %156 = vmatprep.subr.mxu0 0.0
    %157 = vmatpush1.msra.mxu0 0.0
    %158 = vmatprep.subr.mxu0 0.0
    %159 = vmatpush1.msra.mxu0 0.0
    %160 = vmatprep.subr.mxu0 0.0
    %161 = vmatpush1.msra.mxu0 0.0
    %162 = vmatprep.mubr.f32.mxu0 0.0
    %163 = vmatmul.mubr.f32.gmra.mrb[0].mxu0 %v93
    %v164 = vpop.f32.mrb[0].mxu0
    %v165 = vadd.f32 %v89, %v164
    %v166 = vpop.f32.mrb[0].mxu0
    %167 = vmatprep.mubr.f32.mxu0 0.0
    %168 = vmatmul.mubr.f32.gmra.mrb[0].mxu0 %v96
    %v169 = vpop.f32.mrb[0].mxu0
    %v170 = vadd.f32 %v89, %v169
    %v171 = vpop.f32.mrb[0].mxu0
    %172 = vdwg.mxu0
    %v173 = vld [vmem:[%s1] sm:$0x3]
    %v175 = vlaneseq
    %v176 = vshrl.u32 %v175, 7
    %v177 = vsub.s32 0, %v176
    %v178 = vrot.slane %v60, %v177
    %v179 = vlaneseq
    %v180 = vshrl.u32 %v179, 7
    %v181 = vsub.s32 1, %v180
    %v182 = vrot.slane %v60, %v181
    %v186 = vsel %vm91, %v173, 0
    %188 = vmatprep.subr.mxu0 %v53
    %189 = vmatpush1.msra.mxu0 %v52
    %190 = vmatprep.subr.mxu0 %v55
    %191 = vmatpush1.msra.mxu0 %v54
    %192 = vmatprep.subr.mxu0 %v57
    %193 = vmatpush1.msra.mxu0 %v56
    %194 = vmatprep.subr.mxu0 %v59
    %195 = vmatpush1.msra.mxu0 %v58
    %196 = vmatprep.subr.mxu0 0.0
    %197 = vmatpush1.msra.mxu0 0.0
    %198 = vmatprep.subr.mxu0 0.0
    %199 = vmatpush1.msra.mxu0 0.0
    %200 = vmatprep.subr.mxu0 0.0
    %201 = vmatpush1.msra.mxu0 0.0
    %202 = vmatprep.subr.mxu0 0.0
    %203 = vmatpush1.msra.mxu0 0.0
    %204 = vmatprep.subr.mxu0 0.0
    %205 = vmatpush1.msra.mxu0 0.0
    %206 = vmatprep.subr.mxu0 0.0
    %207 = vmatpush1.msra.mxu0 0.0
    %208 = vmatprep.subr.mxu0 0.0
    %209 = vmatpush1.msra.mxu0 0.0
    %210 = vmatprep.subr.mxu0 0.0
    %211 = vmatpush1.msra.mxu0 0.0
    %212 = vmatprep.subr.mxu0 0.0
    %213 = vmatpush1.msra.mxu0 0.0
    %214 = vmatprep.subr.mxu0 0.0
    %215 = vmatpush1.msra.mxu0 0.0
    %216 = vmatprep.subr.mxu0 0.0
    %217 = vmatpush1.msra.mxu0 0.0
    %218 = vmatprep.subr.mxu0 0.0
    %219 = vmatpush1.msra.mxu0 0.0
    %220 = vmatprep.subr.mxu0 0.0
    %221 = vmatpush1.msra.mxu0 0.0
    %222 = vmatprep.subr.mxu0 0.0
    %223 = vmatpush1.msra.mxu0 0.0
    %224 = vmatprep.subr.mxu0 0.0
    %225 = vmatpush1.msra.mxu0 0.0
    %226 = vmatprep.subr.mxu0 0.0
    %227 = vmatpush1.msra.mxu0 0.0
    %228 = vmatprep.subr.mxu0 0.0
    %229 = vmatpush1.msra.mxu0 0.0
    %230 = vmatprep.subr.mxu0 0.0
    %231 = vmatpush1.msra.mxu0 0.0
    %232 = vmatprep.subr.mxu0 0.0
    %233 = vmatpush1.msra.mxu0 0.0
    %234 = vmatprep.subr.mxu0 0.0
    %235 = vmatpush1.msra.mxu0 0.0
    %236 = vmatprep.subr.mxu0 0.0
    %237 = vmatpush1.msra.mxu0 0.0
    %238 = vmatprep.subr.mxu0 0.0
    %239 = vmatpush1.msra.mxu0 0.0
    %240 = vmatprep.subr.mxu0 0.0
    %241 = vmatpush1.msra.mxu0 0.0
    %242 = vmatprep.subr.mxu0 0.0
    %243 = vmatpush1.msra.mxu0 0.0
    %244 = vmatprep.subr.mxu0 0.0
    %245 = vmatpush1.msra.mxu0 0.0
    %246 = vmatprep.subr.mxu0 0.0
    %247 = vmatpush1.msra.mxu0 0.0
    %248 = vmatprep.subr.mxu0 0.0
    %249 = vmatpush1.msra.mxu0 0.0
    %250 = vmatprep.subr.mxu0 0.0
    %251 = vmatpush1.msra.mxu0 0.0
    %252 = vmatprep.mubr.f32.mxu0 0.0
    %253 = vmatmul.mubr.f32.gmra.mrb[0].mxu0 %v186
    %v254 = vpop.f32.mrb[0].mxu0
    %v255 = vadd.f32 %v178, %v254
    %v256 = vpop.f32.mrb[0].mxu0
    %257 = vdwg.mxu0
    %v260 = vunpack.c.l.s4 1966171168
    %v261 = vunpack.c.0.s8 %v260
    %v262 = vlaneseq
    %v263 = vshrl.u32 %v262, 7
    %v264 = vsub.s32 %v261, %v263
    %v265 = vrot.slane %v255, %v264
    %v266 = vcombine.high %v265, %v265
    %v268 = vunpack.c.l.s4 1966171168
    %v269 = vunpack.c.0.s8 %v268
    %v270 = vlaneseq
    %v271 = vshrl.u32 %v270, 7
    %v272 = vsub.s32 %v269, %v271
    %v273 = vrot.slane %v265, %v272
    %v275 = vunpack.c.l.s4 1966171168
    %v276 = vunpack.c.0.s8 %v275
    %v277 = vlaneseq
    %v278 = vshrl.u32 %v277, 7
    %v279 = vsub.s32 %v276, %v278
    %v280 = vrot.slane %v266, %v279
    %v281 = vlaneseq
    %v282 = vshrl.u32 %v281, 7
    %v283 = vsub.s32 0, %v282
    %v284 = vrot.slane %v273, %v283
    %v285 = vlaneseq
    %v286 = vshrl.u32 %v285, 7
    %v287 = vsub.s32 0, %v286
    %v288 = vrot.slane %v280, %v287
    %293 = vrot.lane.b32.xlu0 %v165, 96
    %v294 = vpop.permute.xlu0 %293
    %295 = vrot.lane.b32.xlu0 %v170, 96
    %v296 = vpop.permute.xlu0 %295
    %v299 = vadd.f32 %v284, %v294
    %v300 = vadd.f32 %v288, %v296
    %v301 = vtanh.pop %v299
    %v302 = vtanh.pop %v300
    %v303 = vlaneseq
    %v304 = vshrl.u32 %v303, 7
    %v305 = vsub.s32 0, %v304
    %v306 = vrot.slane %v61, %v305
    %308 = vrot.lane.b32.xlu0 %v306, 96
    %v309 = vpop.permute.xlu0 %308
    %v311 = vmul.f32 %v301, %v309
    %v312 = vmul.f32 %v302, %v309
    %315 = vrot.lane.b32.xlu0 %v311, 32
    %v316 = vpop.permute.xlu0 %315
    %317 = vrot.lane.b32.xlu0 %v312, 32
    %v318 = vpop.permute.xlu0 %317
    %v321 = vsel %vm91, %v316, 0.0
    %322 = vadd.xlane.f32.xlu0 %v321
    %v323 = vpop.xlane.xlu0 %322
    %v324 = vsel %vm91, %v318, 0.0
    %325 = vadd.xlane.f32.xlu0 %v324
    %v326 = vpop.xlane.xlu0 %325
    %v329 = vlaneseq
    %v330 = vand.u32 %v329, 127
    %v331 = vlaneseq
    %v332 = vshrl.u32 %v331, 7
    %v333 = vsub.s32 %v330, %v332
    %v334 = vrot.slane %v323, %v333
    %v335 = vlaneseq
    %v336 = vshrl.u32 %v335, 7
    %v337 = vsub.s32 %v330, %v336
    %v338 = vrot.slane %v326, %v337
    %vm339 = vcmask 1041409
    %v340 = vsel %vm339, %v338, %v334
    %vm342 = vcmask 58368
    %v343 = vsel %vm342, %v340, -inf
    %344 = vmax.xlane.f32.xlu0 %v343
    %v345 = vpop.xlane.xlu0 %344
    %v347 = vlaneseq
    %v348 = vshrl.u32 %v347, 7
    %v349 = vsub.s32 0, %v348
    %v350 = vrot.slane %v345, %v349
    %v351 = vlaneseq
    %v352 = vshrl.u32 %v351, 7
    %v353 = vsub.s32 1, %v352
    %v354 = vrot.slane %v345, %v353
    %v357 = vsub.f32 %v323, %v350
    %v358 = vsub.f32 %v326, %v354
    %v359 = vmul.f32 %v357, 1.442695
    %v360 = vpow.pop %v359
    %v361 = vmul.f32 %v358, 1.442695
    %v362 = vpow.pop %v361
    %365 = vset.pattern.permute.xlu0 0
    %366 = vperm.xlu0 %365, %v360
    %v367 = vpop.permute.xlu0 %366
    %368 = vset.pattern.permute.xlu0 0
    %369 = vperm.xlu0 %368, %v362
    %v370 = vpop.permute.xlu0 %369
    %v371 = vlaneseq
    %v372 = vshrl.u32 %v371, 7
    %v373 = vsub.s32 %v330, %v372
    %v374 = vrot.slane %v367, %v373
    %v375 = vlaneseq
    %v376 = vshrl.u32 %v375, 7
    %v377 = vsub.s32 %v330, %v376
    %v378 = vrot.slane %v370, %v377
    %v379 = vsel %vm339, %v378, %v374
    %v381 = vsel %vm342, %v379, 0.0
    %382 = vadd.xlane.f32.xlu0 %v381
    %v383 = vpop.xlane.xlu0 %382
    %v385 = vlaneseq
    %v386 = vshrl.u32 %v385, 7
    %v387 = vsub.s32 0, %v386
    %v388 = vrot.slane %v383, %v387
    %v389 = vlaneseq
    %v390 = vshrl.u32 %v389, 7
    %v391 = vsub.s32 1, %v390
    %v392 = vrot.slane %v383, %v391
    %v395 = vrcp.pop %v388
    %v396 = vmul.f32 %v360, %v395
    %v397 = vrcp.pop %v392
    %v398 = vmul.f32 %v362, %v397
    %400 = vset.pattern.permute.xlu0 0
    %401 = vperm.xlu0 %400, %v396
    %v402 = vpop.permute.xlu0 %401
    %405 = vset.pattern.permute.xlu0 0
    %406 = vperm.xlu0 %405, %v398
    %v407 = vpop.permute.xlu0 %406
    %v409 = vmul.f32 %v402, %v50
    %v410 = vmul.f32 %v407, %v51
    %v411 = vsel %vm91, %v409, 0.0
    %v412 = vrot.slane %v411, 4
    %v413 = vadd.f32 %v411, %v412
    %v414 = vrot.slane %v413, 2
    %v415 = vadd.f32 %v413, %v414
    %v416 = vrot.slane %v415, 1
    %v417 = vadd.f32 %v415, %v416
    %v418 = vsel %vm91, %v410, 0.0
    %v419 = vrot.slane %v418, 4
    %v420 = vadd.f32 %v418, %v419
    %v421 = vrot.slane %v420, 2
    %v422 = vadd.f32 %v420, %v421
    %v423 = vrot.slane %v422, 1
    %v424 = vadd.f32 %v422, %v423
    %v425 = vld [vmem:[#allocation6 + $0x40] sm:$0xff]
    %v426 = vld [vmem:[#allocation6 + $0x50] sm:$0xff]
    %v427 = vld [vmem:[#allocation6 + $0x60] sm:$0xff]
    %v428 = vld [vmem:[#allocation6 + $0x70] sm:$0xff]
    %v429 = vld [vmem:[%s3 + $0x1] sm:$0x1]
    %v430 = vlaneseq
    %v431 = vshrl.u32 %v430, 7
    %v432 = vsub.s32 0, %v431
    %v433 = vrot.slane %v429, %v432
    %v436 = vsel %vm339, %v424, %v417
    %v437 = vsel %vm91, %v436, 0
    %439 = vmatprep.subr.mxu0 0.0
    %440 = vmatpush1.msra.mxu0 %v425
    %441 = vmatprep.subr.mxu0 0.0
    %442 = vmatpush1.msra.mxu0 %v426
    %443 = vmatprep.subr.mxu0 0.0
    %444 = vmatpush1.msra.mxu0 %v427
    %445 = vmatprep.subr.mxu0 0.0
    %446 = vmatpush1.msra.mxu0 %v428
    %447 = vmatprep.subr.mxu0 0.0
    %448 = vmatpush1.msra.mxu0 0.0
    %449 = vmatprep.subr.mxu0 0.0
    %450 = vmatpush1.msra.mxu0 0.0
    %451 = vmatprep.subr.mxu0 0.0
    %452 = vmatpush1.msra.mxu0 0.0
    %453 = vmatprep.subr.mxu0 0.0
    %454 = vmatpush1.msra.mxu0 0.0
    %455 = vmatprep.subr.mxu0 0.0
    %456 = vmatpush1.msra.mxu0 0.0
    %457 = vmatprep.subr.mxu0 0.0
    %458 = vmatpush1.msra.mxu0 0.0
    %459 = vmatprep.subr.mxu0 0.0
    %460 = vmatpush1.msra.mxu0 0.0
    %461 = vmatprep.subr.mxu0 0.0
    %462 = vmatpush1.msra.mxu0 0.0
    %463 = vmatprep.subr.mxu0 0.0
    %464 = vmatpush1.msra.mxu0 0.0
    %465 = vmatprep.subr.mxu0 0.0
    %466 = vmatpush1.msra.mxu0 0.0
    %467 = vmatprep.subr.mxu0 0.0
    %468 = vmatpush1.msra.mxu0 0.0
    %469 = vmatprep.subr.mxu0 0.0
    %470 = vmatpush1.msra.mxu0 0.0
    %471 = vmatprep.subr.mxu0 0.0
    %472 = vmatpush1.msra.mxu0 0.0
    %473 = vmatprep.subr.mxu0 0.0
    %474 = vmatpush1.msra.mxu0 0.0
    %475 = vmatprep.subr.mxu0 0.0
    %476 = vmatpush1.msra.mxu0 0.0
    %477 = vmatprep.subr.mxu0 0.0
    %478 = vmatpush1.msra.mxu0 0.0
    %479 = vmatprep.subr.mxu0 0.0
    %480 = vmatpush1.msra.mxu0 0.0
    %481 = vmatprep.subr.mxu0 0.0
    %482 = vmatpush1.msra.mxu0 0.0
    %483 = vmatprep.subr.mxu0 0.0
    %484 = vmatpush1.msra.mxu0 0.0
    %485 = vmatprep.subr.mxu0 0.0
    %486 = vmatpush1.msra.mxu0 0.0
    %487 = vmatprep.subr.mxu0 0.0
    %488 = vmatpush1.msra.mxu0 0.0
    %489 = vmatprep.subr.mxu0 0.0
    %490 = vmatpush1.msra.mxu0 0.0
    %491 = vmatprep.subr.mxu0 0.0
    %492 = vmatpush1.msra.mxu0 0.0
    %493 = vmatprep.subr.mxu0 0.0
    %494 = vmatpush1.msra.mxu0 0.0
    %495 = vmatprep.subr.mxu0 0.0
    %496 = vmatpush1.msra.mxu0 0.0
    %497 = vmatprep.subr.mxu0 0.0
    %498 = vmatpush1.msra.mxu0 0.0
    %499 = vmatprep.subr.mxu0 0.0
    %500 = vmatpush1.msra.mxu0 0.0
    %501 = vmatprep.subr.mxu0 0.0
    %502 = vmatpush1.msra.mxu0 0.0
    %503 = vmatprep.mubr.f32.mxu0 0.0
    %504 = vmatmul.mubr.f32.gmra.mrb[0].mxu0 %v437
    %v505 = vpop.f32.mrb[0].mxu0
    %v506 = vadd.f32 %v433, %v505
    %v507 = vpop.f32.mrb[0].mxu0
    %508 = vdwg.mxu0
    %v509 = vadd.f32 %v506, %v255
    %v510 = vxor.u32 %v509, 2147483648
    %v511 = vmul.f32 %v510, 1.442695
    %v512 = vpow.pop %v511
    %v513 = vadd.f32 %v512, 1.0
    %v514 = vrcp.pop %v513
    %v515 = vmul.f32 1.0, %v514
    %516 = vrot.lane.b32.xlu0 %v255, 64
    %v517 = vpop.permute.xlu0 %516
    %v519 = vmul.f32 %v515, %v517
    %521 = vrot.lane.b32.xlu0 %v519, 64
    %v522 = vpop.permute.xlu0 %521
    %v524 = vadd.f32 %v506, %v522
    %v525 = vtanh.pop %v524
    %v526 = vsub.f32 1.0, %v515
    %528 = vrot.lane.b32.xlu0 %v525, 96
    %v529 = vpop.permute.xlu0 %528
    %v531 = vmul.f32 %v526, %v529
    %532 = vrot.lane.b32.xlu0 %v173, 32
    %v533 = vpop.permute.xlu0 %532
    %v535 = vmul.f32 %v515, %v533
    %v536 = vadd.f32 %v531, %v535
    %v539 = vunpack.c.l.s4 1966171168
    %v540 = vunpack.c.0.s8 %v539
    %v541 = vlaneseq
    %v542 = vshrl.u32 %v541, 7
    %v543 = vsub.s32 %v540, %v542
    %v544 = vrot.slane %v536, %v543
    %v545 = vcombine.high %v544, %v544
    %v547 = vunpack.c.l.s4 1966171168
    %v548 = vunpack.c.0.s8 %v547
    %v549 = vlaneseq
    %v550 = vshrl.u32 %v549, 7
    %v551 = vsub.s32 %v548, %v550
    %v552 = vrot.slane %v544, %v551
    %v554 = vunpack.c.l.s4 1966171168
    %v555 = vunpack.c.0.s8 %v554
    %v556 = vlaneseq
    %v557 = vshrl.u32 %v556, 7
    %v558 = vsub.s32 %v555, %v557
    %v559 = vrot.slane %v545, %v558
    %v560 = vlaneseq
    %v561 = vshrl.u32 %v560, 7
    %v562 = vsub.s32 0, %v561
    %v563 = vrot.slane %v552, %v562
    %v564 = vlaneseq
    %v565 = vshrl.u32 %v564, 7
    %v566 = vsub.s32 0, %v565
    %v567 = vrot.slane %v559, %v566
    %568 = vrot.lane.b32.xlu0 %v563, 96
    %v569 = vpop.permute.xlu0 %568
    %570 = vrot.lane.b32.xlu0 %v567, 96
    %v571 = vpop.permute.xlu0 %570
    %vm574 = vcmask 253952
    %575 = vst.msk [vmem:[#allocation2] sm:$0x1] %vm574, %v569
    %576 = vst.msk [vmem:[#allocation2 + $0x8] sm:$0x1] %vm574, %v571
    %v577 = vlaneseq
    %v578 = vshrl.u32 %v577, 7
    %v579 = vsub.s32 %v330, %v578
    %v580 = vrot.slane %v402, %v579
    %v581 = vlaneseq
    %v582 = vshrl.u32 %v581, 7
    %v583 = vsub.s32 %v330, %v582
    %v584 = vrot.slane %v407, %v583
    %v585 = vsel %vm339, %v584, %v580
    %vm587 = vcmask 64512
    %v588 = vsel %vm587, %v585, 0.0
    %v591 = vunpack.c.l.s4 1966171168
    %v592 = vunpack.c.0.s8 %v591
    %v593 = vlaneseq
    %v594 = vshrl.u32 %v593, 7
    %v595 = vsub.s32 %v592, %v594
    %v596 = vrot.slane %v588, %v595
    %v597 = vcombine.high %v596, %v596
    %v599 = vunpack.c.l.s4 1966171168
    %v600 = vunpack.c.0.s8 %v599
    %v601 = vlaneseq
    %v602 = vshrl.u32 %v601, 7
    %v603 = vsub.s32 %v600, %v602
    %v604 = vrot.slane %v596, %v603
    %v606 = vunpack.c.l.s4 1966171168
    %v607 = vunpack.c.0.s8 %v606
    %v608 = vlaneseq
    %v609 = vshrl.u32 %v608, 7
    %v610 = vsub.s32 %v607, %v609
    %v611 = vrot.slane %v597, %v610
    %614 = vst [vmem:[%s6] sm:$0x1] %v604
    %615 = vst [vmem:[%s6 + $0x8] sm:$0x1] %v611
    %616 = vrot.lane.b32.xlu0 %v536, 96
    %v617 = vpop.permute.xlu0 %616
    %v618 = vsel %vm91, %v617, 0
    %620 = vmatprep.subr.mxu0 %v53
    %621 = vmatpush1.msra.mxu0 %v52
    %622 = vmatprep.subr.mxu0 %v55
    %623 = vmatpush1.msra.mxu0 %v54
    %624 = vmatprep.subr.mxu0 %v57
    %625 = vmatpush1.msra.mxu0 %v56
    %626 = vmatprep.subr.mxu0 %v59
    %627 = vmatpush1.msra.mxu0 %v58
    %628 = vmatprep.subr.mxu0 0.0
    %629 = vmatpush1.msra.mxu0 0.0
    %630 = vmatprep.subr.mxu0 0.0
    %631 = vmatpush1.msra.mxu0 0.0
    %632 = vmatprep.subr.mxu0 0.0
    %633 = vmatpush1.msra.mxu0 0.0
    %634 = vmatprep.subr.mxu0 0.0
    %635 = vmatpush1.msra.mxu0 0.0
    %636 = vmatprep.subr.mxu0 0.0
    %637 = vmatpush1.msra.mxu0 0.0
    %638 = vmatprep.subr.mxu0 0.0
    %639 = vmatpush1.msra.mxu0 0.0
    %640 = vmatprep.subr.mxu0 0.0
    %641 = vmatpush1.msra.mxu0 0.0
    %642 = vmatprep.subr.mxu0 0.0
    %643 = vmatpush1.msra.mxu0 0.0
    %644 = vmatprep.subr.mxu0 0.0
    %645 = vmatpush1.msra.mxu0 0.0
    %646 = vmatprep.subr.mxu0 0.0
    %647 = vmatpush1.msra.mxu0 0.0
    %648 = vmatprep.subr.mxu0 0.0
    %649 = vmatpush1.msra.mxu0 0.0
    %650 = vmatprep.subr.mxu0 0.0
    %651 = vmatpush1.msra.mxu0 0.0
    %652 = vmatprep.subr.mxu0 0.0
    %653 = vmatpush1.msra.mxu0 0.0
    %654 = vmatprep.subr.mxu0 0.0
    %655 = vmatpush1.msra.mxu0 0.0
    %656 = vmatprep.subr.mxu0 0.0
    %657 = vmatpush1.msra.mxu0 0.0
    %658 = vmatprep.subr.mxu0 0.0
    %659 = vmatpush1.msra.mxu0 0.0
    %660 = vmatprep.subr.mxu0 0.0
    %661 = vmatpush1.msra.mxu0 0.0
    %662 = vmatprep.subr.mxu0 0.0
    %663 = vmatpush1.msra.mxu0 0.0
    %664 = vmatprep.subr.mxu0 0.0
    %665 = vmatpush1.msra.mxu0 0.0
    %666 = vmatprep.subr.mxu0 0.0
    %667 = vmatpush1.msra.mxu0 0.0
    %668 = vmatprep.subr.mxu0 0.0
    %669 = vmatpush1.msra.mxu0 0.0
    %670 = vmatprep.subr.mxu0 0.0
    %671 = vmatpush1.msra.mxu0 0.0
    %672 = vmatprep.subr.mxu0 0.0
    %673 = vmatpush1.msra.mxu0 0.0
    %674 = vmatprep.subr.mxu0 0.0
    %675 = vmatpush1.msra.mxu0 0.0
    %676 = vmatprep.subr.mxu0 0.0
    %677 = vmatpush1.msra.mxu0 0.0
    %678 = vmatprep.subr.mxu0 0.0
    %679 = vmatpush1.msra.mxu0 0.0
    %680 = vmatprep.subr.mxu0 0.0
    %681 = vmatpush1.msra.mxu0 0.0
    %682 = vmatprep.subr.mxu0 0.0
    %683 = vmatpush1.msra.mxu0 0.0
    %684 = vmatprep.mubr.f32.mxu0 0.0
    %685 = vmatmul.mubr.f32.gmra.mrb[0].mxu0 %v618
    %v686 = vpop.f32.mrb[0].mxu0
    %v687 = vadd.f32 %v178, %v686
    %v688 = vpop.f32.mrb[0].mxu0
    %v689 = vadd.f32 %v182, %v688
    %690 = vdwg.mxu0
    %v693 = vunpack.c.l.s4 1966171168
    %v694 = vunpack.c.0.s8 %v693
    %v695 = vlaneseq
    %v696 = vshrl.u32 %v695, 7
    %v697 = vsub.s32 %v694, %v696
    %v698 = vrot.slane %v687, %v697
    %v699 = vcombine.high %v698, %v698
    %v701 = vunpack.c.l.s4 1966171168
    %v702 = vunpack.c.0.s8 %v701
    %v703 = vlaneseq
    %v704 = vshrl.u32 %v703, 7
    %v705 = vsub.s32 %v702, %v704
    %v706 = vrot.slane %v698, %v705
    %v708 = vunpack.c.l.s4 1966171168
    %v709 = vunpack.c.0.s8 %v708
    %v710 = vlaneseq
    %v711 = vshrl.u32 %v710, 7
    %v712 = vsub.s32 %v709, %v711
    %v713 = vrot.slane %v699, %v712
    %v714 = vlaneseq
    %v715 = vshrl.u32 %v714, 7
    %v716 = vsub.s32 0, %v715
    %v717 = vrot.slane %v706, %v716
    %v718 = vlaneseq
    %v719 = vshrl.u32 %v718, 7
    %v720 = vsub.s32 0, %v719
    %v721 = vrot.slane %v713, %v720
    %v724 = vadd.f32 %v717, %v294
    %v725 = vadd.f32 %v721, %v296
    %v726 = vtanh.pop %v724
    %v727 = vtanh.pop %v725
    %v728 = vmul.f32 %v726, %v309
    %v729 = vmul.f32 %v727, %v309
    %732 = vrot.lane.b32.xlu0 %v728, 32
    %v733 = vpop.permute.xlu0 %732
    %734 = vrot.lane.b32.xlu0 %v729, 32
    %v735 = vpop.permute.xlu0 %734
    %v738 = vsel %vm91, %v733, 0.0
    %739 = vadd.xlane.f32.xlu0 %v738
    %v740 = vpop.xlane.xlu0 %739
    %v741 = vsel %vm91, %v735, 0.0
    %742 = vadd.xlane.f32.xlu0 %v741
    %v743 = vpop.xlane.xlu0 %742
    %v746 = vlaneseq
    %v747 = vshrl.u32 %v746, 7
    %v748 = vsub.s32 %v330, %v747
    %v749 = vrot.slane %v740, %v748
    %v750 = vlaneseq
    %v751 = vshrl.u32 %v750, 7
    %v752 = vsub.s32 %v330, %v751
    %v753 = vrot.slane %v743, %v752
    %v754 = vsel %vm339, %v753, %v749
    %v756 = vsel %vm342, %v754, -inf
    %757 = vmax.xlane.f32.xlu0 %v756
    %v758 = vpop.xlane.xlu0 %757
    %v760 = vlaneseq
    %v761 = vshrl.u32 %v760, 7
    %v762 = vsub.s32 0, %v761
    %v763 = vrot.slane %v758, %v762
    %v764 = vlaneseq
    %v765 = vshrl.u32 %v764, 7
    %v766 = vsub.s32 1, %v765
    %v767 = vrot.slane %v758, %v766
    %v770 = vsub.f32 %v740, %v763
    %v771 = vsub.f32 %v743, %v767
    %v772 = vmul.f32 %v770, 1.442695
    %v773 = vpow.pop %v772
    %v774 = vmul.f32 %v771, 1.442695
    %v775 = vpow.pop %v774
    %778 = vset.pattern.permute.xlu0 0
    %779 = vperm.xlu0 %778, %v773
    %v780 = vpop.permute.xlu0 %779
    %781 = vset.pattern.permute.xlu0 0
    %782 = vperm.xlu0 %781, %v775
    %v783 = vpop.permute.xlu0 %782
    %v784 = vlaneseq
    %v785 = vshrl.u32 %v784, 7
    %v786 = vsub.s32 %v330, %v785
    %v787 = vrot.slane %v780, %v786
    %v788 = vlaneseq
    %v789 = vshrl.u32 %v788, 7
    %v790 = vsub.s32 %v330, %v789
    %v791 = vrot.slane %v783, %v790
    %v792 = vsel %vm339, %v791, %v787
    %v794 = vsel %vm342, %v792, 0.0
    %795 = vadd.xlane.f32.xlu0 %v794
    %v796 = vpop.xlane.xlu0 %795
    %v798 = vlaneseq
    %v799 = vshrl.u32 %v798, 7
    %v800 = vsub.s32 0, %v799
    %v801 = vrot.slane %v796, %v800
    %v802 = vlaneseq
    %v803 = vshrl.u32 %v802, 7
    %v804 = vsub.s32 1, %v803
    %v805 = vrot.slane %v796, %v804
    %v808 = vrcp.pop %v801
    %v809 = vmul.f32 %v773, %v808
    %v810 = vrcp.pop %v805
    %v811 = vmul.f32 %v775, %v810
    %813 = vset.pattern.permute.xlu0 0
    %814 = vperm.xlu0 %813, %v809
    %v815 = vpop.permute.xlu0 %814
    %818 = vset.pattern.permute.xlu0 0
    %819 = vperm.xlu0 %818, %v811
    %v820 = vpop.permute.xlu0 %819
    %v822 = vmul.f32 %v815, %v50
    %v823 = vmul.f32 %v820, %v51
    %v824 = vsel %vm91, %v822, 0.0
    %v825 = vrot.slane %v824, 4
    %v826 = vadd.f32 %v824, %v825
    %v827 = vrot.slane %v826, 2
    %v828 = vadd.f32 %v826, %v827
    %v829 = vrot.slane %v828, 1
    %v830 = vadd.f32 %v828, %v829
    %v831 = vsel %vm91, %v823, 0.0
    %v832 = vrot.slane %v831, 4
    %v833 = vadd.f32 %v831, %v832
    %v834 = vrot.slane %v833, 2
    %v835 = vadd.f32 %v833, %v834
    %v836 = vrot.slane %v835, 1
    %v837 = vadd.f32 %v835, %v836
    %v838 = vld [vmem:[#allocation6 + $0x40] sm:$0xff]
    %v839 = vld [vmem:[#allocation6 + $0x50] sm:$0xff]
    %v840 = vld [vmem:[#allocation6 + $0x60] sm:$0xff]
    %v841 = vld [vmem:[#allocation6 + $0x70] sm:$0xff]
    %v842 = vld [vmem:[%s3 + $0x1] sm:$0x1]
    %v843 = vlaneseq
    %v844 = vshrl.u32 %v843, 7
    %v845 = vsub.s32 0, %v844
    %v846 = vrot.slane %v842, %v845
    %v849 = vsel %vm339, %v837, %v830
    %v850 = vsel %vm91, %v849, 0
    %852 = vmatprep.subr.mxu0 0.0
    %853 = vmatpush1.msra.mxu0 %v838
    %854 = vmatprep.subr.mxu0 0.0
    %855 = vmatpush1.msra.mxu0 %v839
    %856 = vmatprep.subr.mxu0 0.0
    %857 = vmatpush1.msra.mxu0 %v840
    %858 = vmatprep.subr.mxu0 0.0
    %859 = vmatpush1.msra.mxu0 %v841
    %860 = vmatprep.subr.mxu0 0.0
    %861 = vmatpush1.msra.mxu0 0.0
    %862 = vmatprep.subr.mxu0 0.0
    %863 = vmatpush1.msra.mxu0 0.0
    %864 = vmatprep.subr.mxu0 0.0
    %865 = vmatpush1.msra.mxu0 0.0
    %866 = vmatprep.subr.mxu0 0.0
    %867 = vmatpush1.msra.mxu0 0.0
    %868 = vmatprep.subr.mxu0 0.0
    %869 = vmatpush1.msra.mxu0 0.0
    %870 = vmatprep.subr.mxu0 0.0
    %871 = vmatpush1.msra.mxu0 0.0
    %872 = vmatprep.subr.mxu0 0.0
    %873 = vmatpush1.msra.mxu0 0.0
    %874 = vmatprep.subr.mxu0 0.0
    %875 = vmatpush1.msra.mxu0 0.0
    %876 = vmatprep.subr.mxu0 0.0
    %877 = vmatpush1.msra.mxu0 0.0
    %878 = vmatprep.subr.mxu0 0.0
    %879 = vmatpush1.msra.mxu0 0.0
    %880 = vmatprep.subr.mxu0 0.0
    %881 = vmatpush1.msra.mxu0 0.0
    %882 = vmatprep.subr.mxu0 0.0
    %883 = vmatpush1.msra.mxu0 0.0
    %884 = vmatprep.subr.mxu0 0.0
    %885 = vmatpush1.msra.mxu0 0.0
    %886 = vmatprep.subr.mxu0 0.0
    %887 = vmatpush1.msra.mxu0 0.0
    %888 = vmatprep.subr.mxu0 0.0
    %889 = vmatpush1.msra.mxu0 0.0
    %890 = vmatprep.subr.mxu0 0.0
    %891 = vmatpush1.msra.mxu0 0.0
    %892 = vmatprep.subr.mxu0 0.0
    %893 = vmatpush1.msra.mxu0 0.0
    %894 = vmatprep.subr.mxu0 0.0
    %895 = vmatpush1.msra.mxu0 0.0
    %896 = vmatprep.subr.mxu0 0.0
    %897 = vmatpush1.msra.mxu0 0.0
    %898 = vmatprep.subr.mxu0 0.0
    %899 = vmatpush1.msra.mxu0 0.0
    %900 = vmatprep.subr.mxu0 0.0
    %901 = vmatpush1.msra.mxu0 0.0
    %902 = vmatprep.subr.mxu0 0.0
    %903 = vmatpush1.msra.mxu0 0.0
    %904 = vmatprep.subr.mxu0 0.0
    %905 = vmatpush1.msra.mxu0 0.0
    %906 = vmatprep.subr.mxu0 0.0
    %907 = vmatpush1.msra.mxu0 0.0
    %908 = vmatprep.subr.mxu0 0.0
    %909 = vmatpush1.msra.mxu0 0.0
    %910 = vmatprep.subr.mxu0 0.0
    %911 = vmatpush1.msra.mxu0 0.0
    %912 = vmatprep.subr.mxu0 0.0
    %913 = vmatpush1.msra.mxu0 0.0
    %914 = vmatprep.subr.mxu0 0.0
    %915 = vmatpush1.msra.mxu0 0.0
    %916 = vmatprep.mubr.f32.mxu0 0.0
    %917 = vmatmul.mubr.f32.gmra.mrb[0].mxu0 %v850
    %v918 = vpop.f32.mrb[0].mxu0
    %v919 = vadd.f32 %v846, %v918
    %v920 = vpop.f32.mrb[0].mxu0
    %921 = vdwg.mxu0
    %v922 = vadd.f32 %v919, %v689
    %v923 = vadd.f32 %v922, %v687
    %v924 = vxor.u32 %v923, 2147483648
    %v925 = vmul.f32 %v924, 1.442695
    %v926 = vpow.pop %v925
    %v927 = vadd.f32 %v926, 1.0
    %v928 = vrcp.pop %v927
    %v929 = vmul.f32 1.0, %v928
    %930 = vrot.lane.b32.xlu0 %v687, 64
    %v931 = vpop.permute.xlu0 %930
    %v933 = vmul.f32 %v929, %v931
    %935 = vrot.lane.b32.xlu0 %v933, 64
    %v936 = vpop.permute.xlu0 %935
    %v938 = vadd.f32 %v922, %v936
    %v939 = vtanh.pop %v938
    %v940 = vsub.f32 1.0, %v929
    %942 = vrot.lane.b32.xlu0 %v939, 96
    %v943 = vpop.permute.xlu0 %942
    %v945 = vmul.f32 %v940, %v943
    %v946 = vmul.f32 %v929, %v536
    %v947 = vadd.f32 %v945, %v946
    %v950 = vunpack.c.l.s4 1966171168
    %v951 = vunpack.c.0.s8 %v950
    %v952 = vlaneseq
    %v953 = vshrl.u32 %v952, 7
    %v954 = vsub.s32 %v951, %v953
    %v955 = vrot.slane %v947, %v954
    %v956 = vcombine.high %v955, %v955
    %v958 = vunpack.c.l.s4 1966171168
    %v959 = vunpack.c.0.s8 %v958
    %v960 = vlaneseq
    %v961 = vshrl.u32 %v960, 7
    %v962 = vsub.s32 %v959, %v961
    %v963 = vrot.slane %v955, %v962
    %v965 = vunpack.c.l.s4 1966171168
    %v966 = vunpack.c.0.s8 %v965
    %v967 = vlaneseq
    %v968 = vshrl.u32 %v967, 7
    %v969 = vsub.s32 %v966, %v968
    %v970 = vrot.slane %v956, %v969
    %v971 = vlaneseq
    %v972 = vshrl.u32 %v971, 7
    %v973 = vsub.s32 0, %v972
    %v974 = vrot.slane %v963, %v973
    %v975 = vlaneseq
    %v976 = vshrl.u32 %v975, 7
    %v977 = vsub.s32 0, %v976
    %v978 = vrot.slane %v970, %v977
    %979 = vrot.lane.b32.xlu0 %v974, 96
    %v980 = vpop.permute.xlu0 %979
    %981 = vrot.lane.b32.xlu0 %v978, 96
    %v982 = vpop.permute.xlu0 %981
    %985 = vst.msk [vmem:[#allocation2 + $0x1] sm:$0x1] %vm574, %v980
    %986 = vst.msk [vmem:[#allocation2 + $0x9] sm:$0x1] %vm574, %v982
    %v987 = vlaneseq
    %v988 = vshrl.u32 %v987, 7
    %v989 = vsub.s32 %v330, %v988
    %v990 = vrot.slane %v815, %v989
    %v991 = vlaneseq
    %v992 = vshrl.u32 %v991, 7
    %v993 = vsub.s32 %v330, %v992
    %v994 = vrot.slane %v820, %v993
    %v995 = vsel %vm339, %v994, %v990
    %v997 = vsel %vm587, %v995, 0.0
    %v1000 = vunpack.c.l.s4 1966171168
    %v1001 = vunpack.c.0.s8 %v1000
    %v1002 = vlaneseq
    %v1003 = vshrl.u32 %v1002, 7
    %v1004 = vsub.s32 %v1001, %v1003
    %v1005 = vrot.slane %v997, %v1004
    %v1006 = vcombine.high %v1005, %v1005
    %v1008 = vunpack.c.l.s4 1966171168
    %v1009 = vunpack.c.0.s8 %v1008
    %v1010 = vlaneseq
    %v1011 = vshrl.u32 %v1010, 7
    %v1012 = vsub.s32 %v1009, %v1011
    %v1013 = vrot.slane %v1005, %v1012
    %v1015 = vunpack.c.l.s4 1966171168
    %v1016 = vunpack.c.0.s8 %v1015
    %v1017 = vlaneseq
    %v1018 = vshrl.u32 %v1017, 7
    %v1019 = vsub.s32 %v1016, %v1018
    %v1020 = vrot.slane %v1006, %v1019
    %1023 = vst [vmem:[%s6 + $0x1] sm:$0x1] %v1013
    %1024 = vst [vmem:[%s6 + $0x9] sm:$0x1] %v1020
    %1025 = vrot.lane.b32.xlu0 %v947, 96
    %v1026 = vpop.permute.xlu0 %1025
    %v1027 = vsel %vm91, %v1026, 0
    %1029 = vmatprep.subr.mxu0 %v53
    %1030 = vmatpush1.msra.mxu0 %v52
    %1031 = vmatprep.subr.mxu0 %v55
    %1032 = vmatpush1.msra.mxu0 %v54
    %1033 = vmatprep.subr.mxu0 %v57
    %1034 = vmatpush1.msra.mxu0 %v56
    %1035 = vmatprep.subr.mxu0 %v59
    %1036 = vmatpush1.msra.mxu0 %v58
    %1037 = vmatprep.subr.mxu0 0.0
    %1038 = vmatpush1.msra.mxu0 0.0
    %1039 = vmatprep.subr.mxu0 0.0
    %1040 = vmatpush1.msra.mxu0 0.0
    %1041 = vmatprep.subr.mxu0 0.0
    %1042 = vmatpush1.msra.mxu0 0.0
    %1043 = vmatprep.subr.mxu0 0.0
    %1044 = vmatpush1.msra.mxu0 0.0
    %1045 = vmatprep.subr.mxu0 0.0
    %1046 = vmatpush1.msra.mxu0 0.0
    %1047 = vmatprep.subr.mxu0 0.0
    %1048 = vmatpush1.msra.mxu0 0.0
    %1049 = vmatprep.subr.mxu0 0.0
    %1050 = vmatpush1.msra.mxu0 0.0
    %1051 = vmatprep.subr.mxu0 0.0
    %1052 = vmatpush1.msra.mxu0 0.0
    %1053 = vmatprep.subr.mxu0 0.0
    %1054 = vmatpush1.msra.mxu0 0.0
    %1055 = vmatprep.subr.mxu0 0.0
    %1056 = vmatpush1.msra.mxu0 0.0
    %1057 = vmatprep.subr.mxu0 0.0
    %1058 = vmatpush1.msra.mxu0 0.0
    %1059 = vmatprep.subr.mxu0 0.0
    %1060 = vmatpush1.msra.mxu0 0.0
    %1061 = vmatprep.subr.mxu0 0.0
    %1062 = vmatpush1.msra.mxu0 0.0
    %1063 = vmatprep.subr.mxu0 0.0
    %1064 = vmatpush1.msra.mxu0 0.0
    %1065 = vmatprep.subr.mxu0 0.0
    %1066 = vmatpush1.msra.mxu0 0.0
    %1067 = vmatprep.subr.mxu0 0.0
    %1068 = vmatpush1.msra.mxu0 0.0
    %1069 = vmatprep.subr.mxu0 0.0
    %1070 = vmatpush1.msra.mxu0 0.0
    %1071 = vmatprep.subr.mxu0 0.0
    %1072 = vmatpush1.msra.mxu0 0.0
    %1073 = vmatprep.subr.mxu0 0.0
    %1074 = vmatpush1.msra.mxu0 0.0
    %1075 = vmatprep.subr.mxu0 0.0
    %1076 = vmatpush1.msra.mxu0 0.0
    %1077 = vmatprep.subr.mxu0 0.0
    %1078 = vmatpush1.msra.mxu0 0.0
    %1079 = vmatprep.subr.mxu0 0.0
    %1080 = vmatpush1.msra.mxu0 0.0
    %1081 = vmatprep.subr.mxu0 0.0
    %1082 = vmatpush1.msra.mxu0 0.0
    %1083 = vmatprep.subr.mxu0 0.0
    %1084 = vmatpush1.msra.mxu0 0.0
    %1085 = vmatprep.subr.mxu0 0.0
    %1086 = vmatpush1.msra.mxu0 0.0
    %1087 = vmatprep.subr.mxu0 0.0
    %1088 = vmatpush1.msra.mxu0 0.0
    %1089 = vmatprep.subr.mxu0 0.0
    %1090 = vmatpush1.msra.mxu0 0.0
    %1091 = vmatprep.subr.mxu0 0.0
    %1092 = vmatpush1.msra.mxu0 0.0
    %1093 = vmatprep.mubr.f32.mxu0 0.0
    %1094 = vmatmul.mubr.f32.gmra.mrb[0].mxu0 %v1027
    %v1095 = vpop.f32.mrb[0].mxu0
    %v1096 = vadd.f32 %v178, %v1095
    %v1097 = vpop.f32.mrb[0].mxu0
    %v1098 = vadd.f32 %v182, %v1097
    %1099 = vdwg.mxu0
    %v1102 = vunpack.c.l.s4 1966171168
    %v1103 = vunpack.c.0.s8 %v1102
    %v1104 = vlaneseq
    %v1105 = vshrl.u32 %v1104, 7
    %v1106 = vsub.s32 %v1103, %v1105
    %v1107 = vrot.slane %v1096, %v1106
    %v1108 = vcombine.high %v1107, %v1107
    %v1110 = vunpack.c.l.s4 1966171168
    %v1111 = vunpack.c.0.s8 %v1110
    %v1112 = vlaneseq
    %v1113 = vshrl.u32 %v1112, 7
    %v1114 = vsub.s32 %v1111, %v1113
    %v1115 = vrot.slane %v1107, %v1114
    %v1117 = vunpack.c.l.s4 1966171168
    %v1118 = vunpack.c.0.s8 %v1117
    %v1119 = vlaneseq
    %v1120 = vshrl.u32 %v1119, 7
    %v1121 = vsub.s32 %v1118, %v1120
    %v1122 = vrot.slane %v1108, %v1121
    %v1123 = vlaneseq
    %v1124 = vshrl.u32 %v1123, 7
    %v1125 = vsub.s32 0, %v1124
    %v1126 = vrot.slane %v1115, %v1125
    %v1127 = vlaneseq
    %v1128 = vshrl.u32 %v1127, 7
    %v1129 = vsub.s32 0, %v1128
    %v1130 = vrot.slane %v1122, %v1129
    %v1133 = vadd.f32 %v1126, %v294
    %v1134 = vadd.f32 %v1130, %v296
    %v1135 = vtanh.pop %v1133
    %v1136 = vtanh.pop %v1134
    %v1137 = vmul.f32 %v1135, %v309
    %v1138 = vmul.f32 %v1136, %v309
    %1141 = vrot.lane.b32.xlu0 %v1137, 32
    %v1142 = vpop.permute.xlu0 %1141
    %1143 = vrot.lane.b32.xlu0 %v1138, 32
    %v1144 = vpop.permute.xlu0 %1143
    %v1147 = vsel %vm91, %v1142, 0.0
    %1148 = vadd.xlane.f32.xlu0 %v1147
    %v1149 = vpop.xlane.xlu0 %1148
    %v1150 = vsel %vm91, %v1144, 0.0
    %1151 = vadd.xlane.f32.xlu0 %v1150
    %v1152 = vpop.xlane.xlu0 %1151
    %v1155 = vlaneseq
    %v1156 = vshrl.u32 %v1155, 7
    %v1157 = vsub.s32 %v330, %v1156
    %v1158 = vrot.slane %v1149, %v1157
    %v1159 = vlaneseq
    %v1160 = vshrl.u32 %v1159, 7
    %v1161 = vsub.s32 %v330, %v1160
    %v1162 = vrot.slane %v1152, %v1161
    %v1163 = vsel %vm339, %v1162, %v1158
    %v1165 = vsel %vm342, %v1163, -inf
    %1166 = vmax.xlane.f32.xlu0 %v1165
    %v1167 = vpop.xlane.xlu0 %1166
    %v1169 = vlaneseq
    %v1170 = vshrl.u32 %v1169, 7
    %v1171 = vsub.s32 0, %v1170
    %v1172 = vrot.slane %v1167, %v1171
    %v1173 = vlaneseq
    %v1174 = vshrl.u32 %v1173, 7
    %v1175 = vsub.s32 1, %v1174
    %v1176 = vrot.slane %v1167, %v1175
    %v1179 = vsub.f32 %v1149, %v1172
    %v1180 = vsub.f32 %v1152, %v1176
    %v1181 = vmul.f32 %v1179, 1.442695
    %v1182 = vpow.pop %v1181
    %v1183 = vmul.f32 %v1180, 1.442695
    %v1184 = vpow.pop %v1183
    %1187 = vset.pattern.permute.xlu0 0
    %1188 = vperm.xlu0 %1187, %v1182
    %v1189 = vpop.permute.xlu0 %1188
    %1190 = vset.pattern.permute.xlu0 0
    %1191 = vperm.xlu0 %1190, %v1184
    %v1192 = vpop.permute.xlu0 %1191
    %v1193 = vlaneseq
    %v1194 = vshrl.u32 %v1193, 7
    %v1195 = vsub.s32 %v330, %v1194
    %v1196 = vrot.slane %v1189, %v1195
    %v1197 = vlaneseq
    %v1198 = vshrl.u32 %v1197, 7
    %v1199 = vsub.s32 %v330, %v1198
    %v1200 = vrot.slane %v1192, %v1199
    %v1201 = vsel %vm339, %v1200, %v1196
    %v1203 = vsel %vm342, %v1201, 0.0
    %1204 = vadd.xlane.f32.xlu0 %v1203
    %v1205 = vpop.xlane.xlu0 %1204
    %v1207 = vlaneseq
    %v1208 = vshrl.u32 %v1207, 7
    %v1209 = vsub.s32 0, %v1208
    %v1210 = vrot.slane %v1205, %v1209
    %v1211 = vlaneseq
    %v1212 = vshrl.u32 %v1211, 7
    %v1213 = vsub.s32 1, %v1212
    %v1214 = vrot.slane %v1205, %v1213
    %v1217 = vrcp.pop %v1210
    %v1218 = vmul.f32 %v1182, %v1217
    %v1219 = vrcp.pop %v1214
    %v1220 = vmul.f32 %v1184, %v1219
    %1222 = vset.pattern.permute.xlu0 0
    %1223 = vperm.xlu0 %1222, %v1218
    %v1224 = vpop.permute.xlu0 %1223
    %1227 = vset.pattern.permute.xlu0 0
    %1228 = vperm.xlu0 %1227, %v1220
    %v1229 = vpop.permute.xlu0 %1228
    %v1231 = vmul.f32 %v1224, %v50
    %v1232 = vmul.f32 %v1229, %v51
    %v1233 = vsel %vm91, %v1231, 0.0
    %v1234 = vrot.slane %v1233, 4
    %v1235 = vadd.f32 %v1233, %v1234
    %v1236 = vrot.slane %v1235, 2
    %v1237 = vadd.f32 %v1235, %v1236
    %v1238 = vrot.slane %v1237, 1
    %v1239 = vadd.f32 %v1237, %v1238
    %v1240 = vsel %vm91, %v1232, 0.0
    %v1241 = vrot.slane %v1240, 4
    %v1242 = vadd.f32 %v1240, %v1241
    %v1243 = vrot.slane %v1242, 2
    %v1244 = vadd.f32 %v1242, %v1243
    %v1245 = vrot.slane %v1244, 1
    %v1246 = vadd.f32 %v1244, %v1245
    %v1247 = vld [vmem:[#allocation6 + $0x40] sm:$0xff]
    %v1248 = vld [vmem:[#allocation6 + $0x50] sm:$0xff]
    %v1249 = vld [vmem:[#allocation6 + $0x60] sm:$0xff]
    %v1250 = vld [vmem:[#allocation6 + $0x70] sm:$0xff]
    %v1251 = vld [vmem:[%s3 + $0x1] sm:$0x1]
    %v1252 = vlaneseq
    %v1253 = vshrl.u32 %v1252, 7
    %v1254 = vsub.s32 0, %v1253
    %v1255 = vrot.slane %v1251, %v1254
    %v1258 = vsel %vm339, %v1246, %v1239
    %v1259 = vsel %vm91, %v1258, 0
    %1261 = vmatprep.subr.mxu0 0.0
    %1262 = vmatpush1.msra.mxu0 %v1247
    %1263 = vmatprep.subr.mxu0 0.0
    %1264 = vmatpush1.msra.mxu0 %v1248
    %1265 = vmatprep.subr.mxu0 0.0
    %1266 = vmatpush1.msra.mxu0 %v1249
    %1267 = vmatprep.subr.mxu0 0.0
    %1268 = vmatpush1.msra.mxu0 %v1250
    %1269 = vmatprep.subr.mxu0 0.0
    %1270 = vmatpush1.msra.mxu0 0.0
    %1271 = vmatprep.subr.mxu0 0.0
    %1272 = vmatpush1.msra.mxu0 0.0
    %1273 = vmatprep.subr.mxu0 0.0
    %1274 = vmatpush1.msra.mxu0 0.0
    %1275 = vmatprep.subr.mxu0 0.0
    %1276 = vmatpush1.msra.mxu0 0.0
    %1277 = vmatprep.subr.mxu0 0.0
    %1278 = vmatpush1.msra.mxu0 0.0
    %1279 = vmatprep.subr.mxu0 0.0
    %1280 = vmatpush1.msra.mxu0 0.0
    %1281 = vmatprep.subr.mxu0 0.0
    %1282 = vmatpush1.msra.mxu0 0.0
    %1283 = vmatprep.subr.mxu0 0.0
    %1284 = vmatpush1.msra.mxu0 0.0
    %1285 = vmatprep.subr.mxu0 0.0
    %1286 = vmatpush1.msra.mxu0 0.0
    %1287 = vmatprep.subr.mxu0 0.0
    %1288 = vmatpush1.msra.mxu0 0.0
    %1289 = vmatprep.subr.mxu0 0.0
    %1290 = vmatpush1.msra.mxu0 0.0
    %1291 = vmatprep.subr.mxu0 0.0
    %1292 = vmatpush1.msra.mxu0 0.0
    %1293 = vmatprep.subr.mxu0 0.0
    %1294 = vmatpush1.msra.mxu0 0.0
    %1295 = vmatprep.subr.mxu0 0.0
    %1296 = vmatpush1.msra.mxu0 0.0
    %1297 = vmatprep.subr.mxu0 0.0
    %1298 = vmatpush1.msra.mxu0 0.0
    %1299 = vmatprep.subr.mxu0 0.0
    %1300 = vmatpush1.msra.mxu0 0.0
    %1301 = vmatprep.subr.mxu0 0.0
    %1302 = vmatpush1.msra.mxu0 0.0
    %1303 = vmatprep.subr.mxu0 0.0
    %1304 = vmatpush1.msra.mxu0 0.0
    %1305 = vmatprep.subr.mxu0 0.0
    %1306 = vmatpush1.msra.mxu0 0.0
    %1307 = vmatprep.subr.mxu0 0.0
    %1308 = vmatpush1.msra.mxu0 0.0
    %1309 = vmatprep.subr.mxu0 0.0
    %1310 = vmatpush1.msra.mxu0 0.0
    %1311 = vmatprep.subr.mxu0 0.0
    %1312 = vmatpush1.msra.mxu0 0.0
    %1313 = vmatprep.subr.mxu0 0.0
    %1314 = vmatpush1.msra.mxu0 0.0
    %1315 = vmatprep.subr.mxu0 0.0
    %1316 = vmatpush1.msra.mxu0 0.0
    %1317 = vmatprep.subr.mxu0 0.0
    %1318 = vmatpush1.msra.mxu0 0.0
    %1319 = vmatprep.subr.mxu0 0.0
    %1320 = vmatpush1.msra.mxu0 0.0
    %1321 = vmatprep.subr.mxu0 0.0
    %1322 = vmatpush1.msra.mxu0 0.0
    %1323 = vmatprep.subr.mxu0 0.0
    %1324 = vmatpush1.msra.mxu0 0.0
    %1325 = vmatprep.mubr.f32.mxu0 0.0
    %1326 = vmatmul.mubr.f32.gmra.mrb[0].mxu0 %v1259
    %v1327 = vpop.f32.mrb[0].mxu0
    %v1328 = vadd.f32 %v1255, %v1327
    %v1329 = vpop.f32.mrb[0].mxu0
    %1330 = vdwg.mxu0
    %v1331 = vadd.f32 %v1328, %v1098
    %v1332 = vadd.f32 %v1331, %v1096
    %v1333 = vxor.u32 %v1332, 2147483648
    %v1334 = vmul.f32 %v1333, 1.442695
    %v1335 = vpow.pop %v1334
    %v1336 = vadd.f32 %v1335, 1.0
    %v1337 = vrcp.pop %v1336
    %v1338 = vmul.f32 1.0, %v1337
    %1339 = vrot.lane.b32.xlu0 %v1096, 64
    %v1340 = vpop.permute.xlu0 %1339
    %v1342 = vmul.f32 %v1338, %v1340
    %1344 = vrot.lane.b32.xlu0 %v1342, 64
    %v1345 = vpop.permute.xlu0 %1344
    %v1347 = vadd.f32 %v1331, %v1345
    %v1348 = vtanh.pop %v1347
    %v1349 = vsub.f32 1.0, %v1338
    %1351 = vrot.lane.b32.xlu0 %v1348, 96
    %v1352 = vpop.permute.xlu0 %1351
    %v1354 = vmul.f32 %v1349, %v1352
    %v1355 = vmul.f32 %v1338, %v947
    %v1356 = vadd.f32 %v1354, %v1355
    %v1359 = vunpack.c.l.s4 1966171168
    %v1360 = vunpack.c.0.s8 %v1359
    %v1361 = vlaneseq
    %v1362 = vshrl.u32 %v1361, 7
    %v1363 = vsub.s32 %v1360, %v1362
    %v1364 = vrot.slane %v1356, %v1363
    %v1365 = vcombine.high %v1364, %v1364
    %v1367 = vunpack.c.l.s4 1966171168
    %v1368 = vunpack.c.0.s8 %v1367
    %v1369 = vlaneseq
    %v1370 = vshrl.u32 %v1369, 7
    %v1371 = vsub.s32 %v1368, %v1370
    %v1372 = vrot.slane %v1364, %v1371
    %v1374 = vunpack.c.l.s4 1966171168
    %v1375 = vunpack.c.0.s8 %v1374
    %v1376 = vlaneseq
    %v1377 = vshrl.u32 %v1376, 7
    %v1378 = vsub.s32 %v1375, %v1377
    %v1379 = vrot.slane %v1365, %v1378
    %v1380 = vlaneseq
    %v1381 = vshrl.u32 %v1380, 7
    %v1382 = vsub.s32 0, %v1381
    %v1383 = vrot.slane %v1372, %v1382
    %v1384 = vlaneseq
    %v1385 = vshrl.u32 %v1384, 7
    %v1386 = vsub.s32 0, %v1385
    %v1387 = vrot.slane %v1379, %v1386
    %1388 = vrot.lane.b32.xlu0 %v1383, 96
    %v1389 = vpop.permute.xlu0 %1388
    %1390 = vrot.lane.b32.xlu0 %v1387, 96
    %v1391 = vpop.permute.xlu0 %1390
    %1394 = vst.msk [vmem:[#allocation2 + $0x2] sm:$0x1] %vm574, %v1389
    %1395 = vst.msk [vmem:[#allocation2 + $0xa] sm:$0x1] %vm574, %v1391
    %v1396 = vlaneseq
    %v1397 = vshrl.u32 %v1396, 7
    %v1398 = vsub.s32 %v330, %v1397
    %v1399 = vrot.slane %v1224, %v1398
    %v1400 = vlaneseq
    %v1401 = vshrl.u32 %v1400, 7
    %v1402 = vsub.s32 %v330, %v1401
    %v1403 = vrot.slane %v1229, %v1402
    %v1404 = vsel %vm339, %v1403, %v1399
    %v1406 = vsel %vm587, %v1404, 0.0
    %v1409 = vunpack.c.l.s4 1966171168
    %v1410 = vunpack.c.0.s8 %v1409
    %v1411 = vlaneseq
    %v1412 = vshrl.u32 %v1411, 7
    %v1413 = vsub.s32 %v1410, %v1412
    %v1414 = vrot.slane %v1406, %v1413
    %v1415 = vcombine.high %v1414, %v1414
    %v1417 = vunpack.c.l.s4 1966171168
    %v1418 = vunpack.c.0.s8 %v1417
    %v1419 = vlaneseq
    %v1420 = vshrl.u32 %v1419, 7
    %v1421 = vsub.s32 %v1418, %v1420
    %v1422 = vrot.slane %v1414, %v1421
    %v1424 = vunpack.c.l.s4 1966171168
    %v1425 = vunpack.c.0.s8 %v1424
    %v1426 = vlaneseq
    %v1427 = vshrl.u32 %v1426, 7
    %v1428 = vsub.s32 %v1425, %v1427
    %v1429 = vrot.slane %v1415, %v1428
    %1432 = vst [vmem:[%s6 + $0x2] sm:$0x1] %v1422
    %1433 = vst [vmem:[%s6 + $0xa] sm:$0x1] %v1429
    %1434 = vrot.lane.b32.xlu0 %v1356, 96
    %v1435 = vpop.permute.xlu0 %1434
    %v1436 = vsel %vm91, %v1435, 0
    %1438 = vmatprep.subr.mxu0 %v53
    %1439 = vmatpush1.msra.mxu0 %v52
    %1440 = vmatprep.subr.mxu0 %v55
    %1441 = vmatpush1.msra.mxu0 %v54
    %1442 = vmatprep.subr.mxu0 %v57
    %1443 = vmatpush1.msra.mxu0 %v56
    %1444 = vmatprep.subr.mxu0 %v59
    %1445 = vmatpush1.msra.mxu0 %v58
    %1446 = vmatprep.subr.mxu0 0.0
    %1447 = vmatpush1.msra.mxu0 0.0
    %1448 = vmatprep.subr.mxu0 0.0
    %1449 = vmatpush1.msra.mxu0 0.0
    %1450 = vmatprep.subr.mxu0 0.0
    %1451 = vmatpush1.msra.mxu0 0.0
    %1452 = vmatprep.subr.mxu0 0.0
    %1453 = vmatpush1.msra.mxu0 0.0
    %1454 = vmatprep.subr.mxu0 0.0
    %1455 = vmatpush1.msra.mxu0 0.0
    %1456 = vmatprep.subr.mxu0 0.0
    %1457 = vmatpush1.msra.mxu0 0.0
    %1458 = vmatprep.subr.mxu0 0.0
    %1459 = vmatpush1.msra.mxu0 0.0
    %1460 = vmatprep.subr.mxu0 0.0
    %1461 = vmatpush1.msra.mxu0 0.0
    %1462 = vmatprep.subr.mxu0 0.0
    %1463 = vmatpush1.msra.mxu0 0.0
    %1464 = vmatprep.subr.mxu0 0.0
    %1465 = vmatpush1.msra.mxu0 0.0
    %1466 = vmatprep.subr.mxu0 0.0
    %1467 = vmatpush1.msra.mxu0 0.0
    %1468 = vmatprep.subr.mxu0 0.0
    %1469 = vmatpush1.msra.mxu0 0.0
    %1470 = vmatprep.subr.mxu0 0.0
    %1471 = vmatpush1.msra.mxu0 0.0
    %1472 = vmatprep.subr.mxu0 0.0
    %1473 = vmatpush1.msra.mxu0 0.0
    %1474 = vmatprep.subr.mxu0 0.0
    %1475 = vmatpush1.msra.mxu0 0.0
    %1476 = vmatprep.subr.mxu0 0.0
    %1477 = vmatpush1.msra.mxu0 0.0
    %1478 = vmatprep.subr.mxu0 0.0
    %1479 = vmatpush1.msra.mxu0 0.0
    %1480 = vmatprep.subr.mxu0 0.0
    %1481 = vmatpush1.msra.mxu0 0.0
    %1482 = vmatprep.subr.mxu0 0.0
    %1483 = vmatpush1.msra.mxu0 0.0
    %1484 = vmatprep.subr.mxu0 0.0
    %1485 = vmatpush1.msra.mxu0 0.0
    %1486 = vmatprep.subr.mxu0 0.0
    %1487 = vmatpush1.msra.mxu0 0.0
    %1488 = vmatprep.subr.mxu0 0.0
    %1489 = vmatpush1.msra.mxu0 0.0
    %1490 = vmatprep.subr.mxu0 0.0
    %1491 = vmatpush1.msra.mxu0 0.0
    %1492 = vmatprep.subr.mxu0 0.0
    %1493 = vmatpush1.msra.mxu0 0.0
    %1494 = vmatprep.subr.mxu0 0.0
    %1495 = vmatpush1.msra.mxu0 0.0
    %1496 = vmatprep.subr.mxu0 0.0
    %1497 = vmatpush1.msra.mxu0 0.0
    %1498 = vmatprep.subr.mxu0 0.0
    %1499 = vmatpush1.msra.mxu0 0.0
    %1500 = vmatprep.subr.mxu0 0.0
    %1501 = vmatpush1.msra.mxu0 0.0
    %1502 = vmatprep.mubr.f32.mxu0 0.0
    %1503 = vmatmul.mubr.f32.gmra.mrb[0].mxu0 %v1436
    %v1504 = vpop.f32.mrb[0].mxu0
    %v1505 = vadd.f32 %v178, %v1504
    %v1506 = vpop.f32.mrb[0].mxu0
    %v1507 = vadd.f32 %v182, %v1506
    %1508 = vdwg.mxu0
    %v1511 = vunpack.c.l.s4 1966171168
    %v1512 = vunpack.c.0.s8 %v1511
    %v1513 = vlaneseq
    %v1514 = vshrl.u32 %v1513, 7
    %v1515 = vsub.s32 %v1512, %v1514
    %v1516 = vrot.slane %v1505, %v1515
    %v1517 = vcombine.high %v1516, %v1516
    %v1519 = vunpack.c.l.s4 1966171168
    %v1520 = vunpack.c.0.s8 %v1519
    %v1521 = vlaneseq
    %v1522 = vshrl.u32 %v1521, 7
    %v1523 = vsub.s32 %v1520, %v1522
    %v1524 = vrot.slane %v1516, %v1523
    %v1526 = vunpack.c.l.s4 1966171168
    %v1527 = vunpack.c.0.s8 %v1526
    %v1528 = vlaneseq
    %v1529 = vshrl.u32 %v1528, 7
    %v1530 = vsub.s32 %v1527, %v1529
    %v1531 = vrot.slane %v1517, %v1530
    %v1532 = vlaneseq
    %v1533 = vshrl.u32 %v1532, 7
    %v1534 = vsub.s32 0, %v1533
    %v1535 = vrot.slane %v1524, %v1534
    %v1536 = vlaneseq
    %v1537 = vshrl.u32 %v1536, 7
    %v1538 = vsub.s32 0, %v1537
    %v1539 = vrot.slane %v1531, %v1538
    %v1542 = vadd.f32 %v1535, %v294
    %v1543 = vadd.f32 %v1539, %v296
    %v1544 = vtanh.pop %v1542
    %v1545 = vtanh.pop %v1543
    %v1546 = vmul.f32 %v1544, %v309
    %v1547 = vmul.f32 %v1545, %v309
    %1550 = vrot.lane.b32.xlu0 %v1546, 32
    %v1551 = vpop.permute.xlu0 %1550
    %1552 = vrot.lane.b32.xlu0 %v1547, 32
    %v1553 = vpop.permute.xlu0 %1552
    %v1556 = vsel %vm91, %v1551, 0.0
    %1557 = vadd.xlane.f32.xlu0 %v1556
    %v1558 = vpop.xlane.xlu0 %1557
    %v1559 = vsel %vm91, %v1553, 0.0
    %1560 = vadd.xlane.f32.xlu0 %v1559
    %v1561 = vpop.xlane.xlu0 %1560
    %v1564 = vlaneseq
    %v1565 = vshrl.u32 %v1564, 7
    %v1566 = vsub.s32 %v330, %v1565
    %v1567 = vrot.slane %v1558, %v1566
    %v1568 = vlaneseq
    %v1569 = vshrl.u32 %v1568, 7
    %v1570 = vsub.s32 %v330, %v1569
    %v1571 = vrot.slane %v1561, %v1570
    %v1572 = vsel %vm339, %v1571, %v1567
    %v1574 = vsel %vm342, %v1572, -inf
    %1575 = vmax.xlane.f32.xlu0 %v1574
    %v1576 = vpop.xlane.xlu0 %1575
    %v1578 = vlaneseq
    %v1579 = vshrl.u32 %v1578, 7
    %v1580 = vsub.s32 0, %v1579
    %v1581 = vrot.slane %v1576, %v1580
    %v1582 = vlaneseq
    %v1583 = vshrl.u32 %v1582, 7
    %v1584 = vsub.s32 1, %v1583
    %v1585 = vrot.slane %v1576, %v1584
    %v1588 = vsub.f32 %v1558, %v1581
    %v1589 = vsub.f32 %v1561, %v1585
    %v1590 = vmul.f32 %v1588, 1.442695
    %v1591 = vpow.pop %v1590
    %v1592 = vmul.f32 %v1589, 1.442695
    %v1593 = vpow.pop %v1592
    %1596 = vset.pattern.permute.xlu0 0
    %1597 = vperm.xlu0 %1596, %v1591
    %v1598 = vpop.permute.xlu0 %1597
    %1599 = vset.pattern.permute.xlu0 0
    %1600 = vperm.xlu0 %1599, %v1593
    %v1601 = vpop.permute.xlu0 %1600
    %v1602 = vlaneseq
    %v1603 = vshrl.u32 %v1602, 7
    %v1604 = vsub.s32 %v330, %v1603
    %v1605 = vrot.slane %v1598, %v1604
    %v1606 = vlaneseq
    %v1607 = vshrl.u32 %v1606, 7
    %v1608 = vsub.s32 %v330, %v1607
    %v1609 = vrot.slane %v1601, %v1608
    %v1610 = vsel %vm339, %v1609, %v1605
    %v1612 = vsel %vm342, %v1610, 0.0
    %1613 = vadd.xlane.f32.xlu0 %v1612
    %v1614 = vpop.xlane.xlu0 %1613
    %v1616 = vlaneseq
    %v1617 = vshrl.u32 %v1616, 7
    %v1618 = vsub.s32 0, %v1617
    %v1619 = vrot.slane %v1614, %v1618
    %v1620 = vlaneseq
    %v1621 = vshrl.u32 %v1620, 7
    %v1622 = vsub.s32 1, %v1621
    %v1623 = vrot.slane %v1614, %v1622
    %v1626 = vrcp.pop %v1619
    %v1627 = vmul.f32 %v1591, %v1626
    %v1628 = vrcp.pop %v1623
    %v1629 = vmul.f32 %v1593, %v1628
    %1631 = vset.pattern.permute.xlu0 0
    %1632 = vperm.xlu0 %1631, %v1627
    %v1633 = vpop.permute.xlu0 %1632
    %1636 = vset.pattern.permute.xlu0 0
    %1637 = vperm.xlu0 %1636, %v1629
    %v1638 = vpop.permute.xlu0 %1637
    %v1640 = vmul.f32 %v1633, %v50
    %v1641 = vmul.f32 %v1638, %v51
    %v1642 = vsel %vm91, %v1640, 0.0
    %v1643 = vrot.slane %v1642, 4
    %v1644 = vadd.f32 %v1642, %v1643
    %v1645 = vrot.slane %v1644, 2
    %v1646 = vadd.f32 %v1644, %v1645
    %v1647 = vrot.slane %v1646, 1
    %v1648 = vadd.f32 %v1646, %v1647
    %v1649 = vsel %vm91, %v1641, 0.0
    %v1650 = vrot.slane %v1649, 4
    %v1651 = vadd.f32 %v1649, %v1650
    %v1652 = vrot.slane %v1651, 2
    %v1653 = vadd.f32 %v1651, %v1652
    %v1654 = vrot.slane %v1653, 1
    %v1655 = vadd.f32 %v1653, %v1654
    %v1656 = vld [vmem:[#allocation6 + $0x40] sm:$0xff]
    %v1657 = vld [vmem:[#allocation6 + $0x50] sm:$0xff]
    %v1658 = vld [vmem:[#allocation6 + $0x60] sm:$0xff]
    %v1659 = vld [vmem:[#allocation6 + $0x70] sm:$0xff]
    %v1660 = vld [vmem:[%s3 + $0x1] sm:$0x1]
    %v1661 = vlaneseq
    %v1662 = vshrl.u32 %v1661, 7
    %v1663 = vsub.s32 0, %v1662
    %v1664 = vrot.slane %v1660, %v1663
    %v1667 = vsel %vm339, %v1655, %v1648
    %v1668 = vsel %vm91, %v1667, 0
    %1670 = vmatprep.subr.mxu0 0.0
    %1671 = vmatpush1.msra.mxu0 %v1656
    %1672 = vmatprep.subr.mxu0 0.0
    %1673 = vmatpush1.msra.mxu0 %v1657
    %1674 = vmatprep.subr.mxu0 0.0
    %1675 = vmatpush1.msra.mxu0 %v1658
    %1676 = vmatprep.subr.mxu0 0.0
    %1677 = vmatpush1.msra.mxu0 %v1659
    %1678 = vmatprep.subr.mxu0 0.0
    %1679 = vmatpush1.msra.mxu0 0.0
    %1680 = vmatprep.subr.mxu0 0.0
    %1681 = vmatpush1.msra.mxu0 0.0
    %1682 = vmatprep.subr.mxu0 0.0
    %1683 = vmatpush1.msra.mxu0 0.0
    %1684 = vmatprep.subr.mxu0 0.0
    %1685 = vmatpush1.msra.mxu0 0.0
    %1686 = vmatprep.subr.mxu0 0.0
    %1687 = vmatpush1.msra.mxu0 0.0
    %1688 = vmatprep.subr.mxu0 0.0
    %1689 = vmatpush1.msra.mxu0 0.0
    %1690 = vmatprep.subr.mxu0 0.0
    %1691 = vmatpush1.msra.mxu0 0.0
    %1692 = vmatprep.subr.mxu0 0.0
    %1693 = vmatpush1.msra.mxu0 0.0
    %1694 = vmatprep.subr.mxu0 0.0
    %1695 = vmatpush1.msra.mxu0 0.0
    %1696 = vmatprep.subr.mxu0 0.0
    %1697 = vmatpush1.msra.mxu0 0.0
    %1698 = vmatprep.subr.mxu0 0.0
    %1699 = vmatpush1.msra.mxu0 0.0
    %1700 = vmatprep.subr.mxu0 0.0
    %1701 = vmatpush1.msra.mxu0 0.0
    %1702 = vmatprep.subr.mxu0 0.0
    %1703 = vmatpush1.msra.mxu0 0.0
    %1704 = vmatprep.subr.mxu0 0.0
    %1705 = vmatpush1.msra.mxu0 0.0
    %1706 = vmatprep.subr.mxu0 0.0
    %1707 = vmatpush1.msra.mxu0 0.0
    %1708 = vmatprep.subr.mxu0 0.0
    %1709 = vmatpush1.msra.mxu0 0.0
    %1710 = vmatprep.subr.mxu0 0.0
    %1711 = vmatpush1.msra.mxu0 0.0
    %1712 = vmatprep.subr.mxu0 0.0
    %1713 = vmatpush1.msra.mxu0 0.0
    %1714 = vmatprep.subr.mxu0 0.0
    %1715 = vmatpush1.msra.mxu0 0.0
    %1716 = vmatprep.subr.mxu0 0.0
    %1717 = vmatpush1.msra.mxu0 0.0
    %1718 = vmatprep.subr.mxu0 0.0
    %1719 = vmatpush1.msra.mxu0 0.0
    %1720 = vmatprep.subr.mxu0 0.0
    %1721 = vmatpush1.msra.mxu0 0.0
    %1722 = vmatprep.subr.mxu0 0.0
    %1723 = vmatpush1.msra.mxu0 0.0
    %1724 = vmatprep.subr.mxu0 0.0
    %1725 = vmatpush1.msra.mxu0 0.0
    %1726 = vmatprep.subr.mxu0 0.0
    %1727 = vmatpush1.msra.mxu0 0.0
    %1728 = vmatprep.subr.mxu0 0.0
    %1729 = vmatpush1.msra.mxu0 0.0
    %1730 = vmatprep.subr.mxu0 0.0
    %1731 = vmatpush1.msra.mxu0 0.0
    %1732 = vmatprep.subr.mxu0 0.0
    %1733 = vmatpush1.msra.mxu0 0.0
    %1734 = vmatprep.mubr.f32.mxu0 0.0
    %1735 = vmatmul.mubr.f32.gmra.mrb[0].mxu0 %v1668
    %v1736 = vpop.f32.mrb[0].mxu0
    %v1737 = vadd.f32 %v1664, %v1736
    %v1738 = vpop.f32.mrb[0].mxu0
    %1739 = vdwg.mxu0
    %v1740 = vadd.f32 %v1737, %v1507
    %v1741 = vadd.f32 %v1740, %v1505
    %v1742 = vxor.u32 %v1741, 2147483648
    %v1743 = vmul.f32 %v1742, 1.442695
    %v1744 = vpow.pop %v1743
    %v1745 = vadd.f32 %v1744, 1.0
    %v1746 = vrcp.pop %v1745
    %v1747 = vmul.f32 1.0, %v1746
    %1748 = vrot.lane.b32.xlu0 %v1505, 64
    %v1749 = vpop.permute.xlu0 %1748
    %v1751 = vmul.f32 %v1747, %v1749
    %1753 = vrot.lane.b32.xlu0 %v1751, 64
    %v1754 = vpop.permute.xlu0 %1753
    %v1756 = vadd.f32 %v1740, %v1754
    %v1757 = vtanh.pop %v1756
    %v1758 = vsub.f32 1.0, %v1747
    %1760 = vrot.lane.b32.xlu0 %v1757, 96
    %v1761 = vpop.permute.xlu0 %1760
    %v1763 = vmul.f32 %v1758, %v1761
    %v1764 = vmul.f32 %v1747, %v1356
    %v1765 = vadd.f32 %v1763, %v1764
    %v1768 = vunpack.c.l.s4 1966171168
    %v1769 = vunpack.c.0.s8 %v1768
    %v1770 = vlaneseq
    %v1771 = vshrl.u32 %v1770, 7
    %v1772 = vsub.s32 %v1769, %v1771
    %v1773 = vrot.slane %v1765, %v1772
    %v1774 = vcombine.high %v1773, %v1773
    %v1776 = vunpack.c.l.s4 1966171168
    %v1777 = vunpack.c.0.s8 %v1776
    %v1778 = vlaneseq
    %v1779 = vshrl.u32 %v1778, 7
    %v1780 = vsub.s32 %v1777, %v1779
    %v1781 = vrot.slane %v1773, %v1780
    %v1783 = vunpack.c.l.s4 1966171168
    %v1784 = vunpack.c.0.s8 %v1783
    %v1785 = vlaneseq
    %v1786 = vshrl.u32 %v1785, 7
    %v1787 = vsub.s32 %v1784, %v1786
    %v1788 = vrot.slane %v1774, %v1787
    %v1789 = vlaneseq
    %v1790 = vshrl.u32 %v1789, 7
    %v1791 = vsub.s32 0, %v1790
    %v1792 = vrot.slane %v1781, %v1791
    %v1793 = vlaneseq
    %v1794 = vshrl.u32 %v1793, 7
    %v1795 = vsub.s32 0, %v1794
    %v1796 = vrot.slane %v1788, %v1795
    %1797 = vrot.lane.b32.xlu0 %v1792, 96
    %v1798 = vpop.permute.xlu0 %1797
    %1799 = vrot.lane.b32.xlu0 %v1796, 96
    %v1800 = vpop.permute.xlu0 %1799
    %1803 = vst.msk [vmem:[#allocation2 + $0x3] sm:$0x1] %vm574, %v1798
    %1804 = vst.msk [vmem:[#allocation2 + $0xb] sm:$0x1] %vm574, %v1800
    %v1805 = vlaneseq
    %v1806 = vshrl.u32 %v1805, 7
    %v1807 = vsub.s32 %v330, %v1806
    %v1808 = vrot.slane %v1633, %v1807
    %v1809 = vlaneseq
    %v1810 = vshrl.u32 %v1809, 7
    %v1811 = vsub.s32 %v330, %v1810
    %v1812 = vrot.slane %v1638, %v1811
    %v1813 = vsel %vm339, %v1812, %v1808
    %v1815 = vsel %vm587, %v1813, 0.0
    %v1818 = vunpack.c.l.s4 1966171168
    %v1819 = vunpack.c.0.s8 %v1818
    %v1820 = vlaneseq
    %v1821 = vshrl.u32 %v1820, 7
    %v1822 = vsub.s32 %v1819, %v1821
    %v1823 = vrot.slane %v1815, %v1822
    %v1824 = vcombine.high %v1823, %v1823
    %v1826 = vunpack.c.l.s4 1966171168
    %v1827 = vunpack.c.0.s8 %v1826
    %v1828 = vlaneseq
    %v1829 = vshrl.u32 %v1828, 7
    %v1830 = vsub.s32 %v1827, %v1829
    %v1831 = vrot.slane %v1823, %v1830
    %v1833 = vunpack.c.l.s4 1966171168
    %v1834 = vunpack.c.0.s8 %v1833
    %v1835 = vlaneseq
    %v1836 = vshrl.u32 %v1835, 7
    %v1837 = vsub.s32 %v1834, %v1836
    %v1838 = vrot.slane %v1824, %v1837
    %1841 = vst [vmem:[%s6 + $0x3] sm:$0x1] %v1831
    %1842 = vst [vmem:[%s6 + $0xb] sm:$0x1] %v1838
    %1843 = vrot.lane.b32.xlu0 %v1765, 96
    %v1844 = vpop.permute.xlu0 %1843
    %v1845 = vsel %vm91, %v1844, 0
    %1847 = vmatprep.subr.mxu0 %v53
    %1848 = vmatpush1.msra.mxu0 %v52
    %1849 = vmatprep.subr.mxu0 %v55
    %1850 = vmatpush1.msra.mxu0 %v54
    %1851 = vmatprep.subr.mxu0 %v57
    %1852 = vmatpush1.msra.mxu0 %v56
    %1853 = vmatprep.subr.mxu0 %v59
    %1854 = vmatpush1.msra.mxu0 %v58
    %1855 = vmatprep.subr.mxu0 0.0
    %1856 = vmatpush1.msra.mxu0 0.0
    %1857 = vmatprep.subr.mxu0 0.0
    %1858 = vmatpush1.msra.mxu0 0.0
    %1859 = vmatprep.subr.mxu0 0.0
    %1860 = vmatpush1.msra.mxu0 0.0
    %1861 = vmatprep.subr.mxu0 0.0
    %1862 = vmatpush1.msra.mxu0 0.0
    %1863 = vmatprep.subr.mxu0 0.0
    %1864 = vmatpush1.msra.mxu0 0.0
    %1865 = vmatprep.subr.mxu0 0.0
    %1866 = vmatpush1.msra.mxu0 0.0
    %1867 = vmatprep.subr.mxu0 0.0
    %1868 = vmatpush1.msra.mxu0 0.0
    %1869 = vmatprep.subr.mxu0 0.0
    %1870 = vmatpush1.msra.mxu0 0.0
    %1871 = vmatprep.subr.mxu0 0.0
    %1872 = vmatpush1.msra.mxu0 0.0
    %1873 = vmatprep.subr.mxu0 0.0
    %1874 = vmatpush1.msra.mxu0 0.0
    %1875 = vmatprep.subr.mxu0 0.0
    %1876 = vmatpush1.msra.mxu0 0.0
    %1877 = vmatprep.subr.mxu0 0.0
    %1878 = vmatpush1.msra.mxu0 0.0
    %1879 = vmatprep.subr.mxu0 0.0
    %1880 = vmatpush1.msra.mxu0 0.0
    %1881 = vmatprep.subr.mxu0 0.0
    %1882 = vmatpush1.msra.mxu0 0.0
    %1883 = vmatprep.subr.mxu0 0.0
    %1884 = vmatpush1.msra.mxu0 0.0
    %1885 = vmatprep.subr.mxu0 0.0
    %1886 = vmatpush1.msra.mxu0 0.0
    %1887 = vmatprep.subr.mxu0 0.0
    %1888 = vmatpush1.msra.mxu0 0.0
    %1889 = vmatprep.subr.mxu0 0.0
    %1890 = vmatpush1.msra.mxu0 0.0
    %1891 = vmatprep.subr.mxu0 0.0
    %1892 = vmatpush1.msra.mxu0 0.0
    %1893 = vmatprep.subr.mxu0 0.0
    %1894 = vmatpush1.msra.mxu0 0.0
    %1895 = vmatprep.subr.mxu0 0.0
    %1896 = vmatpush1.msra.mxu0 0.0
    %1897 = vmatprep.subr.mxu0 0.0
    %1898 = vmatpush1.msra.mxu0 0.0
    %1899 = vmatprep.subr.mxu0 0.0
    %1900 = vmatpush1.msra.mxu0 0.0
    %1901 = vmatprep.subr.mxu0 0.0
    %1902 = vmatpush1.msra.mxu0 0.0
    %1903 = vmatprep.subr.mxu0 0.0
    %1904 = vmatpush1.msra.mxu0 0.0
    %1905 = vmatprep.subr.mxu0 0.0
    %1906 = vmatpush1.msra.mxu0 0.0
    %1907 = vmatprep.subr.mxu0 0.0
    %1908 = vmatpush1.msra.mxu0 0.0
    %1909 = vmatprep.subr.mxu0 0.0
    %1910 = vmatpush1.msra.mxu0 0.0
    %1911 = vmatprep.mubr.f32.mxu0 0.0
    %1912 = vmatmul.mubr.f32.gmra.mrb[0].mxu0 %v1845
    %v1913 = vpop.f32.mrb[0].mxu0
    %v1914 = vadd.f32 %v178, %v1913
    %v1915 = vpop.f32.mrb[0].mxu0
    %v1916 = vadd.f32 %v182, %v1915
    %1917 = vdwg.mxu0
    %v1920 = vunpack.c.l.s4 1966171168
    %v1921 = vunpack.c.0.s8 %v1920
    %v1922 = vlaneseq
    %v1923 = vshrl.u32 %v1922, 7
    %v1924 = vsub.s32 %v1921, %v1923
    %v1925 = vrot.slane %v1914, %v1924
    %v1926 = vcombine.high %v1925, %v1925
    %v1928 = vunpack.c.l.s4 1966171168
    %v1929 = vunpack.c.0.s8 %v1928
    %v1930 = vlaneseq
    %v1931 = vshrl.u32 %v1930, 7
    %v1932 = vsub.s32 %v1929, %v1931
    %v1933 = vrot.slane %v1925, %v1932
    %v1935 = vunpack.c.l.s4 1966171168
    %v1936 = vunpack.c.0.s8 %v1935
    %v1937 = vlaneseq
    %v1938 = vshrl.u32 %v1937, 7
    %v1939 = vsub.s32 %v1936, %v1938
    %v1940 = vrot.slane %v1926, %v1939
    %v1941 = vlaneseq
    %v1942 = vshrl.u32 %v1941, 7
    %v1943 = vsub.s32 0, %v1942
    %v1944 = vrot.slane %v1933, %v1943
    %v1945 = vlaneseq
    %v1946 = vshrl.u32 %v1945, 7
    %v1947 = vsub.s32 0, %v1946
    %v1948 = vrot.slane %v1940, %v1947
    %v1951 = vadd.f32 %v1944, %v294
    %v1952 = vadd.f32 %v1948, %v296
    %v1953 = vtanh.pop %v1951
    %v1954 = vtanh.pop %v1952
    %v1955 = vmul.f32 %v1953, %v309
    %v1956 = vmul.f32 %v1954, %v309
    %1959 = vrot.lane.b32.xlu0 %v1955, 32
    %v1960 = vpop.permute.xlu0 %1959
    %1961 = vrot.lane.b32.xlu0 %v1956, 32
    %v1962 = vpop.permute.xlu0 %1961
    %v1965 = vsel %vm91, %v1960, 0.0
    %1966 = vadd.xlane.f32.xlu0 %v1965
    %v1967 = vpop.xlane.xlu0 %1966
    %v1968 = vsel %vm91, %v1962, 0.0
    %1969 = vadd.xlane.f32.xlu0 %v1968
    %v1970 = vpop.xlane.xlu0 %1969
    %v1973 = vlaneseq
    %v1974 = vshrl.u32 %v1973, 7
    %v1975 = vsub.s32 %v330, %v1974
    %v1976 = vrot.slane %v1967, %v1975
    %v1977 = vlaneseq
    %v1978 = vshrl.u32 %v1977, 7
    %v1979 = vsub.s32 %v330, %v1978
    %v1980 = vrot.slane %v1970, %v1979
    %v1981 = vsel %vm339, %v1980, %v1976
    %v1983 = vsel %vm342, %v1981, -inf
    %1984 = vmax.xlane.f32.xlu0 %v1983
    %v1985 = vpop.xlane.xlu0 %1984
    %v1987 = vlaneseq
    %v1988 = vshrl.u32 %v1987, 7
    %v1989 = vsub.s32 0, %v1988
    %v1990 = vrot.slane %v1985, %v1989
    %v1991 = vlaneseq
    %v1992 = vshrl.u32 %v1991, 7
    %v1993 = vsub.s32 1, %v1992
    %v1994 = vrot.slane %v1985, %v1993
    %v1997 = vsub.f32 %v1967, %v1990
    %v1998 = vsub.f32 %v1970, %v1994
    %v1999 = vmul.f32 %v1997, 1.442695
    %v2000 = vpow.pop %v1999
    %v2001 = vmul.f32 %v1998, 1.442695
    %v2002 = vpow.pop %v2001
    %2005 = vset.pattern.permute.xlu0 0
    %2006 = vperm.xlu0 %2005, %v2000
    %v2007 = vpop.permute.xlu0 %2006
    %2008 = vset.pattern.permute.xlu0 0
    %2009 = vperm.xlu0 %2008, %v2002
    %v2010 = vpop.permute.xlu0 %2009
    %v2011 = vlaneseq
    %v2012 = vshrl.u32 %v2011, 7
    %v2013 = vsub.s32 %v330, %v2012
    %v2014 = vrot.slane %v2007, %v2013
    %v2015 = vlaneseq
    %v2016 = vshrl.u32 %v2015, 7
    %v2017 = vsub.s32 %v330, %v2016
    %v2018 = vrot.slane %v2010, %v2017
    %v2019 = vsel %vm339, %v2018, %v2014
    %v2021 = vsel %vm342, %v2019, 0.0
    %2022 = vadd.xlane.f32.xlu0 %v2021
    %v2023 = vpop.xlane.xlu0 %2022
    %v2025 = vlaneseq
    %v2026 = vshrl.u32 %v2025, 7
    %v2027 = vsub.s32 0, %v2026
    %v2028 = vrot.slane %v2023, %v2027
    %v2029 = vlaneseq
    %v2030 = vshrl.u32 %v2029, 7
    %v2031 = vsub.s32 1, %v2030
    %v2032 = vrot.slane %v2023, %v2031
    %v2035 = vrcp.pop %v2028
    %v2036 = vmul.f32 %v2000, %v2035
    %v2037 = vrcp.pop %v2032
    %v2038 = vmul.f32 %v2002, %v2037
    %2040 = vset.pattern.permute.xlu0 0
    %2041 = vperm.xlu0 %2040, %v2036
    %v2042 = vpop.permute.xlu0 %2041
    %2045 = vset.pattern.permute.xlu0 0
    %2046 = vperm.xlu0 %2045, %v2038
    %v2047 = vpop.permute.xlu0 %2046
    %v2049 = vmul.f32 %v2042, %v50
    %v2050 = vmul.f32 %v2047, %v51
    %v2051 = vsel %vm91, %v2049, 0.0
    %v2052 = vrot.slane %v2051, 4
    %v2053 = vadd.f32 %v2051, %v2052
    %v2054 = vrot.slane %v2053, 2
    %v2055 = vadd.f32 %v2053, %v2054
    %v2056 = vrot.slane %v2055, 1
    %v2057 = vadd.f32 %v2055, %v2056
    %v2058 = vsel %vm91, %v2050, 0.0
    %v2059 = vrot.slane %v2058, 4
    %v2060 = vadd.f32 %v2058, %v2059
    %v2061 = vrot.slane %v2060, 2
    %v2062 = vadd.f32 %v2060, %v2061
    %v2063 = vrot.slane %v2062, 1
    %v2064 = vadd.f32 %v2062, %v2063
    %v2065 = vld [vmem:[#allocation6 + $0x40] sm:$0xff]
    %v2066 = vld [vmem:[#allocation6 + $0x50] sm:$0xff]
    %v2067 = vld [vmem:[#allocation6 + $0x60] sm:$0xff]
    %v2068 = vld [vmem:[#allocation6 + $0x70] sm:$0xff]
    %v2069 = vld [vmem:[%s3 + $0x1] sm:$0x1]
    %v2070 = vlaneseq
    %v2071 = vshrl.u32 %v2070, 7
    %v2072 = vsub.s32 0, %v2071
    %v2073 = vrot.slane %v2069, %v2072
    %v2076 = vsel %vm339, %v2064, %v2057
    %v2077 = vsel %vm91, %v2076, 0
    %2079 = vmatprep.subr.mxu0 0.0
    %2080 = vmatpush1.msra.mxu0 %v2065
    %2081 = vmatprep.subr.mxu0 0.0
    %2082 = vmatpush1.msra.mxu0 %v2066
    %2083 = vmatprep.subr.mxu0 0.0
    %2084 = vmatpush1.msra.mxu0 %v2067
    %2085 = vmatprep.subr.mxu0 0.0
    %2086 = vmatpush1.msra.mxu0 %v2068
    %2087 = vmatprep.subr.mxu0 0.0
    %2088 = vmatpush1.msra.mxu0 0.0
    %2089 = vmatprep.subr.mxu0 0.0
    %2090 = vmatpush1.msra.mxu0 0.0
    %2091 = vmatprep.subr.mxu0 0.0
    %2092 = vmatpush1.msra.mxu0 0.0
    %2093 = vmatprep.subr.mxu0 0.0
    %2094 = vmatpush1.msra.mxu0 0.0
    %2095 = vmatprep.subr.mxu0 0.0
    %2096 = vmatpush1.msra.mxu0 0.0
    %2097 = vmatprep.subr.mxu0 0.0
    %2098 = vmatpush1.msra.mxu0 0.0
    %2099 = vmatprep.subr.mxu0 0.0
    %2100 = vmatpush1.msra.mxu0 0.0
    %2101 = vmatprep.subr.mxu0 0.0
    %2102 = vmatpush1.msra.mxu0 0.0
    %2103 = vmatprep.subr.mxu0 0.0
    %2104 = vmatpush1.msra.mxu0 0.0
    %2105 = vmatprep.subr.mxu0 0.0
    %2106 = vmatpush1.msra.mxu0 0.0
    %2107 = vmatprep.subr.mxu0 0.0
    %2108 = vmatpush1.msra.mxu0 0.0
    %2109 = vmatprep.subr.mxu0 0.0
    %2110 = vmatpush1.msra.mxu0 0.0
    %2111 = vmatprep.subr.mxu0 0.0
    %2112 = vmatpush1.msra.mxu0 0.0
    %2113 = vmatprep.subr.mxu0 0.0
    %2114 = vmatpush1.msra.mxu0 0.0
    %2115 = vmatprep.subr.mxu0 0.0
    %2116 = vmatpush1.msra.mxu0 0.0
    %2117 = vmatprep.subr.mxu0 0.0
    %2118 = vmatpush1.msra.mxu0 0.0
    %2119 = vmatprep.subr.mxu0 0.0
    %2120 = vmatpush1.msra.mxu0 0.0
    %2121 = vmatprep.subr.mxu0 0.0
    %2122 = vmatpush1.msra.mxu0 0.0
    %2123 = vmatprep.subr.mxu0 0.0
    %2124 = vmatpush1.msra.mxu0 0.0
    %2125 = vmatprep.subr.mxu0 0.0
    %2126 = vmatpush1.msra.mxu0 0.0
    %2127 = vmatprep.subr.mxu0 0.0
    %2128 = vmatpush1.msra.mxu0 0.0
    %2129 = vmatprep.subr.mxu0 0.0
    %2130 = vmatpush1.msra.mxu0 0.0
    %2131 = vmatprep.subr.mxu0 0.0
    %2132 = vmatpush1.msra.mxu0 0.0
    %2133 = vmatprep.subr.mxu0 0.0
    %2134 = vmatpush1.msra.mxu0 0.0
    %2135 = vmatprep.subr.mxu0 0.0
    %2136 = vmatpush1.msra.mxu0 0.0
    %2137 = vmatprep.subr.mxu0 0.0
    %2138 = vmatpush1.msra.mxu0 0.0
    %2139 = vmatprep.subr.mxu0 0.0
    %2140 = vmatpush1.msra.mxu0 0.0
    %2141 = vmatprep.subr.mxu0 0.0
    %2142 = vmatpush1.msra.mxu0 0.0
    %2143 = vmatprep.mubr.f32.mxu0 0.0
    %2144 = vmatmul.mubr.f32.gmra.mrb[0].mxu0 %v2077
    %v2145 = vpop.f32.mrb[0].mxu0
    %v2146 = vadd.f32 %v2073, %v2145
    %v2147 = vpop.f32.mrb[0].mxu0
    %2148 = vdwg.mxu0
    %v2149 = vadd.f32 %v2146, %v1916
    %v2150 = vadd.f32 %v2149, %v1914
    %v2151 = vxor.u32 %v2150, 2147483648
    %v2152 = vmul.f32 %v2151, 1.442695
    %v2153 = vpow.pop %v2152
    %v2154 = vadd.f32 %v2153, 1.0
    %v2155 = vrcp.pop %v2154
    %v2156 = vmul.f32 1.0, %v2155
    %2157 = vrot.lane.b32.xlu0 %v1914, 64
    %v2158 = vpop.permute.xlu0 %2157
    %v2160 = vmul.f32 %v2156, %v2158
    %2162 = vrot.lane.b32.xlu0 %v2160, 64
    %v2163 = vpop.permute.xlu0 %2162
    %v2165 = vadd.f32 %v2149, %v2163
    %v2166 = vtanh.pop %v2165
    %v2167 = vsub.f32 1.0, %v2156
    %2169 = vrot.lane.b32.xlu0 %v2166, 96
    %v2170 = vpop.permute.xlu0 %2169
    %v2172 = vmul.f32 %v2167, %v2170
    %v2173 = vmul.f32 %v2156, %v1765
    %v2174 = vadd.f32 %v2172, %v2173
    %v2177 = vunpack.c.l.s4 1966171168
    %v2178 = vunpack.c.0.s8 %v2177
    %v2179 = vlaneseq
    %v2180 = vshrl.u32 %v2179, 7
    %v2181 = vsub.s32 %v2178, %v2180
    %v2182 = vrot.slane %v2174, %v2181
    %v2183 = vcombine.high %v2182, %v2182
    %v2185 = vunpack.c.l.s4 1966171168
    %v2186 = vunpack.c.0.s8 %v2185
    %v2187 = vlaneseq
    %v2188 = vshrl.u32 %v2187, 7
    %v2189 = vsub.s32 %v2186, %v2188
    %v2190 = vrot.slane %v2182, %v2189
    %v2192 = vunpack.c.l.s4 1966171168
    %v2193 = vunpack.c.0.s8 %v2192
    %v2194 = vlaneseq
    %v2195 = vshrl.u32 %v2194, 7
    %v2196 = vsub.s32 %v2193, %v2195
    %v2197 = vrot.slane %v2183, %v2196
    %v2198 = vlaneseq
    %v2199 = vshrl.u32 %v2198, 7
    %v2200 = vsub.s32 0, %v2199
    %v2201 = vrot.slane %v2190, %v2200
    %v2202 = vlaneseq
    %v2203 = vshrl.u32 %v2202, 7
    %v2204 = vsub.s32 0, %v2203
    %v2205 = vrot.slane %v2197, %v2204
    %2206 = vrot.lane.b32.xlu0 %v2201, 96
    %v2207 = vpop.permute.xlu0 %2206
    %2208 = vrot.lane.b32.xlu0 %v2205, 96
    %v2209 = vpop.permute.xlu0 %2208
    %2212 = vst.msk [vmem:[#allocation2 + $0x4] sm:$0x1] %vm574, %v2207
    %2213 = vst.msk [vmem:[#allocation2 + $0xc] sm:$0x1] %vm574, %v2209
    %v2214 = vlaneseq
    %v2215 = vshrl.u32 %v2214, 7
    %v2216 = vsub.s32 %v330, %v2215
    %v2217 = vrot.slane %v2042, %v2216
    %v2218 = vlaneseq
    %v2219 = vshrl.u32 %v2218, 7
    %v2220 = vsub.s32 %v330, %v2219
    %v2221 = vrot.slane %v2047, %v2220
    %v2222 = vsel %vm339, %v2221, %v2217
    %v2224 = vsel %vm587, %v2222, 0.0
    %v2227 = vunpack.c.l.s4 1966171168
    %v2228 = vunpack.c.0.s8 %v2227
    %v2229 = vlaneseq
    %v2230 = vshrl.u32 %v2229, 7
    %v2231 = vsub.s32 %v2228, %v2230
    %v2232 = vrot.slane %v2224, %v2231
    %v2233 = vcombine.high %v2232, %v2232
    %v2235 = vunpack.c.l.s4 1966171168
    %v2236 = vunpack.c.0.s8 %v2235
    %v2237 = vlaneseq
    %v2238 = vshrl.u32 %v2237, 7
    %v2239 = vsub.s32 %v2236, %v2238
    %v2240 = vrot.slane %v2232, %v2239
    %v2242 = vunpack.c.l.s4 1966171168
    %v2243 = vunpack.c.0.s8 %v2242
    %v2244 = vlaneseq
    %v2245 = vshrl.u32 %v2244, 7
    %v2246 = vsub.s32 %v2243, %v2245
    %v2247 = vrot.slane %v2233, %v2246
    %2250 = vst [vmem:[%s6 + $0x4] sm:$0x1] %v2240
    %2251 = vst [vmem:[%s6 + $0xc] sm:$0x1] %v2247
    %2252 = vrot.lane.b32.xlu0 %v2174, 96
    %v2253 = vpop.permute.xlu0 %2252
    %v2254 = vsel %vm91, %v2253, 0
    %2256 = vmatprep.subr.mxu0 %v53
    %2257 = vmatpush1.msra.mxu0 %v52
    %2258 = vmatprep.subr.mxu0 %v55
    %2259 = vmatpush1.msra.mxu0 %v54
    %2260 = vmatprep.subr.mxu0 %v57
    %2261 = vmatpush1.msra.mxu0 %v56
    %2262 = vmatprep.subr.mxu0 %v59
    %2263 = vmatpush1.msra.mxu0 %v58
    %2264 = vmatprep.subr.mxu0 0.0
    %2265 = vmatpush1.msra.mxu0 0.0
    %2266 = vmatprep.subr.mxu0 0.0
    %2267 = vmatpush1.msra.mxu0 0.0
    %2268 = vmatprep.subr.mxu0 0.0
    %2269 = vmatpush1.msra.mxu0 0.0
    %2270 = vmatprep.subr.mxu0 0.0
    %2271 = vmatpush1.msra.mxu0 0.0
    %2272 = vmatprep.subr.mxu0 0.0
    %2273 = vmatpush1.msra.mxu0 0.0
    %2274 = vmatprep.subr.mxu0 0.0
    %2275 = vmatpush1.msra.mxu0 0.0
    %2276 = vmatprep.subr.mxu0 0.0
    %2277 = vmatpush1.msra.mxu0 0.0
    %2278 = vmatprep.subr.mxu0 0.0
    %2279 = vmatpush1.msra.mxu0 0.0
    %2280 = vmatprep.subr.mxu0 0.0
    %2281 = vmatpush1.msra.mxu0 0.0
    %2282 = vmatprep.subr.mxu0 0.0
    %2283 = vmatpush1.msra.mxu0 0.0
    %2284 = vmatprep.subr.mxu0 0.0
    %2285 = vmatpush1.msra.mxu0 0.0
    %2286 = vmatprep.subr.mxu0 0.0
    %2287 = vmatpush1.msra.mxu0 0.0
    %2288 = vmatprep.subr.mxu0 0.0
    %2289 = vmatpush1.msra.mxu0 0.0
    %2290 = vmatprep.subr.mxu0 0.0
    %2291 = vmatpush1.msra.mxu0 0.0
    %2292 = vmatprep.subr.mxu0 0.0
    %2293 = vmatpush1.msra.mxu0 0.0
    %2294 = vmatprep.subr.mxu0 0.0
    %2295 = vmatpush1.msra.mxu0 0.0
    %2296 = vmatprep.subr.mxu0 0.0
    %2297 = vmatpush1.msra.mxu0 0.0
    %2298 = vmatprep.subr.mxu0 0.0
    %2299 = vmatpush1.msra.mxu0 0.0
    %2300 = vmatprep.subr.mxu0 0.0
    %2301 = vmatpush1.msra.mxu0 0.0
    %2302 = vmatprep.subr.mxu0 0.0
    %2303 = vmatpush1.msra.mxu0 0.0
    %2304 = vmatprep.subr.mxu0 0.0
    %2305 = vmatpush1.msra.mxu0 0.0
    %2306 = vmatprep.subr.mxu0 0.0
    %2307 = vmatpush1.msra.mxu0 0.0
    %2308 = vmatprep.subr.mxu0 0.0
    %2309 = vmatpush1.msra.mxu0 0.0
    %2310 = vmatprep.subr.mxu0 0.0
    %2311 = vmatpush1.msra.mxu0 0.0
    %2312 = vmatprep.subr.mxu0 0.0
    %2313 = vmatpush1.msra.mxu0 0.0
    %2314 = vmatprep.subr.mxu0 0.0
    %2315 = vmatpush1.msra.mxu0 0.0
    %2316 = vmatprep.subr.mxu0 0.0
    %2317 = vmatpush1.msra.mxu0 0.0
    %2318 = vmatprep.subr.mxu0 0.0
    %2319 = vmatpush1.msra.mxu0 0.0
    %2320 = vmatprep.mubr.f32.mxu0 0.0
    %2321 = vmatmul.mubr.f32.gmra.mrb[0].mxu0 %v2254
    %v2322 = vpop.f32.mrb[0].mxu0
    %v2323 = vadd.f32 %v178, %v2322
    %v2324 = vpop.f32.mrb[0].mxu0
    %v2325 = vadd.f32 %v182, %v2324
    %2326 = vdwg.mxu0
    %v2329 = vunpack.c.l.s4 1966171168
    %v2330 = vunpack.c.0.s8 %v2329
    %v2331 = vlaneseq
    %v2332 = vshrl.u32 %v2331, 7
    %v2333 = vsub.s32 %v2330, %v2332
    %v2334 = vrot.slane %v2323, %v2333
    %v2335 = vcombine.high %v2334, %v2334
    %v2337 = vunpack.c.l.s4 1966171168
    %v2338 = vunpack.c.0.s8 %v2337
    %v2339 = vlaneseq
    %v2340 = vshrl.u32 %v2339, 7
    %v2341 = vsub.s32 %v2338, %v2340
    %v2342 = vrot.slane %v2334, %v2341
    %v2344 = vunpack.c.l.s4 1966171168
    %v2345 = vunpack.c.0.s8 %v2344
    %v2346 = vlaneseq
    %v2347 = vshrl.u32 %v2346, 7
    %v2348 = vsub.s32 %v2345, %v2347
    %v2349 = vrot.slane %v2335, %v2348
    %v2350 = vlaneseq
    %v2351 = vshrl.u32 %v2350, 7
    %v2352 = vsub.s32 0, %v2351
    %v2353 = vrot.slane %v2342, %v2352
    %v2354 = vlaneseq
    %v2355 = vshrl.u32 %v2354, 7
    %v2356 = vsub.s32 0, %v2355
    %v2357 = vrot.slane %v2349, %v2356
    %v2360 = vadd.f32 %v2353, %v294
    %v2361 = vadd.f32 %v2357, %v296
    %v2362 = vtanh.pop %v2360
    %v2363 = vtanh.pop %v2361
    %v2364 = vmul.f32 %v2362, %v309
    %v2365 = vmul.f32 %v2363, %v309
    %2368 = vrot.lane.b32.xlu0 %v2364, 32
    %v2369 = vpop.permute.xlu0 %2368
    %2370 = vrot.lane.b32.xlu0 %v2365, 32
    %v2371 = vpop.permute.xlu0 %2370
    %v2374 = vsel %vm91, %v2369, 0.0
    %2375 = vadd.xlane.f32.xlu0 %v2374
    %v2376 = vpop.xlane.xlu0 %2375
    %v2377 = vsel %vm91, %v2371, 0.0
    %2378 = vadd.xlane.f32.xlu0 %v2377
    %v2379 = vpop.xlane.xlu0 %2378
    %v2382 = vlaneseq
    %v2383 = vshrl.u32 %v2382, 7
    %v2384 = vsub.s32 %v330, %v2383
    %v2385 = vrot.slane %v2376, %v2384
    %v2386 = vlaneseq
    %v2387 = vshrl.u32 %v2386, 7
    %v2388 = vsub.s32 %v330, %v2387
    %v2389 = vrot.slane %v2379, %v2388
    %v2390 = vsel %vm339, %v2389, %v2385
    %v2392 = vsel %vm342, %v2390, -inf
    %2393 = vmax.xlane.f32.xlu0 %v2392
    %v2394 = vpop.xlane.xlu0 %2393
    %v2396 = vlaneseq
    %v2397 = vshrl.u32 %v2396, 7
    %v2398 = vsub.s32 0, %v2397
    %v2399 = vrot.slane %v2394, %v2398
    %v2400 = vlaneseq
    %v2401 = vshrl.u32 %v2400, 7
    %v2402 = vsub.s32 1, %v2401
    %v2403 = vrot.slane %v2394, %v2402
    %v2406 = vsub.f32 %v2376, %v2399
    %v2407 = vsub.f32 %v2379, %v2403
    %v2408 = vmul.f32 %v2406, 1.442695
    %v2409 = vpow.pop %v2408
    %v2410 = vmul.f32 %v2407, 1.442695
    %v2411 = vpow.pop %v2410
    %2414 = vset.pattern.permute.xlu0 0
    %2415 = vperm.xlu0 %2414, %v2409
    %v2416 = vpop.permute.xlu0 %2415
    %2417 = vset.pattern.permute.xlu0 0
    %2418 = vperm.xlu0 %2417, %v2411
    %v2419 = vpop.permute.xlu0 %2418
    %v2420 = vlaneseq
    %v2421 = vshrl.u32 %v2420, 7
    %v2422 = vsub.s32 %v330, %v2421
    %v2423 = vrot.slane %v2416, %v2422
    %v2424 = vlaneseq
    %v2425 = vshrl.u32 %v2424, 7
    %v2426 = vsub.s32 %v330, %v2425
    %v2427 = vrot.slane %v2419, %v2426
    %v2428 = vsel %vm339, %v2427, %v2423
    %v2430 = vsel %vm342, %v2428, 0.0
    %2431 = vadd.xlane.f32.xlu0 %v2430
    %v2432 = vpop.xlane.xlu0 %2431
    %v2434 = vlaneseq
    %v2435 = vshrl.u32 %v2434, 7
    %v2436 = vsub.s32 0, %v2435
    %v2437 = vrot.slane %v2432, %v2436
    %v2438 = vlaneseq
    %v2439 = vshrl.u32 %v2438, 7
    %v2440 = vsub.s32 1, %v2439
    %v2441 = vrot.slane %v2432, %v2440
    %v2444 = vrcp.pop %v2437
    %v2445 = vmul.f32 %v2409, %v2444
    %v2446 = vrcp.pop %v2441
    %v2447 = vmul.f32 %v2411, %v2446
    %2449 = vset.pattern.permute.xlu0 0
    %2450 = vperm.xlu0 %2449, %v2445
    %v2451 = vpop.permute.xlu0 %2450
    %2454 = vset.pattern.permute.xlu0 0
    %2455 = vperm.xlu0 %2454, %v2447
    %v2456 = vpop.permute.xlu0 %2455
    %v2458 = vmul.f32 %v2451, %v50
    %v2459 = vmul.f32 %v2456, %v51
    %v2460 = vsel %vm91, %v2458, 0.0
    %v2461 = vrot.slane %v2460, 4
    %v2462 = vadd.f32 %v2460, %v2461
    %v2463 = vrot.slane %v2462, 2
    %v2464 = vadd.f32 %v2462, %v2463
    %v2465 = vrot.slane %v2464, 1
    %v2466 = vadd.f32 %v2464, %v2465
    %v2467 = vsel %vm91, %v2459, 0.0
    %v2468 = vrot.slane %v2467, 4
    %v2469 = vadd.f32 %v2467, %v2468
    %v2470 = vrot.slane %v2469, 2
    %v2471 = vadd.f32 %v2469, %v2470
    %v2472 = vrot.slane %v2471, 1
    %v2473 = vadd.f32 %v2471, %v2472
    %v2474 = vld [vmem:[#allocation6 + $0x40] sm:$0xff]
    %v2475 = vld [vmem:[#allocation6 + $0x50] sm:$0xff]
    %v2476 = vld [vmem:[#allocation6 + $0x60] sm:$0xff]
    %v2477 = vld [vmem:[#allocation6 + $0x70] sm:$0xff]
    %v2478 = vld [vmem:[%s3 + $0x1] sm:$0x1]
    %v2479 = vlaneseq
    %v2480 = vshrl.u32 %v2479, 7
    %v2481 = vsub.s32 0, %v2480
    %v2482 = vrot.slane %v2478, %v2481
    %v2485 = vsel %vm339, %v2473, %v2466
    %v2486 = vsel %vm91, %v2485, 0
    %2488 = vmatprep.subr.mxu0 0.0
    %2489 = vmatpush1.msra.mxu0 %v2474
    %2490 = vmatprep.subr.mxu0 0.0
    %2491 = vmatpush1.msra.mxu0 %v2475
    %2492 = vmatprep.subr.mxu0 0.0
    %2493 = vmatpush1.msra.mxu0 %v2476
    %2494 = vmatprep.subr.mxu0 0.0
    %2495 = vmatpush1.msra.mxu0 %v2477
    %2496 = vmatprep.subr.mxu0 0.0
    %2497 = vmatpush1.msra.mxu0 0.0
    %2498 = vmatprep.subr.mxu0 0.0
    %2499 = vmatpush1.msra.mxu0 0.0
    %2500 = vmatprep.subr.mxu0 0.0
    %2501 = vmatpush1.msra.mxu0 0.0
    %2502 = vmatprep.subr.mxu0 0.0
    %2503 = vmatpush1.msra.mxu0 0.0
    %2504 = vmatprep.subr.mxu0 0.0
    %2505 = vmatpush1.msra.mxu0 0.0
    %2506 = vmatprep.subr.mxu0 0.0
    %2507 = vmatpush1.msra.mxu0 0.0
    %2508 = vmatprep.subr.mxu0 0.0
    %2509 = vmatpush1.msra.mxu0 0.0
    %2510 = vmatprep.subr.mxu0 0.0
    %2511 = vmatpush1.msra.mxu0 0.0
    %2512 = vmatprep.subr.mxu0 0.0
    %2513 = vmatpush1.msra.mxu0 0.0
    %2514 = vmatprep.subr.mxu0 0.0
    %2515 = vmatpush1.msra.mxu0 0.0
    %2516 = vmatprep.subr.mxu0 0.0
    %2517 = vmatpush1.msra.mxu0 0.0
    %2518 = vmatprep.subr.mxu0 0.0
    %2519 = vmatpush1.msra.mxu0 0.0
    %2520 = vmatprep.subr.mxu0 0.0
    %2521 = vmatpush1.msra.mxu0 0.0
    %2522 = vmatprep.subr.mxu0 0.0
    %2523 = vmatpush1.msra.mxu0 0.0
    %2524 = vmatprep.subr.mxu0 0.0
    %2525 = vmatpush1.msra.mxu0 0.0
    %2526 = vmatprep.subr.mxu0 0.0
    %2527 = vmatpush1.msra.mxu0 0.0
    %2528 = vmatprep.subr.mxu0 0.0
    %2529 = vmatpush1.msra.mxu0 0.0
    %2530 = vmatprep.subr.mxu0 0.0
    %2531 = vmatpush1.msra.mxu0 0.0
    %2532 = vmatprep.subr.mxu0 0.0
    %2533 = vmatpush1.msra.mxu0 0.0
    %2534 = vmatprep.subr.mxu0 0.0
    %2535 = vmatpush1.msra.mxu0 0.0
    %2536 = vmatprep.subr.mxu0 0.0
    %2537 = vmatpush1.msra.mxu0 0.0
    %2538 = vmatprep.subr.mxu0 0.0
    %2539 = vmatpush1.msra.mxu0 0.0
    %2540 = vmatprep.subr.mxu0 0.0
    %2541 = vmatpush1.msra.mxu0 0.0
    %2542 = vmatprep.subr.mxu0 0.0
    %2543 = vmatpush1.msra.mxu0 0.0
    %2544 = vmatprep.subr.mxu0 0.0
    %2545 = vmatpush1.msra.mxu0 0.0
    %2546 = vmatprep.subr.mxu0 0.0
    %2547 = vmatpush1.msra.mxu0 0.0
    %2548 = vmatprep.subr.mxu0 0.0
    %2549 = vmatpush1.msra.mxu0 0.0
    %2550 = vmatprep.subr.mxu0 0.0
    %2551 = vmatpush1.msra.mxu0 0.0
    %2552 = vmatprep.mubr.f32.mxu0 0.0
    %2553 = vmatmul.mubr.f32.gmra.mrb[0].mxu0 %v2486
    %v2554 = vpop.f32.mrb[0].mxu0
    %v2555 = vadd.f32 %v2482, %v2554
    %v2556 = vpop.f32.mrb[0].mxu0
    %2557 = vdwg.mxu0
    %v2558 = vadd.f32 %v2555, %v2325
    %v2559 = vadd.f32 %v2558, %v2323
    %v2560 = vxor.u32 %v2559, 2147483648
    %v2561 = vmul.f32 %v2560, 1.442695
    %v2562 = vpow.pop %v2561
    %v2563 = vadd.f32 %v2562, 1.0
    %v2564 = vrcp.pop %v2563
    %v2565 = vmul.f32 1.0, %v2564
    %2566 = vrot.lane.b32.xlu0 %v2323, 64
    %v2567 = vpop.permute.xlu0 %2566
    %v2569 = vmul.f32 %v2565, %v2567
    %2571 = vrot.lane.b32.xlu0 %v2569, 64
    %v2572 = vpop.permute.xlu0 %2571
    %v2574 = vadd.f32 %v2558, %v2572
    %v2575 = vtanh.pop %v2574
    %v2576 = vsub.f32 1.0, %v2565
    %2578 = vrot.lane.b32.xlu0 %v2575, 96
    %v2579 = vpop.permute.xlu0 %2578
    %v2581 = vmul.f32 %v2576, %v2579
    %v2582 = vmul.f32 %v2565, %v2174
    %v2583 = vadd.f32 %v2581, %v2582
    %v2586 = vunpack.c.l.s4 1966171168
    %v2587 = vunpack.c.0.s8 %v2586
    %v2588 = vlaneseq
    %v2589 = vshrl.u32 %v2588, 7
    %v2590 = vsub.s32 %v2587, %v2589
    %v2591 = vrot.slane %v2583, %v2590
    %v2592 = vcombine.high %v2591, %v2591
    %v2594 = vunpack.c.l.s4 1966171168
    %v2595 = vunpack.c.0.s8 %v2594
    %v2596 = vlaneseq
    %v2597 = vshrl.u32 %v2596, 7
    %v2598 = vsub.s32 %v2595, %v2597
    %v2599 = vrot.slane %v2591, %v2598
    %v2601 = vunpack.c.l.s4 1966171168
    %v2602 = vunpack.c.0.s8 %v2601
    %v2603 = vlaneseq
    %v2604 = vshrl.u32 %v2603, 7
    %v2605 = vsub.s32 %v2602, %v2604
    %v2606 = vrot.slane %v2592, %v2605
    %v2607 = vlaneseq
    %v2608 = vshrl.u32 %v2607, 7
    %v2609 = vsub.s32 0, %v2608
    %v2610 = vrot.slane %v2599, %v2609
    %v2611 = vlaneseq
    %v2612 = vshrl.u32 %v2611, 7
    %v2613 = vsub.s32 0, %v2612
    %v2614 = vrot.slane %v2606, %v2613
    %2615 = vrot.lane.b32.xlu0 %v2610, 96
    %v2616 = vpop.permute.xlu0 %2615
    %2617 = vrot.lane.b32.xlu0 %v2614, 96
    %v2618 = vpop.permute.xlu0 %2617
    %2621 = vst.msk [vmem:[#allocation2 + $0x5] sm:$0x1] %vm574, %v2616
    %2622 = vst.msk [vmem:[#allocation2 + $0xd] sm:$0x1] %vm574, %v2618
    %v2623 = vlaneseq
    %v2624 = vshrl.u32 %v2623, 7
    %v2625 = vsub.s32 %v330, %v2624
    %v2626 = vrot.slane %v2451, %v2625
    %v2627 = vlaneseq
    %v2628 = vshrl.u32 %v2627, 7
    %v2629 = vsub.s32 %v330, %v2628
    %v2630 = vrot.slane %v2456, %v2629
    %v2631 = vsel %vm339, %v2630, %v2626
    %v2633 = vsel %vm587, %v2631, 0.0
    %v2636 = vunpack.c.l.s4 1966171168
    %v2637 = vunpack.c.0.s8 %v2636
    %v2638 = vlaneseq
    %v2639 = vshrl.u32 %v2638, 7
    %v2640 = vsub.s32 %v2637, %v2639
    %v2641 = vrot.slane %v2633, %v2640
    %v2642 = vcombine.high %v2641, %v2641
    %v2644 = vunpack.c.l.s4 1966171168
    %v2645 = vunpack.c.0.s8 %v2644
    %v2646 = vlaneseq
    %v2647 = vshrl.u32 %v2646, 7
    %v2648 = vsub.s32 %v2645, %v2647
    %v2649 = vrot.slane %v2641, %v2648
    %v2651 = vunpack.c.l.s4 1966171168
    %v2652 = vunpack.c.0.s8 %v2651
    %v2653 = vlaneseq
    %v2654 = vshrl.u32 %v2653, 7
    %v2655 = vsub.s32 %v2652, %v2654
    %v2656 = vrot.slane %v2642, %v2655
    %2659 = vst [vmem:[%s6 + $0x5] sm:$0x1] %v2649
    %2660 = vst [vmem:[%s6 + $0xd] sm:$0x1] %v2656
    %v2661 = vld [vmem:[#allocation6 + $0x48] sm:$0xff]
    %v2662 = vld [vmem:[#allocation6 + $0x58] sm:$0xff]
    %v2663 = vld [vmem:[#allocation6 + $0x68] sm:$0xff]
    %v2664 = vld [vmem:[#allocation6 + $0x78] sm:$0xff]
    %v2665 = vld [vmem:[%s3 + $0x5] sm:$0x1]
    %v2666 = vld [vmem:[#allocation2] sm:$0x3f]
    %v2667 = vld [vmem:[#allocation2 + $0x8] sm:$0x3f]
    %v2670 = vcombine.high %v2666, %v2666
    %v2672 = vunpack.c.l.s4 1983009808
    %v2673 = vunpack.c.0.s8 %v2672
    %v2674 = vlaneseq
    %v2675 = vshrl.u32 %v2674, 7
    %v2676 = vsub.s32 %v2673, %v2675
    %v2677 = vrot.slane %v2666, %v2676
    %v2679 = vunpack.c.l.s4 1983009808
    %v2680 = vunpack.c.0.s8 %v2679
    %v2681 = vlaneseq
    %v2682 = vshrl.u32 %v2681, 7
    %v2683 = vsub.s32 %v2680, %v2682
    %v2684 = vrot.slane %v2670, %v2683
    %v2685 = vcombine.high %v2677, %v2677
    %v2686 = vcombine.high %v2667, %v2667
    %v2688 = vunpack.c.l.s4 1983009808
    %v2689 = vunpack.c.0.s8 %v2688
    %v2690 = vlaneseq
    %v2691 = vshrl.u32 %v2690, 7
    %v2692 = vsub.s32 %v2689, %v2691
    %v2693 = vrot.slane %v2667, %v2692
    %v2695 = vunpack.c.l.s4 1983009808
    %v2696 = vunpack.c.0.s8 %v2695
    %v2697 = vlaneseq
    %v2698 = vshrl.u32 %v2697, 7
    %v2699 = vsub.s32 %v2696, %v2698
    %v2700 = vrot.slane %v2686, %v2699
    %v2701 = vcombine.high %v2693, %v2693
    %v2702 = vlaneseq
    %v2703 = vshrl.u32 %v2702, 7
    %v2704 = vsub.s32 0, %v2703
    %v2705 = vrot.slane %v2665, %v2704
    %v2706 = vcombine.low %v2677, %v2685
    %v2707 = vcombine.low %v2684, %v2693
    %v2709 = vunpack.c.l.s4 1983009808
    %v2710 = vunpack.c.0.s8 %v2709
    %v2711 = vlaneseq
    %v2712 = vshrl.u32 %v2711, 7
    %v2713 = vsub.s32 %v2710, %v2712
    %v2714 = vrot.slane %v2706, %v2713
    %v2716 = vunpack.c.l.s4 1983009808
    %v2717 = vunpack.c.0.s8 %v2716
    %v2718 = vlaneseq
    %v2719 = vshrl.u32 %v2718, 7
    %v2720 = vsub.s32 %v2717, %v2719
    %v2721 = vrot.slane %v2707, %v2720
    %v2722 = vcombine.low %v2714, %v2721
    %v2723 = vcombine.low %v2701, %v2700
    %v2725 = vunpack.c.l.s4 1983009808
    %v2726 = vunpack.c.0.s8 %v2725
    %v2727 = vlaneseq
    %v2728 = vshrl.u32 %v2727, 7
    %v2729 = vsub.s32 %v2726, %v2728
    %v2730 = vrot.slane %v2723, %v2729
    %v2731 = vsel %vm91, %v2722, 0
    %v2733 = vsel %vm91, %v2730, 0
    %2735 = vmatprep.subr.mxu0 0.0
    %2736 = vmatpush1.msra.mxu0 %v2661
    %2737 = vmatprep.subr.mxu0 0.0
    %2738 = vmatpush1.msra.mxu0 %v2662
    %2739 = vmatprep.subr.mxu0 0.0
    %2740 = vmatpush1.msra.mxu0 %v2663
    %2741 = vmatprep.subr.mxu0 0.0
    %2742 = vmatpush1.msra.mxu0 %v2664
    %2743 = vmatprep.subr.mxu0 0.0
    %2744 = vmatpush1.msra.mxu0 0.0
    %2745 = vmatprep.subr.mxu0 0.0
    %2746 = vmatpush1.msra.mxu0 0.0
    %2747 = vmatprep.subr.mxu0 0.0
    %2748 = vmatpush1.msra.mxu0 0.0
    %2749 = vmatprep.subr.mxu0 0.0
    %2750 = vmatpush1.msra.mxu0 0.0
    %2751 = vmatprep.subr.mxu0 0.0
    %2752 = vmatpush1.msra.mxu0 0.0
    %2753 = vmatprep.subr.mxu0 0.0
    %2754 = vmatpush1.msra.mxu0 0.0
    %2755 = vmatprep.subr.mxu0 0.0
    %2756 = vmatpush1.msra.mxu0 0.0
    %2757 = vmatprep.subr.mxu0 0.0
    %2758 = vmatpush1.msra.mxu0 0.0
    %2759 = vmatprep.subr.mxu0 0.0
    %2760 = vmatpush1.msra.mxu0 0.0
    %2761 = vmatprep.subr.mxu0 0.0
    %2762 = vmatpush1.msra.mxu0 0.0
    %2763 = vmatprep.subr.mxu0 0.0
    %2764 = vmatpush1.msra.mxu0 0.0
    %2765 = vmatprep.subr.mxu0 0.0
    %2766 = vmatpush1.msra.mxu0 0.0
    %2767 = vmatprep.subr.mxu0 0.0
    %2768 = vmatpush1.msra.mxu0 0.0
    %2769 = vmatprep.subr.mxu0 0.0
    %2770 = vmatpush1.msra.mxu0 0.0
    %2771 = vmatprep.subr.mxu0 0.0
    %2772 = vmatpush1.msra.mxu0 0.0
    %2773 = vmatprep.subr.mxu0 0.0
    %2774 = vmatpush1.msra.mxu0 0.0
    %2775 = vmatprep.subr.mxu0 0.0
    %2776 = vmatpush1.msra.mxu0 0.0
    %2777 = vmatprep.subr.mxu0 0.0
    %2778 = vmatpush1.msra.mxu0 0.0
    %2779 = vmatprep.subr.mxu0 0.0
    %2780 = vmatpush1.msra.mxu0 0.0
    %2781 = vmatprep.subr.mxu0 0.0
    %2782 = vmatpush1.msra.mxu0 0.0
    %2783 = vmatprep.subr.mxu0 0.0
    %2784 = vmatpush1.msra.mxu0 0.0
    %2785 = vmatprep.subr.mxu0 0.0
    %2786 = vmatpush1.msra.mxu0 0.0
    %2787 = vmatprep.subr.mxu0 0.0
    %2788 = vmatpush1.msra.mxu0 0.0
    %2789 = vmatprep.subr.mxu0 0.0
    %2790 = vmatpush1.msra.mxu0 0.0
    %2791 = vmatprep.subr.mxu0 0.0
    %2792 = vmatpush1.msra.mxu0 0.0
    %2793 = vmatprep.subr.mxu0 0.0
    %2794 = vmatpush1.msra.mxu0 0.0
    %2795 = vmatprep.subr.mxu0 0.0
    %2796 = vmatpush1.msra.mxu0 0.0
    %2797 = vmatprep.subr.mxu0 0.0
    %2798 = vmatpush1.msra.mxu0 0.0
    %2799 = vmatprep.mubr.f32.mxu0 0.0
    %2800 = vmatmul.mubr.f32.gmra.mrb[0].mxu0 %v2731
    %v2801 = vpop.f32.mrb[0].mxu0
    %v2802 = vadd.f32 %v2705, %v2801
    %v2803 = vpop.f32.mrb[0].mxu0
    %2804 = vmatprep.mubr.f32.mxu0 0.0
    %2805 = vmatmul.mubr.f32.gmra.mrb[0].mxu0 %v2733
    %v2806 = vpop.f32.mrb[0].mxu0
    %v2807 = vadd.f32 %v2705, %v2806
    %v2808 = vpop.f32.mrb[0].mxu0
    %2809 = vdwg.mxu0
    %2810 = vst [vmem:[#allocation8] sm:$0xff] %v2802
    %2811 = vst [vmem:[#allocation8 + $0x8] sm:$0xf] %v2807
    %2812 = vrot.lane.b32.xlu0 %v2583, 96
    %v2813 = vpop.permute.xlu0 %2812
    %vm2815 = vcmask 254976
    %2816 = vst.msk [vmem:[#allocation9] sm:$0x3] %vm2815, %v2813
    // Predicated region
    $region26: #{tpu_custom_call.1} parent=1 // pred_check
      _
    $region27: #{tpu_custom_call.1} parent=1 // pred_check_branch
      %2818 = sbr.rel (0) target = $region29
    $region28: #{tpu_custom_call.1} parent=1 // pred_region
      %s2820 = ssub.s32 256, 256
      %2821 = vsyncadd [#allocation5], %s2820
      %s2822 = sshll.u32 [#allocation8], 4
      %s2823 = int_to_ptr.vmem [resolvable:$true] %s2822
      %2828 = dma.vmem_to_hbm [thread:$0]  %s2823, 256, %s4, [#allocation5], 128, 128, 8
    $region29: #{tpu_custom_call.1} parent=1 // pred_fallthru
      _
    // Predicated region
    $region30: #{tpu_custom_call.1} parent=1 // pred_check
      _
    $region31: #{tpu_custom_call.1} parent=1 // pred_check_branch
      %2830 = sbr.rel (0) target = $region33
    $region32: #{tpu_custom_call.1} parent=1 // pred_region
      %s2832 = ssub.s32 32, 32
      %2833 = vsyncadd [#allocation10], %s2832
      %s2835 = sshll.u32 [#allocation9], 4
      %s2836 = int_to_ptr.vmem [resolvable:$true] %s2835
      %2838 = dma.vmem_to_hbm [thread:$0]  %s2836, 32, %s5, [#allocation10]
    $region33: #{tpu_custom_call.1} parent=1 // pred_fallthru
      _
    // Predicated region
    $region34: #{tpu_custom_call.1} parent=1 // pred_check
      _
    $region35: #{tpu_custom_call.1} parent=1 // pred_check_branch
      %2840 = sbr.rel (0) target = $region37
    $region36: #{tpu_custom_call.1} parent=1 // pred_region
      _
    $region37: #{tpu_custom_call.1} parent=1 // pred_fallthru
      _
    // Predicated region
    $region38: #{tpu_custom_call.1} parent=1 // pred_check
      _
    $region39: #{tpu_custom_call.1} parent=1 // pred_check_branch
      %2842 = sbr.rel (0) target = $region41
    $region40: #{tpu_custom_call.1} parent=1 // pred_region
      %2843 = dma.done [#allocation5], 256
    $region41: #{tpu_custom_call.1} parent=1 // pred_fallthru
      _
    // Predicated region
    $region42: #{tpu_custom_call.1} parent=1 // pred_check
      _
    $region43: #{tpu_custom_call.1} parent=1 // pred_check_branch
      %2845 = sbr.rel (0) target = $region45
    $region44: #{tpu_custom_call.1} parent=1 // pred_region
      %2846 = dma.done [#allocation10], 32
    $region45: #{tpu_custom_call.1} parent=1 // pred_fallthru
      _
    // Predicated region
    $region46: #{tpu_custom_call.1} parent=1 // pred_check
      _
    $region47: #{tpu_custom_call.1} parent=1 // pred_check_branch
      %2848 = sbr.rel (0) target = $region49
    $region48: #{tpu_custom_call.1} parent=1 // pred_region
      _
    $region49: #{tpu_custom_call.1} parent=1 // pred_fallthru
      _
    %2849 = vsyncpa [#allocation4], 1
    %2850 = vsyncpa [#allocation7], 1
    %2851 = vsyncpa [#allocation5], 1
    %2852 = vsyncpa [#allocation10], 1

</llo_original>
